<compile_context>
chip_gen: v7x
topology: tpu7x:2x2x1
jax: 0.10.0
libtpu: 0.0.40
codegen_flags: <defaults>
</compile_context>

<pallas_src>
import math
import functools

import jax
import jax.numpy as jnp
from jax import lax
from jax.experimental import pallas as pl
from jax.experimental.pallas import tpu as pltpu


def _layer_norm(v, gamma, beta, eps=1e-5):
    mu = jnp.mean(v, axis=-1, keepdims=True)
    d = v - mu
    var = jnp.mean(d * d, axis=-1, keepdims=True)
    return d * lax.rsqrt(var + eps) * gamma + beta


def _gelu_tanh(v):
    # TODO(synk): PyTorch nn.GELU() defaults to the exact erf form; erf has no
    # guaranteed Mosaic lowering, so the tanh approximation is used here.
    c = math.sqrt(2.0 / math.pi)
    return 0.5 * v * (1.0 + jnp.tanh(c * (v + 0.044715 * v * v * v)))


def _encoder_layer_kernel(n_heads,
                          x_ref,
                          ln1_g_ref, ln1_b_ref,
                          wqkv_ref, bqkv_ref,
                          wo_ref, bo_ref,
                          ln2_g_ref, ln2_b_ref,
                          w1_ref, b1_ref, w2_ref, b2_ref,
                          o_ref, attn_ref):
    tb, S, D = x_ref.shape
    M = tb * S
    dh = D // n_heads
    mxu = wqkv_ref.dtype          # matmul-operand dtype; accumulation is f32

    # Flatten the (TB, S, D) block to (TB*S, D) so every dense matmul sees
    # M = TB*S rows instead of S.
    x = x_ref[...].astype(jnp.float32).reshape(M, D)

    # --- pre-LN (attn_ln), f32 elementwise ---
    x1 = _layer_norm(x, ln1_g_ref[...], ln1_b_ref[...])

    # --- fused QKV projection: one (M, D) @ (D, 3D) MXU pass, f32 accumulate.
    # The 1/sqrt(dh) attention scale is already folded into the q columns.
    qkv = jnp.dot(x1.astype(mxu), wqkv_ref[...],
                  preferred_element_type=jnp.float32) + bqkv_ref[...]
    qkv3 = qkv.reshape(tb, S, 3 * D)          # per-sequence view for attention

    # --- multi-head attention: batched over the TB sequences, per head ---
    # TODO(synk): per-head lane slices (dh < 128) still relayout; for n_heads
    # much larger than 4, switch to a head-major scratch + lax.fori_loop.
    attn_out = jnp.zeros((M, D), jnp.float32)
    attn_avg = jnp.zeros((tb, S, S), jnp.float32)
    for h in range(n_heads):
        qh = qkv3[:, :, h * dh:(h + 1) * dh]
        kh = qkv3[:, :, D + h * dh:D + (h + 1) * dh]
        vh = qkv3[:, :, 2 * D + h * dh:2 * D + (h + 1) * dh]
        s = jnp.einsum('bqd,bkd->bqk', qh.astype(mxu), kh.astype(mxu),
                       preferred_element_type=jnp.float32)
        s = s - jnp.max(s, axis=-1, keepdims=True)
        e = jnp.exp(s)
        p = e * pl.reciprocal(jnp.sum(e, axis=-1, keepdims=True), approx=True)
        attn_avg = attn_avg + p
        ctx = jnp.einsum('bqk,bkd->bqd', p.astype(mxu), vh.astype(mxu),
                         preferred_element_type=jnp.float32)
        # out_proj folded per head: concat_h(ctx_h) @ Wo == sum_h ctx_h @ Wo[h]
        attn_out = attn_out + jnp.dot(ctx.reshape(M, dh).astype(mxu),
                                      wo_ref[h * dh:(h + 1) * dh, :],
                                      preferred_element_type=jnp.float32)
    attn_ref[...] = (attn_avg * (1.0 / n_heads)).astype(attn_ref.dtype)

    # --- residual 1 (on the post-LN activation, exactly as the module does) ---
    x2 = x1 + attn_out + bo_ref[...]

    # --- FF block: LN -> Linear -> GELU -> (dropout: identity) -> Linear ---
    x2n = _layer_norm(x2, ln2_g_ref[...], ln2_b_ref[...])
    h1 = _gelu_tanh(jnp.dot(x2n.astype(mxu), w1_ref[...],
                            preferred_element_type=jnp.float32) + b1_ref[...])
    ff = jnp.dot(h1.astype(mxu), w2_ref[...],
                 preferred_element_type=jnp.float32) + b2_ref[...]

    o_ref[...] = (x2 + ff).reshape(tb, S, D).astype(o_ref.dtype)


def _pick_rows_per_step(batch, seq):
    """TB sequences per grid step: target ~256 rows per matmul, TB | batch."""
    if seq % 8 != 0:        # flattened (TB*S, D) view wants sublane-aligned S
        return 1
    tb = max(1, min(batch, 256 // max(seq, 1)))
    while batch % tb:
        tb -= 1
    return tb


def transformer_encoder_layer(x, params, n_heads, mask=None, mxu_dtype=None):
    """Forward pass of TransformerEncoderLayer (attn_type='full', eval mode).

    x: [B, S, D]; params: dict of PyTorch-layout weights.
    Returns (y [B, S, D], attn_weights [B, S, S] averaged over heads).
    mxu_dtype: optional matmul-operand dtype (e.g. jnp.bfloat16); accumulation
      and all element-wise math stay float32.
    """
    # TODO(synk): key_padding_mask not implemented (module default mask=None).
    assert mask is None, "key_padding_mask not supported in this kernel"

    B, S, D = x.shape
    d_ff = params["ff_w1"].shape[0]
    assert D % n_heads == 0
    dh = D // n_heads
    mxu_dtype = x.dtype if mxu_dtype is None else mxu_dtype

    # One-time layout glue (constant-folded under jit): torch [out, in] ->
    # [in, out]; Q/K/V fused into one (D, 3D) weight with the 1/sqrt(dh)
    # scale folded into the q columns / bias.
    scale = 1.0 / math.sqrt(dh)
    in_w = params["attn_in_proj_weight"]          # [3D, D]
    in_b = params["attn_in_proj_bias"]            # [3D]
    wqkv = jnp.concatenate(
        [in_w[0:D].T * scale, in_w[D:2 * D].T, in_w[2 * D:3 * D].T], axis=1)
    bqkv = jnp.concatenate(
        [in_b[0:D] * scale, in_b[D:2 * D], in_b[2 * D:3 * D]]).reshape(1, 3 * D)
    wo = params["attn_out_proj_weight"].T          # [D, D]
    bo = params["attn_out_proj_bias"].reshape(1, D)
    ln1_g = params["attn_ln_weight"].reshape(1, D)
    ln1_b = params["attn_ln_bias"].reshape(1, D)
    ln2_g = params["ff_ln_weight"].reshape(1, D)
    ln2_b = params["ff_ln_bias"].reshape(1, D)
    w1 = params["ff_w1"].T                         # [D, F]
    b1 = params["ff_b1"].reshape(1, d_ff)
    w2 = params["ff_w2"].T                         # [F, D]
    b2 = params["ff_b2"].reshape(1, D)

    # Matmul weights optionally bf16 (halves DMA bytes / VMEM residency).
    # LN params and biases stay f32 (they feed f32 element-wise math).
    wqkv = wqkv.astype(mxu_dtype)
    wo = wo.astype(mxu_dtype)
    w1 = w1.astype(mxu_dtype)
    w2 = w2.astype(mxu_dtype)

    weights = (ln1_g, ln1_b, wqkv, bqkv, wo, bo, ln2_g, ln2_b, w1, b1, w2, b2)

    tb = _pick_rows_per_step(B, S)

    # Advisory cost estimate + VMEM budget derived from actual sizes.
    rows = B * S
    mm_flops = rows * (2 * D * 3 * D + 4 * S * D + 2 * D * D + 4 * D * d_ff)
    transcendentals = rows * (n_heads * S + d_ff + 4)
    weight_bytes = sum(int(w.size) * jnp.dtype(w.dtype).itemsize
                       for w in weights)
    bytes_accessed = int(4 * (x.size + B * S * D + B * S * S) + weight_bytes)
    block_bytes = 4 * tb * S * (11 * D + d_ff + S)     # rough f32 working set
    vmem_limit = int(min(100 * 2 ** 20,
                         max(32 * 2 ** 20, 4 * weight_bytes + 6 * block_bytes)))

    def build(single_buffer_weights):
        if single_buffer_weights and hasattr(pl, "Buffered"):
            def resident(shape):   # weights: VMEM-resident, single-buffered
                return pl.BlockSpec(shape, lambda *_: (0,) * len(shape),
                                    pipeline_mode=pl.Buffered(1))
        else:
            def resident(shape):   # weights: VMEM-resident (default buffering)
                return pl.BlockSpec(shape, lambda *_: (0,) * len(shape))

        return pl.pallas_call(
            functools.partial(_encoder_layer_kernel, n_heads),
            out_shape=(jax.ShapeDtypeStruct((B, S, D), x.dtype),
                       jax.ShapeDtypeStruct((B, S, S), jnp.float32)),
            grid_spec=pltpu.PrefetchScalarGridSpec(
                num_scalar_prefetch=0,
                grid=(B // tb,),
                in_specs=[
                    pl.BlockSpec((tb, S, D), lambda b: (b, 0, 0)),   # x
                    resident((1, D)), resident((1, D)),              # ln1 g/b
                    resident((D, 3 * D)), resident((1, 3 * D)),      # Wqkv,bqkv
                    resident((D, D)), resident((1, D)),              # Wo, bo
                    resident((1, D)), resident((1, D)),              # ln2 g/b
                    resident((D, d_ff)), resident((1, d_ff)),        # W1, b1
                    resident((d_ff, D)), resident((1, D)),           # W2, b2
                ],
                out_specs=(
                    pl.BlockSpec((tb, S, D), lambda b: (b, 0, 0)),
                    pl.BlockSpec((tb, S, S), lambda b: (b, 0, 0)),
                ),
            ),
            compiler_params=pltpu.CompilerParams(
                dimension_semantics=("parallel",),
                vmem_limit_bytes=vmem_limit),
            cost_estimate=pl.CostEstimate(flops=int(mm_flops),
                                          transcendentals=int(transcendentals),
                                          bytes_accessed=int(bytes_accessed)),
        )

    try:
        return build(True)(x, *weights)
    except Exception:
        # TODO(synk): single-buffered resident weights (pipeline_mode=
        # pl.Buffered(1)) is not accepted by every JAX/Mosaic version; fall
        # back to the default double-buffered specs.
        return build(False)(x, *weights)


def _reference_forward(x, params, n_heads, eps=1e-5):
    """Plain-JAX reference (same math, highest matmul precision)."""
    hp = lax.Precision.HIGHEST
    B, S, D = x.shape
    dh = D // n_heads

    def ln(v, g, b):
        mu = jnp.mean(v, axis=-1, keepdims=True)
        d = v - mu
        var = jnp.mean(d * d, axis=-1, keepdims=True)
        return d * lax.rsqrt(var + eps) * g + b

    x1 = ln(x, params["attn_ln_weight"], params["attn_ln_bias"])
    in_w, in_b = params["attn_in_proj_weight"], params["attn_in_proj_bias"]
    q = jnp.einsum("bsd,ed->bse", x1, in_w[0:D], precision=hp) + in_b[0:D]
    k = jnp.einsum("bsd,ed->bse", x1, in_w[D:2 * D], precision=hp) + in_b[D:2 * D]
    v = jnp.einsum("bsd,ed->bse", x1, in_w[2 * D:], precision=hp) + in_b[2 * D:]
    qh = q.reshape(B, S, n_heads, dh).transpose(0, 2, 1, 3)
    kh = k.reshape(B, S, n_heads, dh).transpose(0, 2, 1, 3)
    vh = v.reshape(B, S, n_heads, dh).transpose(0, 2, 1, 3)
    s = jnp.einsum("bhqd,bhkd->bhqk", qh, kh, precision=hp) / math.sqrt(dh)
    p = jax.nn.softmax(s, axis=-1)
    ctx = jnp.einsum("bhqk,bhkd->bhqd", p, vh, precision=hp)
    ctx = ctx.transpose(0, 2, 1, 3).reshape(B, S, D)
    attn_out = (jnp.einsum("bsd,ed->bse", ctx, params["attn_out_proj_weight"],
                           precision=hp) + params["attn_out_proj_bias"])
    x2 = x1 + attn_out
    x2n = ln(x2, params["ff_ln_weight"], params["ff_ln_bias"])
    h1 = jnp.einsum("bsd,fd->bsf", x2n, params["ff_w1"], precision=hp) + params["ff_b1"]
    c = math.sqrt(2.0 / math.pi)
    h1 = 0.5 * h1 * (1.0 + jnp.tanh(c * (h1 + 0.044715 * h1 ** 3)))
    ff = jnp.einsum("bsf,df->bsd", h1, params["ff_w2"], precision=hp) + params["ff_b2"]
    return x2 + ff, jnp.mean(p, axis=1)


if __name__ == "__main__":
    # Small shapes consistent with the module: d_model=32, n_heads=4, d_ff=64.
    B, S, D, H, F = 2, 8, 32, 4, 64

    key = jax.random.PRNGKey(0)
    ks = jax.random.split(key, 11)
    bd = 1.0 / math.sqrt(D)
    bf = 1.0 / math.sqrt(F)
    u = lambda k, shape, lo, hi: jax.random.uniform(
        k, shape, minval=lo, maxval=hi, dtype=jnp.float32)

    params = dict(
        attn_ln_weight=u(ks[0], (D,), 0.5, 1.5),
        attn_ln_bias=u(ks[1], (D,), -0.1, 0.1),
        attn_in_proj_weight=u(ks[2], (3 * D, D), -bd, bd),
        attn_in_proj_bias=u(ks[3], (3 * D,), -bd, bd),
        attn_out_proj_weight=u(ks[4], (D, D), -bd, bd),
        attn_out_proj_bias=u(ks[5], (D,), -bd, bd),
        ff_ln_weight=u(ks[6], (D,), 0.5, 1.5),
        ff_ln_bias=u(ks[7], (D,), -0.1, 0.1),
        ff_w1=u(ks[8], (F, D), -bd, bd),
        ff_b1=u(ks[9], (F,), -bd, bd),
        ff_w2=u(ks[10], (D, F), -bf, bf),
        ff_b2=jnp.zeros((D,), jnp.float32),
    )
    x = jax.random.normal(jax.random.PRNGKey(1), (B, S, D), dtype=jnp.float32)

    y, attn = transformer_encoder_layer(x, params, n_heads=H)
    y, attn = jax.block_until_ready((y, attn))

    y_ref, attn_ref = _reference_forward(x, params, H)
    assert y.shape == (B, S, D) and attn.shape == (B, S, S)
    # Tolerance 2e-3: the approx (EUP) reciprocal in the softmax adds ~1e-4
    # relative error vs. the exact-division reference.
    assert jnp.allclose(y, y_ref, atol=2e-3, rtol=2e-3), \
        float(jnp.max(jnp.abs(y - y_ref)))
    assert jnp.allclose(attn, attn_ref, atol=2e-3, rtol=2e-3), \
        float(jnp.max(jnp.abs(attn - attn_ref)))

    print("KERNEL_OK")
</pallas_src>

<mosaic_0001>
module attributes {stable_mosaic.version = 11 : i64} {
  func.func @_encoder_layer_kernel(%arg0: i32, %arg1: memref<2x8x32xf32, #tpu.memory_space<vmem>>, %arg2: memref<1x32xf32, #tpu.memory_space<vmem>>, %arg3: memref<1x32xf32, #tpu.memory_space<vmem>>, %arg4: memref<32x96xf32, #tpu.memory_space<vmem>>, %arg5: memref<1x96xf32, #tpu.memory_space<vmem>>, %arg6: memref<32x32xf32, #tpu.memory_space<vmem>>, %arg7: memref<1x32xf32, #tpu.memory_space<vmem>>, %arg8: memref<1x32xf32, #tpu.memory_space<vmem>>, %arg9: memref<1x32xf32, #tpu.memory_space<vmem>>, %arg10: memref<32x64xf32, #tpu.memory_space<vmem>>, %arg11: memref<1x64xf32, #tpu.memory_space<vmem>>, %arg12: memref<64x32xf32, #tpu.memory_space<vmem>>, %arg13: memref<1x32xf32, #tpu.memory_space<vmem>>, %arg14: memref<2x8x32xf32, #tpu.memory_space<vmem>>, %arg15: memref<2x8x8xf32, #tpu.memory_space<vmem>>) attributes {dimension_semantics = [#tpu.dimension_semantics<parallel>], iteration_bounds = array<i64: 1>, scalar_prefetch = 0 : i64, scratch_operands = 0 : i64, tpu.core_type = #tpu.core_type<tc>, window_params = [{transform_indices = @transform_0, window_bounds = array<i64: 2, 8, 32>}, {pipeline_mode = #tpu.pipeline_mode<synchronous>, transform_indices = @transform_1, window_bounds = array<i64: 1, 32>}, {pipeline_mode = #tpu.pipeline_mode<synchronous>, transform_indices = @transform_2, window_bounds = array<i64: 1, 32>}, {pipeline_mode = #tpu.pipeline_mode<synchronous>, transform_indices = @transform_3, window_bounds = array<i64: 32, 96>}, {pipeline_mode = #tpu.pipeline_mode<synchronous>, transform_indices = @transform_4, window_bounds = array<i64: 1, 96>}, {pipeline_mode = #tpu.pipeline_mode<synchronous>, transform_indices = @transform_5, window_bounds = array<i64: 32, 32>}, {pipeline_mode = #tpu.pipeline_mode<synchronous>, transform_indices = @transform_6, window_bounds = array<i64: 1, 32>}, {pipeline_mode = #tpu.pipeline_mode<synchronous>, transform_indices = @transform_7, window_bounds = array<i64: 1, 32>}, {pipeline_mode = #tpu.pipeline_mode<synchronous>, transform_indices = @transform_8, window_bounds = array<i64: 1, 32>}, {pipeline_mode = #tpu.pipeline_mode<synchronous>, transform_indices = @transform_9, window_bounds = array<i64: 32, 64>}, {pipeline_mode = #tpu.pipeline_mode<synchronous>, transform_indices = @transform_10, window_bounds = array<i64: 1, 64>}, {pipeline_mode = #tpu.pipeline_mode<synchronous>, transform_indices = @transform_11, window_bounds = array<i64: 64, 32>}, {pipeline_mode = #tpu.pipeline_mode<synchronous>, transform_indices = @transform_12, window_bounds = array<i64: 1, 32>}, {transform_indices = @transform_13, window_bounds = array<i64: 2, 8, 32>}, {transform_indices = @transform_14, window_bounds = array<i64: 2, 8, 8>}]} {
    %c0 = arith.constant 0 : index
    %c0_0 = arith.constant 0 : index
    %c0_1 = arith.constant 0 : index
    %0 = vector.load %arg1[%c0, %c0_0, %c0_1] : memref<2x8x32xf32, #tpu.memory_space<vmem>>, vector<2x8x32xf32>
    %1 = vector.shape_cast %0 : vector<2x8x32xf32> to vector<16x32xf32>
    %c0_2 = arith.constant 0 : index
    %c0_3 = arith.constant 0 : index
    %2 = vector.load %arg2[%c0_2, %c0_3] : memref<1x32xf32, #tpu.memory_space<vmem>>, vector<1x32xf32>
    %c0_4 = arith.constant 0 : index
    %c0_5 = arith.constant 0 : index
    %3 = vector.load %arg3[%c0_4, %c0_5] : memref<1x32xf32, #tpu.memory_space<vmem>>, vector<1x32xf32>
    %cst = arith.constant dense<0.000000e+00> : vector<16xf32>
    %4 = vector.multi_reduction <add>, %1, %cst [1] : vector<16x32xf32> to vector<16xf32>
    %5 = vector.shape_cast %4 : vector<16xf32> to vector<16x1xf32>
    %cst_6 = arith.constant 3.200000e+01 : f32
    %6 = vector.broadcast %cst_6 : f32 to vector<16x1xf32>
    %7 = arith.divf %5, %6 : vector<16x1xf32>
    %8 = vector.broadcast %7 : vector<16x1xf32> to vector<16x32xf32>
    %9 = arith.subf %1, %8 : vector<16x32xf32>
    %10 = arith.mulf %9, %9 : vector<16x32xf32>
    %cst_7 = arith.constant dense<0.000000e+00> : vector<16xf32>
    %11 = vector.multi_reduction <add>, %10, %cst_7 [1] : vector<16x32xf32> to vector<16xf32>
    %12 = vector.shape_cast %11 : vector<16xf32> to vector<16x1xf32>
    %cst_8 = arith.constant 3.200000e+01 : f32
    %13 = vector.broadcast %cst_8 : f32 to vector<16x1xf32>
    %14 = arith.divf %12, %13 : vector<16x1xf32>
    %cst_9 = arith.constant 9.99999974E-6 : f32
    %15 = vector.broadcast %cst_9 : f32 to vector<16x1xf32>
    %16 = arith.addf %14, %15 : vector<16x1xf32>
    %17 = math.rsqrt %16 : vector<16x1xf32>
    %18 = vector.broadcast %17 : vector<16x1xf32> to vector<16x32xf32>
    %19 = arith.mulf %9, %18 : vector<16x32xf32>
    %20 = vector.broadcast %2 : vector<1x32xf32> to vector<16x32xf32>
    %21 = arith.mulf %19, %20 : vector<16x32xf32>
    %22 = vector.broadcast %3 : vector<1x32xf32> to vector<16x32xf32>
    %23 = arith.addf %21, %22 : vector<16x32xf32>
    %c0_10 = arith.constant 0 : index
    %c0_11 = arith.constant 0 : index
    %24 = vector.load %arg4[%c0_10, %c0_11] : memref<32x96xf32, #tpu.memory_space<vmem>>, vector<32x96xf32>
    %cst_12 = arith.constant dense<0.000000e+00> : vector<16x96xf32>
    %25 = tpu.matmul %23, %24, %cst_12 {dimension_numbers = #tpu.dot_dimension_numbers<[1], [0], [0], [1], [0, 0, 1, 1], [], []>} : vector<16x32xf32>, vector<32x96xf32>, vector<16x96xf32> -> vector<16x96xf32>
    %c0_13 = arith.constant 0 : index
    %c0_14 = arith.constant 0 : index
    %26 = vector.load %arg5[%c0_13, %c0_14] : memref<1x96xf32, #tpu.memory_space<vmem>>, vector<1x96xf32>
    %27 = vector.broadcast %26 : vector<1x96xf32> to vector<16x96xf32>
    %28 = arith.addf %25, %27 : vector<16x96xf32>
    %29 = vector.shape_cast %28 : vector<16x96xf32> to vector<2x8x96xf32>
    %cst_15 = arith.constant 0.000000e+00 : f32
    %30 = vector.broadcast %cst_15 : f32 to vector<16x32xf32>
    %cst_16 = arith.constant 0.000000e+00 : f32
    %31 = vector.broadcast %cst_16 : f32 to vector<2x8x8xf32>
    %32 = vector.extract_strided_slice %29 {offsets = [0, 0, 0], sizes = [2, 8, 8], strides = [1, 1, 1]} : vector<2x8x96xf32> to vector<2x8x8xf32>
    %33 = vector.extract_strided_slice %29 {offsets = [0, 0, 32], sizes = [2, 8, 8], strides = [1, 1, 1]} : vector<2x8x96xf32> to vector<2x8x8xf32>
    %34 = vector.extract_strided_slice %29 {offsets = [0, 0, 64], sizes = [2, 8, 8], strides = [1, 1, 1]} : vector<2x8x96xf32> to vector<2x8x8xf32>
    "tpu.trace_start"() <{level = 10 : i32, message = "bqd,bkd->bqk"}> : () -> ()
    %cst_17 = arith.constant dense<0.000000e+00> : vector<2x8x8xf32>
    %35 = tpu.matmul %32, %33, %cst_17 {dimension_numbers = #tpu.dot_dimension_numbers<[2], [2], [1], [1], [0, 0, 0, 1, 1, 1], [0], [0]>} : vector<2x8x8xf32>, vector<2x8x8xf32>, vector<2x8x8xf32> -> vector<2x8x8xf32>
    "tpu.trace_stop"() : () -> ()
    %cst_18 = arith.constant dense<0xFF800000> : vector<2x8xf32>
    %36 = vector.multi_reduction <maximumf>, %35, %cst_18 [2] : vector<2x8x8xf32> to vector<2x8xf32>
    %37 = vector.shape_cast %36 : vector<2x8xf32> to vector<2x8x1xf32>
    %38 = vector.broadcast %37 : vector<2x8x1xf32> to vector<2x8x8xf32>
    %39 = arith.subf %35, %38 : vector<2x8x8xf32>
    %40 = math.exp %39 : vector<2x8x8xf32>
    %cst_19 = arith.constant dense<0.000000e+00> : vector<2x8xf32>
    %41 = vector.multi_reduction <add>, %40, %cst_19 [2] : vector<2x8x8xf32> to vector<2x8xf32>
    %42 = vector.shape_cast %41 : vector<2x8xf32> to vector<2x8x1xf32>
    %43 = tpu.reciprocal %42 {approx = true} : vector<2x8x1xf32> -> vector<2x8x1xf32>
    %44 = vector.broadcast %43 : vector<2x8x1xf32> to vector<2x8x8xf32>
    %45 = arith.mulf %40, %44 : vector<2x8x8xf32>
    %46 = arith.addf %31, %45 : vector<2x8x8xf32>
    "tpu.trace_start"() <{level = 10 : i32, message = "bqk,bkd->bqd"}> : () -> ()
    %cst_20 = arith.constant dense<0.000000e+00> : vector<2x8x8xf32>
    %47 = tpu.matmul %45, %34, %cst_20 {dimension_numbers = #tpu.dot_dimension_numbers<[2], [1], [1], [2], [0, 0, 0, 1, 1, 2], [0], [0]>} : vector<2x8x8xf32>, vector<2x8x8xf32>, vector<2x8x8xf32> -> vector<2x8x8xf32>
    "tpu.trace_stop"() : () -> ()
    %48 = vector.shape_cast %47 : vector<2x8x8xf32> to vector<16x8xf32>
    %c0_21 = arith.constant 0 : index
    %c0_22 = arith.constant 0 : index
    %49 = vector.load %arg6[%c0_21, %c0_22] : memref<32x32xf32, #tpu.memory_space<vmem>>, vector<8x32xf32>
    %cst_23 = arith.constant dense<0.000000e+00> : vector<16x32xf32>
    %50 = tpu.matmul %48, %49, %cst_23 {dimension_numbers = #tpu.dot_dimension_numbers<[1], [0], [0], [1], [0, 0, 1, 1], [], []>} : vector<16x8xf32>, vector<8x32xf32>, vector<16x32xf32> -> vector<16x32xf32>
    %51 = arith.addf %30, %50 : vector<16x32xf32>
    %52 = vector.extract_strided_slice %29 {offsets = [0, 0, 8], sizes = [2, 8, 8], strides = [1, 1, 1]} : vector<2x8x96xf32> to vector<2x8x8xf32>
    %53 = vector.extract_strided_slice %29 {offsets = [0, 0, 40], sizes = [2, 8, 8], strides = [1, 1, 1]} : vector<2x8x96xf32> to vector<2x8x8xf32>
    %54 = vector.extract_strided_slice %29 {offsets = [0, 0, 72], sizes = [2, 8, 8], strides = [1, 1, 1]} : vector<2x8x96xf32> to vector<2x8x8xf32>
    "tpu.trace_start"() <{level = 10 : i32, message = "bqd,bkd->bqk"}> : () -> ()
    %cst_24 = arith.constant dense<0.000000e+00> : vector<2x8x8xf32>
    %55 = tpu.matmul %52, %53, %cst_24 {dimension_numbers = #tpu.dot_dimension_numbers<[2], [2], [1], [1], [0, 0, 0, 1, 1, 1], [0], [0]>} : vector<2x8x8xf32>, vector<2x8x8xf32>, vector<2x8x8xf32> -> vector<2x8x8xf32>
    "tpu.trace_stop"() : () -> ()
    %cst_25 = arith.constant dense<0xFF800000> : vector<2x8xf32>
    %56 = vector.multi_reduction <maximumf>, %55, %cst_25 [2] : vector<2x8x8xf32> to vector<2x8xf32>
    %57 = vector.shape_cast %56 : vector<2x8xf32> to vector<2x8x1xf32>
    %58 = vector.broadcast %57 : vector<2x8x1xf32> to vector<2x8x8xf32>
    %59 = arith.subf %55, %58 : vector<2x8x8xf32>
    %60 = math.exp %59 : vector<2x8x8xf32>
    %cst_26 = arith.constant dense<0.000000e+00> : vector<2x8xf32>
    %61 = vector.multi_reduction <add>, %60, %cst_26 [2] : vector<2x8x8xf32> to vector<2x8xf32>
    %62 = vector.shape_cast %61 : vector<2x8xf32> to vector<2x8x1xf32>
    %63 = tpu.reciprocal %62 {approx = true} : vector<2x8x1xf32> -> vector<2x8x1xf32>
    %64 = vector.broadcast %63 : vector<2x8x1xf32> to vector<2x8x8xf32>
    %65 = arith.mulf %60, %64 : vector<2x8x8xf32>
    %66 = arith.addf %46, %65 : vector<2x8x8xf32>
    "tpu.trace_start"() <{level = 10 : i32, message = "bqk,bkd->bqd"}> : () -> ()
    %cst_27 = arith.constant dense<0.000000e+00> : vector<2x8x8xf32>
    %67 = tpu.matmul %65, %54, %cst_27 {dimension_numbers = #tpu.dot_dimension_numbers<[2], [1], [1], [2], [0, 0, 0, 1, 1, 2], [0], [0]>} : vector<2x8x8xf32>, vector<2x8x8xf32>, vector<2x8x8xf32> -> vector<2x8x8xf32>
    "tpu.trace_stop"() : () -> ()
    %68 = vector.shape_cast %67 : vector<2x8x8xf32> to vector<16x8xf32>
    %c8 = arith.constant 8 : index
    %c0_28 = arith.constant 0 : index
    %69 = vector.load %arg6[%c8, %c0_28] : memref<32x32xf32, #tpu.memory_space<vmem>>, vector<8x32xf32>
    %cst_29 = arith.constant dense<0.000000e+00> : vector<16x32xf32>
    %70 = tpu.matmul %68, %69, %cst_29 {dimension_numbers = #tpu.dot_dimension_numbers<[1], [0], [0], [1], [0, 0, 1, 1], [], []>} : vector<16x8xf32>, vector<8x32xf32>, vector<16x32xf32> -> vector<16x32xf32>
    %71 = arith.addf %51, %70 : vector<16x32xf32>
    %72 = vector.extract_strided_slice %29 {offsets = [0, 0, 16], sizes = [2, 8, 8], strides = [1, 1, 1]} : vector<2x8x96xf32> to vector<2x8x8xf32>
    %73 = vector.extract_strided_slice %29 {offsets = [0, 0, 48], sizes = [2, 8, 8], strides = [1, 1, 1]} : vector<2x8x96xf32> to vector<2x8x8xf32>
    %74 = vector.extract_strided_slice %29 {offsets = [0, 0, 80], sizes = [2, 8, 8], strides = [1, 1, 1]} : vector<2x8x96xf32> to vector<2x8x8xf32>
    "tpu.trace_start"() <{level = 10 : i32, message = "bqd,bkd->bqk"}> : () -> ()
    %cst_30 = arith.constant dense<0.000000e+00> : vector<2x8x8xf32>
    %75 = tpu.matmul %72, %73, %cst_30 {dimension_numbers = #tpu.dot_dimension_numbers<[2], [2], [1], [1], [0, 0, 0, 1, 1, 1], [0], [0]>} : vector<2x8x8xf32>, vector<2x8x8xf32>, vector<2x8x8xf32> -> vector<2x8x8xf32>
    "tpu.trace_stop"() : () -> ()
    %cst_31 = arith.constant dense<0xFF800000> : vector<2x8xf32>
    %76 = vector.multi_reduction <maximumf>, %75, %cst_31 [2] : vector<2x8x8xf32> to vector<2x8xf32>
    %77 = vector.shape_cast %76 : vector<2x8xf32> to vector<2x8x1xf32>
    %78 = vector.broadcast %77 : vector<2x8x1xf32> to vector<2x8x8xf32>
    %79 = arith.subf %75, %78 : vector<2x8x8xf32>
    %80 = math.exp %79 : vector<2x8x8xf32>
    %cst_32 = arith.constant dense<0.000000e+00> : vector<2x8xf32>
    %81 = vector.multi_reduction <add>, %80, %cst_32 [2] : vector<2x8x8xf32> to vector<2x8xf32>
    %82 = vector.shape_cast %81 : vector<2x8xf32> to vector<2x8x1xf32>
    %83 = tpu.reciprocal %82 {approx = true} : vector<2x8x1xf32> -> vector<2x8x1xf32>
    %84 = vector.broadcast %83 : vector<2x8x1xf32> to vector<2x8x8xf32>
    %85 = arith.mulf %80, %84 : vector<2x8x8xf32>
    %86 = arith.addf %66, %85 : vector<2x8x8xf32>
    "tpu.trace_start"() <{level = 10 : i32, message = "bqk,bkd->bqd"}> : () -> ()
    %cst_33 = arith.constant dense<0.000000e+00> : vector<2x8x8xf32>
    %87 = tpu.matmul %85, %74, %cst_33 {dimension_numbers = #tpu.dot_dimension_numbers<[2], [1], [1], [2], [0, 0, 0, 1, 1, 2], [0], [0]>} : vector<2x8x8xf32>, vector<2x8x8xf32>, vector<2x8x8xf32> -> vector<2x8x8xf32>
    "tpu.trace_stop"() : () -> ()
    %88 = vector.shape_cast %87 : vector<2x8x8xf32> to vector<16x8xf32>
    %c16 = arith.constant 16 : index
    %c0_34 = arith.constant 0 : index
    %89 = vector.load %arg6[%c16, %c0_34] : memref<32x32xf32, #tpu.memory_space<vmem>>, vector<8x32xf32>
    %cst_35 = arith.constant dense<0.000000e+00> : vector<16x32xf32>
    %90 = tpu.matmul %88, %89, %cst_35 {dimension_numbers = #tpu.dot_dimension_numbers<[1], [0], [0], [1], [0, 0, 1, 1], [], []>} : vector<16x8xf32>, vector<8x32xf32>, vector<16x32xf32> -> vector<16x32xf32>
    %91 = arith.addf %71, %90 : vector<16x32xf32>
    %92 = vector.extract_strided_slice %29 {offsets = [0, 0, 24], sizes = [2, 8, 8], strides = [1, 1, 1]} : vector<2x8x96xf32> to vector<2x8x8xf32>
    %93 = vector.extract_strided_slice %29 {offsets = [0, 0, 56], sizes = [2, 8, 8], strides = [1, 1, 1]} : vector<2x8x96xf32> to vector<2x8x8xf32>
    %94 = vector.extract_strided_slice %29 {offsets = [0, 0, 88], sizes = [2, 8, 8], strides = [1, 1, 1]} : vector<2x8x96xf32> to vector<2x8x8xf32>
    "tpu.trace_start"() <{level = 10 : i32, message = "bqd,bkd->bqk"}> : () -> ()
    %cst_36 = arith.constant dense<0.000000e+00> : vector<2x8x8xf32>
    %95 = tpu.matmul %92, %93, %cst_36 {dimension_numbers = #tpu.dot_dimension_numbers<[2], [2], [1], [1], [0, 0, 0, 1, 1, 1], [0], [0]>} : vector<2x8x8xf32>, vector<2x8x8xf32>, vector<2x8x8xf32> -> vector<2x8x8xf32>
    "tpu.trace_stop"() : () -> ()
    %cst_37 = arith.constant dense<0xFF800000> : vector<2x8xf32>
    %96 = vector.multi_reduction <maximumf>, %95, %cst_37 [2] : vector<2x8x8xf32> to vector<2x8xf32>
    %97 = vector.shape_cast %96 : vector<2x8xf32> to vector<2x8x1xf32>
    %98 = vector.broadcast %97 : vector<2x8x1xf32> to vector<2x8x8xf32>
    %99 = arith.subf %95, %98 : vector<2x8x8xf32>
    %100 = math.exp %99 : vector<2x8x8xf32>
    %cst_38 = arith.constant dense<0.000000e+00> : vector<2x8xf32>
    %101 = vector.multi_reduction <add>, %100, %cst_38 [2] : vector<2x8x8xf32> to vector<2x8xf32>
    %102 = vector.shape_cast %101 : vector<2x8xf32> to vector<2x8x1xf32>
    %103 = tpu.reciprocal %102 {approx = true} : vector<2x8x1xf32> -> vector<2x8x1xf32>
    %104 = vector.broadcast %103 : vector<2x8x1xf32> to vector<2x8x8xf32>
    %105 = arith.mulf %100, %104 : vector<2x8x8xf32>
    %106 = arith.addf %86, %105 : vector<2x8x8xf32>
    "tpu.trace_start"() <{level = 10 : i32, message = "bqk,bkd->bqd"}> : () -> ()
    %cst_39 = arith.constant dense<0.000000e+00> : vector<2x8x8xf32>
    %107 = tpu.matmul %105, %94, %cst_39 {dimension_numbers = #tpu.dot_dimension_numbers<[2], [1], [1], [2], [0, 0, 0, 1, 1, 2], [0], [0]>} : vector<2x8x8xf32>, vector<2x8x8xf32>, vector<2x8x8xf32> -> vector<2x8x8xf32>
    "tpu.trace_stop"() : () -> ()
    %108 = vector.shape_cast %107 : vector<2x8x8xf32> to vector<16x8xf32>
    %c24 = arith.constant 24 : index
    %c0_40 = arith.constant 0 : index
    %109 = vector.load %arg6[%c24, %c0_40] : memref<32x32xf32, #tpu.memory_space<vmem>>, vector<8x32xf32>
    %cst_41 = arith.constant dense<0.000000e+00> : vector<16x32xf32>
    %110 = tpu.matmul %108, %109, %cst_41 {dimension_numbers = #tpu.dot_dimension_numbers<[1], [0], [0], [1], [0, 0, 1, 1], [], []>} : vector<16x8xf32>, vector<8x32xf32>, vector<16x32xf32> -> vector<16x32xf32>
    %111 = arith.addf %91, %110 : vector<16x32xf32>
    %cst_42 = arith.constant 2.500000e-01 : f32
    %112 = vector.broadcast %cst_42 : f32 to vector<2x8x8xf32>
    %113 = arith.mulf %106, %112 : vector<2x8x8xf32>
    %c0_43 = arith.constant 0 : index
    %c0_44 = arith.constant 0 : index
    %c0_45 = arith.constant 0 : index
    %114 = vector.load %arg15[%c0_43, %c0_44, %c0_45] : memref<2x8x8xf32, #tpu.memory_space<vmem>>, vector<2x8x8xf32>
    tpu.vector_store %arg15[%c0_43, %c0_44, %c0_45], %113 {strides = array<i32>} : memref<2x8x8xf32, #tpu.memory_space<vmem>>, vector<2x8x8xf32>,
    %115 = arith.addf %23, %111 : vector<16x32xf32>
    %c0_46 = arith.constant 0 : index
    %c0_47 = arith.constant 0 : index
    %116 = vector.load %arg7[%c0_46, %c0_47] : memref<1x32xf32, #tpu.memory_space<vmem>>, vector<1x32xf32>
    %117 = vector.broadcast %116 : vector<1x32xf32> to vector<16x32xf32>
    %118 = arith.addf %115, %117 : vector<16x32xf32>
    %c0_48 = arith.constant 0 : index
    %c0_49 = arith.constant 0 : index
    %119 = vector.load %arg8[%c0_48, %c0_49] : memref<1x32xf32, #tpu.memory_space<vmem>>, vector<1x32xf32>
    %c0_50 = arith.constant 0 : index
    %c0_51 = arith.constant 0 : index
    %120 = vector.load %arg9[%c0_50, %c0_51] : memref<1x32xf32, #tpu.memory_space<vmem>>, vector<1x32xf32>
    %cst_52 = arith.constant dense<0.000000e+00> : vector<16xf32>
    %121 = vector.multi_reduction <add>, %118, %cst_52 [1] : vector<16x32xf32> to vector<16xf32>
    %122 = vector.shape_cast %121 : vector<16xf32> to vector<16x1xf32>
    %cst_53 = arith.constant 3.200000e+01 : f32
    %123 = vector.broadcast %cst_53 : f32 to vector<16x1xf32>
    %124 = arith.divf %122, %123 : vector<16x1xf32>
    %125 = vector.broadcast %124 : vector<16x1xf32> to vector<16x32xf32>
    %126 = arith.subf %118, %125 : vector<16x32xf32>
    %127 = arith.mulf %126, %126 : vector<16x32xf32>
    %cst_54 = arith.constant dense<0.000000e+00> : vector<16xf32>
    %128 = vector.multi_reduction <add>, %127, %cst_54 [1] : vector<16x32xf32> to vector<16xf32>
    %129 = vector.shape_cast %128 : vector<16xf32> to vector<16x1xf32>
    %cst_55 = arith.constant 3.200000e+01 : f32
    %130 = vector.broadcast %cst_55 : f32 to vector<16x1xf32>
    %131 = arith.divf %129, %130 : vector<16x1xf32>
    %cst_56 = arith.constant 9.99999974E-6 : f32
    %132 = vector.broadcast %cst_56 : f32 to vector<16x1xf32>
    %133 = arith.addf %131, %132 : vector<16x1xf32>
    %134 = math.rsqrt %133 : vector<16x1xf32>
    %135 = vector.broadcast %134 : vector<16x1xf32> to vector<16x32xf32>
    %136 = arith.mulf %126, %135 : vector<16x32xf32>
    %137 = vector.broadcast %119 : vector<1x32xf32> to vector<16x32xf32>
    %138 = arith.mulf %136, %137 : vector<16x32xf32>
    %139 = vector.broadcast %120 : vector<1x32xf32> to vector<16x32xf32>
    %140 = arith.addf %138, %139 : vector<16x32xf32>
    %c0_57 = arith.constant 0 : index
    %c0_58 = arith.constant 0 : index
    %141 = vector.load %arg10[%c0_57, %c0_58] : memref<32x64xf32, #tpu.memory_space<vmem>>, vector<32x64xf32>
    %cst_59 = arith.constant dense<0.000000e+00> : vector<16x64xf32>
    %142 = tpu.matmul %140, %141, %cst_59 {dimension_numbers = #tpu.dot_dimension_numbers<[1], [0], [0], [1], [0, 0, 1, 1], [], []>} : vector<16x32xf32>, vector<32x64xf32>, vector<16x64xf32> -> vector<16x64xf32>
    %c0_60 = arith.constant 0 : index
    %c0_61 = arith.constant 0 : index
    %143 = vector.load %arg11[%c0_60, %c0_61] : memref<1x64xf32, #tpu.memory_space<vmem>>, vector<1x64xf32>
    %144 = vector.broadcast %143 : vector<1x64xf32> to vector<16x64xf32>
    %145 = arith.addf %142, %144 : vector<16x64xf32>
    %cst_62 = arith.constant 5.000000e-01 : f32
    %146 = vector.broadcast %cst_62 : f32 to vector<16x64xf32>
    %147 = arith.mulf %146, %145 : vector<16x64xf32>
    %cst_63 = arith.constant 4.471500e-02 : f32
    %148 = vector.broadcast %cst_63 : f32 to vector<16x64xf32>
    %149 = arith.mulf %148, %145 : vector<16x64xf32>
    %150 = arith.mulf %149, %145 : vector<16x64xf32>
    %151 = arith.mulf %150, %145 : vector<16x64xf32>
    %152 = arith.addf %145, %151 : vector<16x64xf32>
    %cst_64 = arith.constant 0.797884583 : f32
    %153 = vector.broadcast %cst_64 : f32 to vector<16x64xf32>
    %154 = arith.mulf %153, %152 : vector<16x64xf32>
    %155 = math.tanh %154 : vector<16x64xf32>
    %cst_65 = arith.constant 1.000000e+00 : f32
    %156 = vector.broadcast %cst_65 : f32 to vector<16x64xf32>
    %157 = arith.addf %156, %155 : vector<16x64xf32>
    %158 = arith.mulf %147, %157 : vector<16x64xf32>
    %c0_66 = arith.constant 0 : index
    %c0_67 = arith.constant 0 : index
    %159 = vector.load %arg12[%c0_66, %c0_67] : memref<64x32xf32, #tpu.memory_space<vmem>>, vector<64x32xf32>
    %cst_68 = arith.constant dense<0.000000e+00> : vector<16x32xf32>
    %160 = tpu.matmul %158, %159, %cst_68 {dimension_numbers = #tpu.dot_dimension_numbers<[1], [0], [0], [1], [0, 0, 1, 1], [], []>} : vector<16x64xf32>, vector<64x32xf32>, vector<16x32xf32> -> vector<16x32xf32>
    %c0_69 = arith.constant 0 : index
    %c0_70 = arith.constant 0 : index
    %161 = vector.load %arg13[%c0_69, %c0_70] : memref<1x32xf32, #tpu.memory_space<vmem>>, vector<1x32xf32>
    %162 = vector.broadcast %161 : vector<1x32xf32> to vector<16x32xf32>
    %163 = arith.addf %160, %162 : vector<16x32xf32>
    %164 = arith.addf %118, %163 : vector<16x32xf32>
    %165 = vector.shape_cast %164 : vector<16x32xf32> to vector<2x8x32xf32>
    %c0_71 = arith.constant 0 : index
    %c0_72 = arith.constant 0 : index
    %c0_73 = arith.constant 0 : index
    %166 = vector.load %arg14[%c0_71, %c0_72, %c0_73] : memref<2x8x32xf32, #tpu.memory_space<vmem>>, vector<2x8x32xf32>
    tpu.vector_store %arg14[%c0_71, %c0_72, %c0_73], %165 {strides = array<i32>} : memref<2x8x32xf32, #tpu.memory_space<vmem>>, vector<2x8x32xf32>,
    return
  }
  func.func @transform_0(%arg0: i32) -> (i32, i32, i32) {
    %c0_i32 = arith.constant 0 : i32
    %c0_i32_0 = arith.constant 0 : i32
    %c0_i32_1 = arith.constant 0 : i32
    return %arg0, %c0_i32, %c0_i32_0 : i32, i32, i32
  }
  func.func @transform_1(%arg0: i32) -> (i32, i32) {
    %c0_i32 = arith.constant 0 : i32
    %c0_i32_0 = arith.constant 0 : i32
    %c0_i32_1 = arith.constant 0 : i32
    return %c0_i32, %c0_i32_0 : i32, i32
  }
  func.func @transform_2(%arg0: i32) -> (i32, i32) {
    %c0_i32 = arith.constant 0 : i32
    %c0_i32_0 = arith.constant 0 : i32
    %c0_i32_1 = arith.constant 0 : i32
    return %c0_i32, %c0_i32_0 : i32, i32
  }
  func.func @transform_3(%arg0: i32) -> (i32, i32) {
    %c0_i32 = arith.constant 0 : i32
    %c0_i32_0 = arith.constant 0 : i32
    %c0_i32_1 = arith.constant 0 : i32
    return %c0_i32, %c0_i32_0 : i32, i32
  }
  func.func @transform_4(%arg0: i32) -> (i32, i32) {
    %c0_i32 = arith.constant 0 : i32
    %c0_i32_0 = arith.constant 0 : i32
    %c0_i32_1 = arith.constant 0 : i32
    return %c0_i32, %c0_i32_0 : i32, i32
  }
  func.func @transform_5(%arg0: i32) -> (i32, i32) {
    %c0_i32 = arith.constant 0 : i32
    %c0_i32_0 = arith.constant 0 : i32
    %c0_i32_1 = arith.constant 0 : i32
    return %c0_i32, %c0_i32_0 : i32, i32
  }
  func.func @transform_6(%arg0: i32) -> (i32, i32) {
    %c0_i32 = arith.constant 0 : i32
    %c0_i32_0 = arith.constant 0 : i32
    %c0_i32_1 = arith.constant 0 : i32
    return %c0_i32, %c0_i32_0 : i32, i32
  }
  func.func @transform_7(%arg0: i32) -> (i32, i32) {
    %c0_i32 = arith.constant 0 : i32
    %c0_i32_0 = arith.constant 0 : i32
    %c0_i32_1 = arith.constant 0 : i32
    return %c0_i32, %c0_i32_0 : i32, i32
  }
  func.func @transform_8(%arg0: i32) -> (i32, i32) {
    %c0_i32 = arith.constant 0 : i32
    %c0_i32_0 = arith.constant 0 : i32
    %c0_i32_1 = arith.constant 0 : i32
    return %c0_i32, %c0_i32_0 : i32, i32
  }
  func.func @transform_9(%arg0: i32) -> (i32, i32) {
    %c0_i32 = arith.constant 0 : i32
    %c0_i32_0 = arith.constant 0 : i32
    %c0_i32_1 = arith.constant 0 : i32
    return %c0_i32, %c0_i32_0 : i32, i32
  }
  func.func @transform_10(%arg0: i32) -> (i32, i32) {
    %c0_i32 = arith.constant 0 : i32
    %c0_i32_0 = arith.constant 0 : i32
    %c0_i32_1 = arith.constant 0 : i32
    return %c0_i32, %c0_i32_0 : i32, i32
  }
  func.func @transform_11(%arg0: i32) -> (i32, i32) {
    %c0_i32 = arith.constant 0 : i32
    %c0_i32_0 = arith.constant 0 : i32
    %c0_i32_1 = arith.constant 0 : i32
    return %c0_i32, %c0_i32_0 : i32, i32
  }
  func.func @transform_12(%arg0: i32) -> (i32, i32) {
    %c0_i32 = arith.constant 0 : i32
    %c0_i32_0 = arith.constant 0 : i32
    %c0_i32_1 = arith.constant 0 : i32
    return %c0_i32, %c0_i32_0 : i32, i32
  }
  func.func @transform_13(%arg0: i32) -> (i32, i32, i32) {
    %c0_i32 = arith.constant 0 : i32
    %c0_i32_0 = arith.constant 0 : i32
    %c0_i32_1 = arith.constant 0 : i32
    return %arg0, %c0_i32, %c0_i32_0 : i32, i32, i32
  }
  func.func @transform_14(%arg0: i32) -> (i32, i32, i32) {
    %c0_i32 = arith.constant 0 : i32
    %c0_i32_0 = arith.constant 0 : i32
    %c0_i32_1 = arith.constant 0 : i32
    return %arg0, %c0_i32, %c0_i32_0 : i32, i32, i32
  }
}

module attributes {stable_mosaic.version = 11 : i64} {
  func.func @_encoder_layer_kernel(%arg0: i32, %arg1: memref<2x8x32xf32, #tpu.memory_space<vmem>>, %arg2: memref<1x32xf32, #tpu.memory_space<vmem>>, %arg3: memref<1x32xf32, #tpu.memory_space<vmem>>, %arg4: memref<32x96xf32, #tpu.memory_space<vmem>>, %arg5: memref<1x96xf32, #tpu.memory_space<vmem>>, %arg6: memref<32x32xf32, #tpu.memory_space<vmem>>, %arg7: memref<1x32xf32, #tpu.memory_space<vmem>>, %arg8: memref<1x32xf32, #tpu.memory_space<vmem>>, %arg9: memref<1x32xf32, #tpu.memory_space<vmem>>, %arg10: memref<32x64xf32, #tpu.memory_space<vmem>>, %arg11: memref<1x64xf32, #tpu.memory_space<vmem>>, %arg12: memref<64x32xf32, #tpu.memory_space<vmem>>, %arg13: memref<1x32xf32, #tpu.memory_space<vmem>>, %arg14: memref<2x8x32xf32, #tpu.memory_space<vmem>>, %arg15: memref<2x8x8xf32, #tpu.memory_space<vmem>>) attributes {dimension_semantics = [#tpu.dimension_semantics<parallel>], iteration_bounds = array<i64: 1>, scalar_prefetch = 0 : i64, scratch_operands = 0 : i64, tpu.core_type = #tpu.core_type<tc>, window_params = [{transform_indices = @transform_0, window_bounds = array<i64: 2, 8, 32>}, {pipeline_mode = #tpu.pipeline_mode<synchronous>, transform_indices = @transform_1, window_bounds = array<i64: 1, 32>}, {pipeline_mode = #tpu.pipeline_mode<synchronous>, transform_indices = @transform_2, window_bounds = array<i64: 1, 32>}, {pipeline_mode = #tpu.pipeline_mode<synchronous>, transform_indices = @transform_3, window_bounds = array<i64: 32, 96>}, {pipeline_mode = #tpu.pipeline_mode<synchronous>, transform_indices = @transform_4, window_bounds = array<i64: 1, 96>}, {pipeline_mode = #tpu.pipeline_mode<synchronous>, transform_indices = @transform_5, window_bounds = array<i64: 32, 32>}, {pipeline_mode = #tpu.pipeline_mode<synchronous>, transform_indices = @transform_6, window_bounds = array<i64: 1, 32>}, {pipeline_mode = #tpu.pipeline_mode<synchronous>, transform_indices = @transform_7, window_bounds = array<i64: 1, 32>}, {pipeline_mode = #tpu.pipeline_mode<synchronous>, transform_indices = @transform_8, window_bounds = array<i64: 1, 32>}, {pipeline_mode = #tpu.pipeline_mode<synchronous>, transform_indices = @transform_9, window_bounds = array<i64: 32, 64>}, {pipeline_mode = #tpu.pipeline_mode<synchronous>, transform_indices = @transform_10, window_bounds = array<i64: 1, 64>}, {pipeline_mode = #tpu.pipeline_mode<synchronous>, transform_indices = @transform_11, window_bounds = array<i64: 64, 32>}, {pipeline_mode = #tpu.pipeline_mode<synchronous>, transform_indices = @transform_12, window_bounds = array<i64: 1, 32>}, {transform_indices = @transform_13, window_bounds = array<i64: 2, 8, 32>}, {transform_indices = @transform_14, window_bounds = array<i64: 2, 8, 8>}]} {
    %c0 = arith.constant 0 : index
    %c0_0 = arith.constant 0 : index
    %c0_1 = arith.constant 0 : index
    %0 = vector.load %arg1[%c0, %c0_0, %c0_1] : memref<2x8x32xf32, #tpu.memory_space<vmem>>, vector<2x8x32xf32>
    %1 = vector.shape_cast %0 : vector<2x8x32xf32> to vector<16x32xf32>
    %c0_2 = arith.constant 0 : index
    %c0_3 = arith.constant 0 : index
    %2 = vector.load %arg2[%c0_2, %c0_3] : memref<1x32xf32, #tpu.memory_space<vmem>>, vector<1x32xf32>
    %c0_4 = arith.constant 0 : index
    %c0_5 = arith.constant 0 : index
    %3 = vector.load %arg3[%c0_4, %c0_5] : memref<1x32xf32, #tpu.memory_space<vmem>>, vector<1x32xf32>
    %cst = arith.constant dense<0.000000e+00> : vector<16xf32>
    %4 = vector.multi_reduction <add>, %1, %cst [1] : vector<16x32xf32> to vector<16xf32>
    %5 = vector.shape_cast %4 : vector<16xf32> to vector<16x1xf32>
    %cst_6 = arith.constant 3.200000e+01 : f32
    %6 = vector.broadcast %cst_6 : f32 to vector<16x1xf32>
    %7 = arith.divf %5, %6 : vector<16x1xf32>
    %8 = vector.broadcast %7 : vector<16x1xf32> to vector<16x32xf32>
    %9 = arith.subf %1, %8 : vector<16x32xf32>
    %10 = arith.mulf %9, %9 : vector<16x32xf32>
    %cst_7 = arith.constant dense<0.000000e+00> : vector<16xf32>
    %11 = vector.multi_reduction <add>, %10, %cst_7 [1] : vector<16x32xf32> to vector<16xf32>
    %12 = vector.shape_cast %11 : vector<16xf32> to vector<16x1xf32>
    %cst_8 = arith.constant 3.200000e+01 : f32
    %13 = vector.broadcast %cst_8 : f32 to vector<16x1xf32>
    %14 = arith.divf %12, %13 : vector<16x1xf32>
    %cst_9 = arith.constant 9.99999974E-6 : f32
    %15 = vector.broadcast %cst_9 : f32 to vector<16x1xf32>
    %16 = arith.addf %14, %15 : vector<16x1xf32>
    %17 = math.rsqrt %16 : vector<16x1xf32>
    %18 = vector.broadcast %17 : vector<16x1xf32> to vector<16x32xf32>
    %19 = arith.mulf %9, %18 : vector<16x32xf32>
    %20 = vector.broadcast %2 : vector<1x32xf32> to vector<16x32xf32>
    %21 = arith.mulf %19, %20 : vector<16x32xf32>
    %22 = vector.broadcast %3 : vector<1x32xf32> to vector<16x32xf32>
    %23 = arith.addf %21, %22 : vector<16x32xf32>
    %c0_10 = arith.constant 0 : index
    %c0_11 = arith.constant 0 : index
    %24 = vector.load %arg4[%c0_10, %c0_11] : memref<32x96xf32, #tpu.memory_space<vmem>>, vector<32x96xf32>
    %cst_12 = arith.constant dense<0.000000e+00> : vector<16x96xf32>
    %25 = tpu.matmul %23, %24, %cst_12 {dimension_numbers = #tpu.dot_dimension_numbers<[1], [0], [0], [1], [0, 0, 1, 1], [], []>} : vector<16x32xf32>, vector<32x96xf32>, vector<16x96xf32> -> vector<16x96xf32>
    %c0_13 = arith.constant 0 : index
    %c0_14 = arith.constant 0 : index
    %26 = vector.load %arg5[%c0_13, %c0_14] : memref<1x96xf32, #tpu.memory_space<vmem>>, vector<1x96xf32>
    %27 = vector.broadcast %26 : vector<1x96xf32> to vector<16x96xf32>
    %28 = arith.addf %25, %27 : vector<16x96xf32>
    %29 = vector.shape_cast %28 : vector<16x96xf32> to vector<2x8x96xf32>
    %cst_15 = arith.constant 0.000000e+00 : f32
    %30 = vector.broadcast %cst_15 : f32 to vector<16x32xf32>
    %cst_16 = arith.constant 0.000000e+00 : f32
    %31 = vector.broadcast %cst_16 : f32 to vector<2x8x8xf32>
    %32 = vector.extract_strided_slice %29 {offsets = [0, 0, 0], sizes = [2, 8, 8], strides = [1, 1, 1]} : vector<2x8x96xf32> to vector<2x8x8xf32>
    %33 = vector.extract_strided_slice %29 {offsets = [0, 0, 32], sizes = [2, 8, 8], strides = [1, 1, 1]} : vector<2x8x96xf32> to vector<2x8x8xf32>
    %34 = vector.extract_strided_slice %29 {offsets = [0, 0, 64], sizes = [2, 8, 8], strides = [1, 1, 1]} : vector<2x8x96xf32> to vector<2x8x8xf32>
    "tpu.trace_start"() <{level = 10 : i32, message = "bqd,bkd->bqk"}> : () -> ()
    %cst_17 = arith.constant dense<0.000000e+00> : vector<2x8x8xf32>
    %35 = tpu.matmul %32, %33, %cst_17 {dimension_numbers = #tpu.dot_dimension_numbers<[2], [2], [1], [1], [0, 0, 0, 1, 1, 1], [0], [0]>} : vector<2x8x8xf32>, vector<2x8x8xf32>, vector<2x8x8xf32> -> vector<2x8x8xf32>
    "tpu.trace_stop"() : () -> ()
    %cst_18 = arith.constant dense<0xFF800000> : vector<2x8xf32>
    %36 = vector.multi_reduction <maximumf>, %35, %cst_18 [2] : vector<2x8x8xf32> to vector<2x8xf32>
    %37 = vector.shape_cast %36 : vector<2x8xf32> to vector<2x8x1xf32>
    %38 = vector.broadcast %37 : vector<2x8x1xf32> to vector<2x8x8xf32>
    %39 = arith.subf %35, %38 : vector<2x8x8xf32>
    %40 = math.exp %39 : vector<2x8x8xf32>
    %cst_19 = arith.constant dense<0.000000e+00> : vector<2x8xf32>
    %41 = vector.multi_reduction <add>, %40, %cst_19 [2] : vector<2x8x8xf32> to vector<2x8xf32>
    %42 = vector.shape_cast %41 : vector<2x8xf32> to vector<2x8x1xf32>
    %43 = tpu.reciprocal %42 {approx = true} : vector<2x8x1xf32> -> vector<2x8x1xf32>
    %44 = vector.broadcast %43 : vector<2x8x1xf32> to vector<2x8x8xf32>
    %45 = arith.mulf %40, %44 : vector<2x8x8xf32>
    %46 = arith.addf %31, %45 : vector<2x8x8xf32>
    "tpu.trace_start"() <{level = 10 : i32, message = "bqk,bkd->bqd"}> : () -> ()
    %cst_20 = arith.constant dense<0.000000e+00> : vector<2x8x8xf32>
    %47 = tpu.matmul %45, %34, %cst_20 {dimension_numbers = #tpu.dot_dimension_numbers<[2], [1], [1], [2], [0, 0, 0, 1, 1, 2], [0], [0]>} : vector<2x8x8xf32>, vector<2x8x8xf32>, vector<2x8x8xf32> -> vector<2x8x8xf32>
    "tpu.trace_stop"() : () -> ()
    %48 = vector.shape_cast %47 : vector<2x8x8xf32> to vector<16x8xf32>
    %c0_21 = arith.constant 0 : index
    %c0_22 = arith.constant 0 : index
    %49 = vector.load %arg6[%c0_21, %c0_22] : memref<32x32xf32, #tpu.memory_space<vmem>>, vector<8x32xf32>
    %cst_23 = arith.constant dense<0.000000e+00> : vector<16x32xf32>
    %50 = tpu.matmul %48, %49, %cst_23 {dimension_numbers = #tpu.dot_dimension_numbers<[1], [0], [0], [1], [0, 0, 1, 1], [], []>} : vector<16x8xf32>, vector<8x32xf32>, vector<16x32xf32> -> vector<16x32xf32>
    %51 = arith.addf %30, %50 : vector<16x32xf32>
    %52 = vector.extract_strided_slice %29 {offsets = [0, 0, 8], sizes = [2, 8, 8], strides = [1, 1, 1]} : vector<2x8x96xf32> to vector<2x8x8xf32>
    %53 = vector.extract_strided_slice %29 {offsets = [0, 0, 40], sizes = [2, 8, 8], strides = [1, 1, 1]} : vector<2x8x96xf32> to vector<2x8x8xf32>
    %54 = vector.extract_strided_slice %29 {offsets = [0, 0, 72], sizes = [2, 8, 8], strides = [1, 1, 1]} : vector<2x8x96xf32> to vector<2x8x8xf32>
    "tpu.trace_start"() <{level = 10 : i32, message = "bqd,bkd->bqk"}> : () -> ()
    %cst_24 = arith.constant dense<0.000000e+00> : vector<2x8x8xf32>
    %55 = tpu.matmul %52, %53, %cst_24 {dimension_numbers = #tpu.dot_dimension_numbers<[2], [2], [1], [1], [0, 0, 0, 1, 1, 1], [0], [0]>} : vector<2x8x8xf32>, vector<2x8x8xf32>, vector<2x8x8xf32> -> vector<2x8x8xf32>
    "tpu.trace_stop"() : () -> ()
    %cst_25 = arith.constant dense<0xFF800000> : vector<2x8xf32>
    %56 = vector.multi_reduction <maximumf>, %55, %cst_25 [2] : vector<2x8x8xf32> to vector<2x8xf32>
    %57 = vector.shape_cast %56 : vector<2x8xf32> to vector<2x8x1xf32>
    %58 = vector.broadcast %57 : vector<2x8x1xf32> to vector<2x8x8xf32>
    %59 = arith.subf %55, %58 : vector<2x8x8xf32>
    %60 = math.exp %59 : vector<2x8x8xf32>
    %cst_26 = arith.constant dense<0.000000e+00> : vector<2x8xf32>
    %61 = vector.multi_reduction <add>, %60, %cst_26 [2] : vector<2x8x8xf32> to vector<2x8xf32>
    %62 = vector.shape_cast %61 : vector<2x8xf32> to vector<2x8x1xf32>
    %63 = tpu.reciprocal %62 {approx = true} : vector<2x8x1xf32> -> vector<2x8x1xf32>
    %64 = vector.broadcast %63 : vector<2x8x1xf32> to vector<2x8x8xf32>
    %65 = arith.mulf %60, %64 : vector<2x8x8xf32>
    %66 = arith.addf %46, %65 : vector<2x8x8xf32>
    "tpu.trace_start"() <{level = 10 : i32, message = "bqk,bkd->bqd"}> : () -> ()
    %cst_27 = arith.constant dense<0.000000e+00> : vector<2x8x8xf32>
    %67 = tpu.matmul %65, %54, %cst_27 {dimension_numbers = #tpu.dot_dimension_numbers<[2], [1], [1], [2], [0, 0, 0, 1, 1, 2], [0], [0]>} : vector<2x8x8xf32>, vector<2x8x8xf32>, vector<2x8x8xf32> -> vector<2x8x8xf32>
    "tpu.trace_stop"() : () -> ()
    %68 = vector.shape_cast %67 : vector<2x8x8xf32> to vector<16x8xf32>
    %c8 = arith.constant 8 : index
    %c0_28 = arith.constant 0 : index
    %69 = vector.load %arg6[%c8, %c0_28] : memref<32x32xf32, #tpu.memory_space<vmem>>, vector<8x32xf32>
    %cst_29 = arith.constant dense<0.000000e+00> : vector<16x32xf32>
    %70 = tpu.matmul %68, %69, %cst_29 {dimension_numbers = #tpu.dot_dimension_numbers<[1], [0], [0], [1], [0, 0, 1, 1], [], []>} : vector<16x8xf32>, vector<8x32xf32>, vector<16x32xf32> -> vector<16x32xf32>
    %71 = arith.addf %51, %70 : vector<16x32xf32>
    %72 = vector.extract_strided_slice %29 {offsets = [0, 0, 16], sizes = [2, 8, 8], strides = [1, 1, 1]} : vector<2x8x96xf32> to vector<2x8x8xf32>
    %73 = vector.extract_strided_slice %29 {offsets = [0, 0, 48], sizes = [2, 8, 8], strides = [1, 1, 1]} : vector<2x8x96xf32> to vector<2x8x8xf32>
    %74 = vector.extract_strided_slice %29 {offsets = [0, 0, 80], sizes = [2, 8, 8], strides = [1, 1, 1]} : vector<2x8x96xf32> to vector<2x8x8xf32>
    "tpu.trace_start"() <{level = 10 : i32, message = "bqd,bkd->bqk"}> : () -> ()
    %cst_30 = arith.constant dense<0.000000e+00> : vector<2x8x8xf32>
    %75 = tpu.matmul %72, %73, %cst_30 {dimension_numbers = #tpu.dot_dimension_numbers<[2], [2], [1], [1], [0, 0, 0, 1, 1, 1], [0], [0]>} : vector<2x8x8xf32>, vector<2x8x8xf32>, vector<2x8x8xf32> -> vector<2x8x8xf32>
    "tpu.trace_stop"() : () -> ()
    %cst_31 = arith.constant dense<0xFF800000> : vector<2x8xf32>
    %76 = vector.multi_reduction <maximumf>, %75, %cst_31 [2] : vector<2x8x8xf32> to vector<2x8xf32>
    %77 = vector.shape_cast %76 : vector<2x8xf32> to vector<2x8x1xf32>
    %78 = vector.broadcast %77 : vector<2x8x1xf32> to vector<2x8x8xf32>
    %79 = arith.subf %75, %78 : vector<2x8x8xf32>
    %80 = math.exp %79 : vector<2x8x8xf32>
    %cst_32 = arith.constant dense<0.000000e+00> : vector<2x8xf32>
    %81 = vector.multi_reduction <add>, %80, %cst_32 [2] : vector<2x8x8xf32> to vector<2x8xf32>
    %82 = vector.shape_cast %81 : vector<2x8xf32> to vector<2x8x1xf32>
    %83 = tpu.reciprocal %82 {approx = true} : vector<2x8x1xf32> -> vector<2x8x1xf32>
    %84 = vector.broadcast %83 : vector<2x8x1xf32> to vector<2x8x8xf32>
    %85 = arith.mulf %80, %84 : vector<2x8x8xf32>
    %86 = arith.addf %66, %85 : vector<2x8x8xf32>
    "tpu.trace_start"() <{level = 10 : i32, message = "bqk,bkd->bqd"}> : () -> ()
    %cst_33 = arith.constant dense<0.000000e+00> : vector<2x8x8xf32>
    %87 = tpu.matmul %85, %74, %cst_33 {dimension_numbers = #tpu.dot_dimension_numbers<[2], [1], [1], [2], [0, 0, 0, 1, 1, 2], [0], [0]>} : vector<2x8x8xf32>, vector<2x8x8xf32>, vector<2x8x8xf32> -> vector<2x8x8xf32>
    "tpu.trace_stop"() : () -> ()
    %88 = vector.shape_cast %87 : vector<2x8x8xf32> to vector<16x8xf32>
    %c16 = arith.constant 16 : index
    %c0_34 = arith.constant 0 : index
    %89 = vector.load %arg6[%c16, %c0_34] : memref<32x32xf32, #tpu.memory_space<vmem>>, vector<8x32xf32>
    %cst_35 = arith.constant dense<0.000000e+00> : vector<16x32xf32>
    %90 = tpu.matmul %88, %89, %cst_35 {dimension_numbers = #tpu.dot_dimension_numbers<[1], [0], [0], [1], [0, 0, 1, 1], [], []>} : vector<16x8xf32>, vector<8x32xf32>, vector<16x32xf32> -> vector<16x32xf32>
    %91 = arith.addf %71, %90 : vector<16x32xf32>
    %92 = vector.extract_strided_slice %29 {offsets = [0, 0, 24], sizes = [2, 8, 8], strides = [1, 1, 1]} : vector<2x8x96xf32> to vector<2x8x8xf32>
    %93 = vector.extract_strided_slice %29 {offsets = [0, 0, 56], sizes = [2, 8, 8], strides = [1, 1, 1]} : vector<2x8x96xf32> to vector<2x8x8xf32>
    %94 = vector.extract_strided_slice %29 {offsets = [0, 0, 88], sizes = [2, 8, 8], strides = [1, 1, 1]} : vector<2x8x96xf32> to vector<2x8x8xf32>
    "tpu.trace_start"() <{level = 10 : i32, message = "bqd,bkd->bqk"}> : () -> ()
    %cst_36 = arith.constant dense<0.000000e+00> : vector<2x8x8xf32>
    %95 = tpu.matmul %92, %93, %cst_36 {dimension_numbers = #tpu.dot_dimension_numbers<[2], [2], [1], [1], [0, 0, 0, 1, 1, 1], [0], [0]>} : vector<2x8x8xf32>, vector<2x8x8xf32>, vector<2x8x8xf32> -> vector<2x8x8xf32>
    "tpu.trace_stop"() : () -> ()
    %cst_37 = arith.constant dense<0xFF800000> : vector<2x8xf32>
    %96 = vector.multi_reduction <maximumf>, %95, %cst_37 [2] : vector<2x8x8xf32> to vector<2x8xf32>
    %97 = vector.shape_cast %96 : vector<2x8xf32> to vector<2x8x1xf32>
    %98 = vector.broadcast %97 : vector<2x8x1xf32> to vector<2x8x8xf32>
    %99 = arith.subf %95, %98 : vector<2x8x8xf32>
    %100 = math.exp %99 : vector<2x8x8xf32>
    %cst_38 = arith.constant dense<0.000000e+00> : vector<2x8xf32>
    %101 = vector.multi_reduction <add>, %100, %cst_38 [2] : vector<2x8x8xf32> to vector<2x8xf32>
    %102 = vector.shape_cast %101 : vector<2x8xf32> to vector<2x8x1xf32>
    %103 = tpu.reciprocal %102 {approx = true} : vector<2x8x1xf32> -> vector<2x8x1xf32>
    %104 = vector.broadcast %103 : vector<2x8x1xf32> to vector<2x8x8xf32>
    %105 = arith.mulf %100, %104 : vector<2x8x8xf32>
    %106 = arith.addf %86, %105 : vector<2x8x8xf32>
    "tpu.trace_start"() <{level = 10 : i32, message = "bqk,bkd->bqd"}> : () -> ()
    %cst_39 = arith.constant dense<0.000000e+00> : vector<2x8x8xf32>
    %107 = tpu.matmul %105, %94, %cst_39 {dimension_numbers = #tpu.dot_dimension_numbers<[2], [1], [1], [2], [0, 0, 0, 1, 1, 2], [0], [0]>} : vector<2x8x8xf32>, vector<2x8x8xf32>, vector<2x8x8xf32> -> vector<2x8x8xf32>
    "tpu.trace_stop"() : () -> ()
    %108 = vector.shape_cast %107 : vector<2x8x8xf32> to vector<16x8xf32>
    %c24 = arith.constant 24 : index
    %c0_40 = arith.constant 0 : index
    %109 = vector.load %arg6[%c24, %c0_40] : memref<32x32xf32, #tpu.memory_space<vmem>>, vector<8x32xf32>
    %cst_41 = arith.constant dense<0.000000e+00> : vector<16x32xf32>
    %110 = tpu.matmul %108, %109, %cst_41 {dimension_numbers = #tpu.dot_dimension_numbers<[1], [0], [0], [1], [0, 0, 1, 1], [], []>} : vector<16x8xf32>, vector<8x32xf32>, vector<16x32xf32> -> vector<16x32xf32>
    %111 = arith.addf %91, %110 : vector<16x32xf32>
    %cst_42 = arith.constant 2.500000e-01 : f32
    %112 = vector.broadcast %cst_42 : f32 to vector<2x8x8xf32>
    %113 = arith.mulf %106, %112 : vector<2x8x8xf32>
    %c0_43 = arith.constant 0 : index
    %c0_44 = arith.constant 0 : index
    %c0_45 = arith.constant 0 : index
    %114 = vector.load %arg15[%c0_43, %c0_44, %c0_45] : memref<2x8x8xf32, #tpu.memory_space<vmem>>, vector<2x8x8xf32>
    tpu.vector_store %arg15[%c0_43, %c0_44, %c0_45], %113 {strides = array<i32>} : memref<2x8x8xf32, #tpu.memory_space<vmem>>, vector<2x8x8xf32>,
    %115 = arith.addf %23, %111 : vector<16x32xf32>
    %c0_46 = arith.constant 0 : index
    %c0_47 = arith.constant 0 : index
    %116 = vector.load %arg7[%c0_46, %c0_47] : memref<1x32xf32, #tpu.memory_space<vmem>>, vector<1x32xf32>
    %117 = vector.broadcast %116 : vector<1x32xf32> to vector<16x32xf32>
    %118 = arith.addf %115, %117 : vector<16x32xf32>
    %c0_48 = arith.constant 0 : index
    %c0_49 = arith.constant 0 : index
    %119 = vector.load %arg8[%c0_48, %c0_49] : memref<1x32xf32, #tpu.memory_space<vmem>>, vector<1x32xf32>
    %c0_50 = arith.constant 0 : index
    %c0_51 = arith.constant 0 : index
    %120 = vector.load %arg9[%c0_50, %c0_51] : memref<1x32xf32, #tpu.memory_space<vmem>>, vector<1x32xf32>
    %cst_52 = arith.constant dense<0.000000e+00> : vector<16xf32>
    %121 = vector.multi_reduction <add>, %118, %cst_52 [1] : vector<16x32xf32> to vector<16xf32>
    %122 = vector.shape_cast %121 : vector<16xf32> to vector<16x1xf32>
    %cst_53 = arith.constant 3.200000e+01 : f32
    %123 = vector.broadcast %cst_53 : f32 to vector<16x1xf32>
    %124 = arith.divf %122, %123 : vector<16x1xf32>
    %125 = vector.broadcast %124 : vector<16x1xf32> to vector<16x32xf32>
    %126 = arith.subf %118, %125 : vector<16x32xf32>
    %127 = arith.mulf %126, %126 : vector<16x32xf32>
    %cst_54 = arith.constant dense<0.000000e+00> : vector<16xf32>
    %128 = vector.multi_reduction <add>, %127, %cst_54 [1] : vector<16x32xf32> to vector<16xf32>
    %129 = vector.shape_cast %128 : vector<16xf32> to vector<16x1xf32>
    %cst_55 = arith.constant 3.200000e+01 : f32
    %130 = vector.broadcast %cst_55 : f32 to vector<16x1xf32>
    %131 = arith.divf %129, %130 : vector<16x1xf32>
    %cst_56 = arith.constant 9.99999974E-6 : f32
    %132 = vector.broadcast %cst_56 : f32 to vector<16x1xf32>
    %133 = arith.addf %131, %132 : vector<16x1xf32>
    %134 = math.rsqrt %133 : vector<16x1xf32>
    %135 = vector.broadcast %134 : vector<16x1xf32> to vector<16x32xf32>
    %136 = arith.mulf %126, %135 : vector<16x32xf32>
    %137 = vector.broadcast %119 : vector<1x32xf32> to vector<16x32xf32>
    %138 = arith.mulf %136, %137 : vector<16x32xf32>
    %139 = vector.broadcast %120 : vector<1x32xf32> to vector<16x32xf32>
    %140 = arith.addf %138, %139 : vector<16x32xf32>
    %c0_57 = arith.constant 0 : index
    %c0_58 = arith.constant 0 : index
    %141 = vector.load %arg10[%c0_57, %c0_58] : memref<32x64xf32, #tpu.memory_space<vmem>>, vector<32x64xf32>
    %cst_59 = arith.constant dense<0.000000e+00> : vector<16x64xf32>
    %142 = tpu.matmul %140, %141, %cst_59 {dimension_numbers = #tpu.dot_dimension_numbers<[1], [0], [0], [1], [0, 0, 1, 1], [], []>} : vector<16x32xf32>, vector<32x64xf32>, vector<16x64xf32> -> vector<16x64xf32>
    %c0_60 = arith.constant 0 : index
    %c0_61 = arith.constant 0 : index
    %143 = vector.load %arg11[%c0_60, %c0_61] : memref<1x64xf32, #tpu.memory_space<vmem>>, vector<1x64xf32>
    %144 = vector.broadcast %143 : vector<1x64xf32> to vector<16x64xf32>
    %145 = arith.addf %142, %144 : vector<16x64xf32>
    %cst_62 = arith.constant 5.000000e-01 : f32
    %146 = vector.broadcast %cst_62 : f32 to vector<16x64xf32>
    %147 = arith.mulf %146, %145 : vector<16x64xf32>
    %cst_63 = arith.constant 4.471500e-02 : f32
    %148 = vector.broadcast %cst_63 : f32 to vector<16x64xf32>
    %149 = arith.mulf %148, %145 : vector<16x64xf32>
    %150 = arith.mulf %149, %145 : vector<16x64xf32>
    %151 = arith.mulf %150, %145 : vector<16x64xf32>
    %152 = arith.addf %145, %151 : vector<16x64xf32>
    %cst_64 = arith.constant 0.797884583 : f32
    %153 = vector.broadcast %cst_64 : f32 to vector<16x64xf32>
    %154 = arith.mulf %153, %152 : vector<16x64xf32>
    %155 = math.tanh %154 : vector<16x64xf32>
    %cst_65 = arith.constant 1.000000e+00 : f32
    %156 = vector.broadcast %cst_65 : f32 to vector<16x64xf32>
    %157 = arith.addf %156, %155 : vector<16x64xf32>
    %158 = arith.mulf %147, %157 : vector<16x64xf32>
    %c0_66 = arith.constant 0 : index
    %c0_67 = arith.constant 0 : index
    %159 = vector.load %arg12[%c0_66, %c0_67] : memref<64x32xf32, #tpu.memory_space<vmem>>, vector<64x32xf32>
    %cst_68 = arith.constant dense<0.000000e+00> : vector<16x32xf32>
    %160 = tpu.matmul %158, %159, %cst_68 {dimension_numbers = #tpu.dot_dimension_numbers<[1], [0], [0], [1], [0, 0, 1, 1], [], []>} : vector<16x64xf32>, vector<64x32xf32>, vector<16x32xf32> -> vector<16x32xf32>
    %c0_69 = arith.constant 0 : index
    %c0_70 = arith.constant 0 : index
    %161 = vector.load %arg13[%c0_69, %c0_70] : memref<1x32xf32, #tpu.memory_space<vmem>>, vector<1x32xf32>
    %162 = vector.broadcast %161 : vector<1x32xf32> to vector<16x32xf32>
    %163 = arith.addf %160, %162 : vector<16x32xf32>
    %164 = arith.addf %118, %163 : vector<16x32xf32>
    %165 = vector.shape_cast %164 : vector<16x32xf32> to vector<2x8x32xf32>
    %c0_71 = arith.constant 0 : index
    %c0_72 = arith.constant 0 : index
    %c0_73 = arith.constant 0 : index
    %166 = vector.load %arg14[%c0_71, %c0_72, %c0_73] : memref<2x8x32xf32, #tpu.memory_space<vmem>>, vector<2x8x32xf32>
    tpu.vector_store %arg14[%c0_71, %c0_72, %c0_73], %165 {strides = array<i32>} : memref<2x8x32xf32, #tpu.memory_space<vmem>>, vector<2x8x32xf32>,
    return
  }
  func.func @transform_0(%arg0: i32) -> (i32, i32, i32) {
    %c0_i32 = arith.constant 0 : i32
    %c0_i32_0 = arith.constant 0 : i32
    %c0_i32_1 = arith.constant 0 : i32
    return %arg0, %c0_i32, %c0_i32_0 : i32, i32, i32
  }
  func.func @transform_1(%arg0: i32) -> (i32, i32) {
    %c0_i32 = arith.constant 0 : i32
    %c0_i32_0 = arith.constant 0 : i32
    %c0_i32_1 = arith.constant 0 : i32
    return %c0_i32, %c0_i32_0 : i32, i32
  }
  func.func @transform_2(%arg0: i32) -> (i32, i32) {
    %c0_i32 = arith.constant 0 : i32
    %c0_i32_0 = arith.constant 0 : i32
    %c0_i32_1 = arith.constant 0 : i32
    return %c0_i32, %c0_i32_0 : i32, i32
  }
  func.func @transform_3(%arg0: i32) -> (i32, i32) {
    %c0_i32 = arith.constant 0 : i32
    %c0_i32_0 = arith.constant 0 : i32
    %c0_i32_1 = arith.constant 0 : i32
    return %c0_i32, %c0_i32_0 : i32, i32
  }
  func.func @transform_4(%arg0: i32) -> (i32, i32) {
    %c0_i32 = arith.constant 0 : i32
    %c0_i32_0 = arith.constant 0 : i32
    %c0_i32_1 = arith.constant 0 : i32
    return %c0_i32, %c0_i32_0 : i32, i32
  }
  func.func @transform_5(%arg0: i32) -> (i32, i32) {
    %c0_i32 = arith.constant 0 : i32
    %c0_i32_0 = arith.constant 0 : i32
    %c0_i32_1 = arith.constant 0 : i32
    return %c0_i32, %c0_i32_0 : i32, i32
  }
  func.func @transform_6(%arg0: i32) -> (i32, i32) {
    %c0_i32 = arith.constant 0 : i32
    %c0_i32_0 = arith.constant 0 : i32
    %c0_i32_1 = arith.constant 0 : i32
    return %c0_i32, %c0_i32_0 : i32, i32
  }
  func.func @transform_7(%arg0: i32) -> (i32, i32) {
    %c0_i32 = arith.constant 0 : i32
    %c0_i32_0 = arith.constant 0 : i32
    %c0_i32_1 = arith.constant 0 : i32
    return %c0_i32, %c0_i32_0 : i32, i32
  }
  func.func @transform_8(%arg0: i32) -> (i32, i32) {
    %c0_i32 = arith.constant 0 : i32
    %c0_i32_0 = arith.constant 0 : i32
    %c0_i32_1 = arith.constant 0 : i32
    return %c0_i32, %c0_i32_0 : i32, i32
  }
  func.func @transform_9(%arg0: i32) -> (i32, i32) {
    %c0_i32 = arith.constant 0 : i32
    %c0_i32_0 = arith.constant 0 : i32
    %c0_i32_1 = arith.constant 0 : i32
    return %c0_i32, %c0_i32_0 : i32, i32
  }
  func.func @transform_10(%arg0: i32) -> (i32, i32) {
    %c0_i32 = arith.constant 0 : i32
    %c0_i32_0 = arith.constant 0 : i32
    %c0_i32_1 = arith.constant 0 : i32
    return %c0_i32, %c0_i32_0 : i32, i32
  }
  func.func @transform_11(%arg0: i32) -> (i32, i32) {
    %c0_i32 = arith.constant 0 : i32
    %c0_i32_0 = arith.constant 0 : i32
    %c0_i32_1 = arith.constant 0 : i32
    return %c0_i32, %c0_i32_0 : i32, i32
  }
  func.func @transform_12(%arg0: i32) -> (i32, i32) {
    %c0_i32 = arith.constant 0 : i32
    %c0_i32_0 = arith.constant 0 : i32
    %c0_i32_1 = arith.constant 0 : i32
    return %c0_i32, %c0_i32_0 : i32, i32
  }
  func.func @transform_13(%arg0: i32) -> (i32, i32, i32) {
    %c0_i32 = arith.constant 0 : i32
    %c0_i32_0 = arith.constant 0 : i32
    %c0_i32_1 = arith.constant 0 : i32
    return %arg0, %c0_i32, %c0_i32_0 : i32, i32, i32
  }
  func.func @transform_14(%arg0: i32) -> (i32, i32, i32) {
    %c0_i32 = arith.constant 0 : i32
    %c0_i32_0 = arith.constant 0 : i32
    %c0_i32_1 = arith.constant 0 : i32
    return %arg0, %c0_i32, %c0_i32_0 : i32, i32, i32
  }
}

</mosaic_0001>

<llo_original>
// kernel: tpu_custom_call.1
$region0: #{tpu_custom_call.1}
  #allocation0 [shape = 'u32[]', space=smem, size = 0x4, offset = 0x4, fixed_abs, tag = 'smem constant byte address 0x4 - core index']
  #allocation1 [shape = 'u32[144,128]{1,0:T(1,128)}', space=vmem, size = 0x12000, scoped, tag = 'internal scratch']
  %s0 = inlined_call_operand.hbm [shape: f32[2,8,32], index: 0, kind: input, shape index: {}]
  %s1 = inlined_call_operand.vmem [shape: f32[1,32], index: 1, kind: input, shape index: {}]
  %s2 = inlined_call_operand.vmem [shape: f32[1,32], index: 2, kind: input, shape index: {}]
  %s3 = inlined_call_operand.vmem [shape: f32[32,96], index: 3, kind: input, shape index: {}]
  %s4 = inlined_call_operand.vmem [shape: f32[1,96], index: 4, kind: input, shape index: {}]
  %s5 = inlined_call_operand.vmem [shape: f32[32,32], index: 5, kind: input, shape index: {}]
  %s6 = inlined_call_operand.vmem [shape: f32[1,32], index: 6, kind: input, shape index: {}]
  %s7 = inlined_call_operand.vmem [shape: f32[1,32], index: 7, kind: input, shape index: {}]
  %s8 = inlined_call_operand.vmem [shape: f32[1,32], index: 8, kind: input, shape index: {}]
  %s9 = inlined_call_operand.vmem [shape: f32[32,64], index: 9, kind: input, shape index: {}]
  %s10 = inlined_call_operand.vmem [shape: f32[1,64], index: 10, kind: input, shape index: {}]
  %s11 = inlined_call_operand.vmem [shape: f32[64,32], index: 11, kind: input, shape index: {}]
  %s12 = inlined_call_operand.vmem [shape: f32[1,32], index: 12, kind: input, shape index: {}]
  %s13 = inlined_call_operand.hbm [shape: f32[2,8,32], index: 13, kind: output, shape index: {0}]
  %s14 = inlined_call_operand.hbm [shape: f32[2,8,8], index: 14, kind: output, shape index: {1}]
  %15 = xla_tuple %s13, %s14
  %s16 = sld [smem:[#allocation0]]
  $region74: #{tpu_custom_call.1} parent=0
    _
  %s18 = ssub.s32 1, %s16
  %s19 = scalar_select 0, %s18, %s16
  $region1: #{tpu_custom_call.1} parent=0
    #allocation2 [shape = 'u8[8192]{0}', space=vmem, size = 0x2000, scoped, tag = 'input window, operand 0, single buffered']
    #allocation3 [shape = 's32[1]{0}', space=sflag, size = 0x4, scoped, tag = 'scoped memory for tpu_custom_call.1']
    #allocation4 [shape = 's32[1]{0}', space=sflag, size = 0x4, scoped, tag = 'scoped memory for tpu_custom_call.1']
    #allocation5 [shape = 'u8[8192]{0}', space=vmem, size = 0x2000, scoped, tag = 'output window, operand 0, single buffered']
    #allocation6 [shape = 'u8[8192]{0}', space=vmem, size = 0x2000, scoped, tag = 'output window, operand 1, single buffered']
    #allocation7 [shape = 's32[1]{0}', space=sflag, size = 0x4, scoped, tag = 'scoped memory for tpu_custom_call.1']
    %20 = vsyncpa [#allocation3], 0
    %21 = vsyncpa [#allocation4], 0
    %22 = vsyncpa [#allocation7], 0
    // Predicated region
    $region2: #{tpu_custom_call.1} parent=1 // pred_check
      _
    $region3: #{tpu_custom_call.1} parent=1 // pred_check_branch
      %24 = sbr.rel (0) target = $region5
    $region4: #{tpu_custom_call.1} parent=1 // pred_region
      %s26 = ssub.s32 256, 256
      %27 = vsyncadd [#allocation3], %s26
      %s28 = sshll.u32 [#allocation2], 4
      %s29 = int_to_ptr.vmem [resolvable:$true] %s28
      %34 = dma.hbm_to_vmem [thread:$0]  %s0, 256, %s29, [#allocation3], 128, 128, 8
    $region5: #{tpu_custom_call.1} parent=1 // pred_fallthru
      _
    // Predicated region
    $region6: #{tpu_custom_call.1} parent=1 // pred_check
      _
    $region7: #{tpu_custom_call.1} parent=1 // pred_check_branch
      %36 = sbr.rel (0) target = $region9
    $region8: #{tpu_custom_call.1} parent=1 // pred_region
      _
    $region9: #{tpu_custom_call.1} parent=1 // pred_fallthru
      _
    // Predicated region
    $region10: #{tpu_custom_call.1} parent=1 // pred_check
      _
    $region11: #{tpu_custom_call.1} parent=1 // pred_check_branch
      %38 = sbr.rel (0) target = $region13
    $region12: #{tpu_custom_call.1} parent=1 // pred_region
      _
    $region13: #{tpu_custom_call.1} parent=1 // pred_fallthru
      _
    // Predicated region
    $region14: #{tpu_custom_call.1} parent=1 // pred_check
      _
    $region15: #{tpu_custom_call.1} parent=1 // pred_check_branch
      %40 = sbr.rel (0) target = $region17
    $region16: #{tpu_custom_call.1} parent=1 // pred_region
      _
    $region17: #{tpu_custom_call.1} parent=1 // pred_fallthru
      _
    // Predicated region
    $region18: #{tpu_custom_call.1} parent=1 // pred_check
      _
    $region19: #{tpu_custom_call.1} parent=1 // pred_check_branch
      %42 = sbr.rel (0) target = $region21
    $region20: #{tpu_custom_call.1} parent=1 // pred_region
      _
    $region21: #{tpu_custom_call.1} parent=1 // pred_fallthru
      _
    // Predicated region
    $region22: #{tpu_custom_call.1} parent=1 // pred_check
      _
    $region23: #{tpu_custom_call.1} parent=1 // pred_check_branch
      %44 = sbr.rel (0) target = $region25
    $region24: #{tpu_custom_call.1} parent=1 // pred_region
      _
    $region25: #{tpu_custom_call.1} parent=1 // pred_fallthru
      _
    // Predicated region
    $region26: #{tpu_custom_call.1} parent=1 // pred_check
      _
    $region27: #{tpu_custom_call.1} parent=1 // pred_check_branch
      %46 = sbr.rel (0) target = $region29
    $region28: #{tpu_custom_call.1} parent=1 // pred_region
      _
    $region29: #{tpu_custom_call.1} parent=1 // pred_fallthru
      _
    // Predicated region
    $region30: #{tpu_custom_call.1} parent=1 // pred_check
      _
    $region31: #{tpu_custom_call.1} parent=1 // pred_check_branch
      %48 = sbr.rel (0) target = $region33
    $region32: #{tpu_custom_call.1} parent=1 // pred_region
      _
    $region33: #{tpu_custom_call.1} parent=1 // pred_fallthru
      _
    // Predicated region
    $region34: #{tpu_custom_call.1} parent=1 // pred_check
      _
    $region35: #{tpu_custom_call.1} parent=1 // pred_check_branch
      %50 = sbr.rel (0) target = $region37
    $region36: #{tpu_custom_call.1} parent=1 // pred_region
      _
    $region37: #{tpu_custom_call.1} parent=1 // pred_fallthru
      _
    // Predicated region
    $region38: #{tpu_custom_call.1} parent=1 // pred_check
      _
    $region39: #{tpu_custom_call.1} parent=1 // pred_check_branch
      %52 = sbr.rel (0) target = $region41
    $region40: #{tpu_custom_call.1} parent=1 // pred_region
      _
    $region41: #{tpu_custom_call.1} parent=1 // pred_fallthru
      _
    // Predicated region
    $region42: #{tpu_custom_call.1} parent=1 // pred_check
      _
    $region43: #{tpu_custom_call.1} parent=1 // pred_check_branch
      %54 = sbr.rel (0) target = $region45
    $region44: #{tpu_custom_call.1} parent=1 // pred_region
      _
    $region45: #{tpu_custom_call.1} parent=1 // pred_fallthru
      _
    // Predicated region
    $region46: #{tpu_custom_call.1} parent=1 // pred_check
      _
    $region47: #{tpu_custom_call.1} parent=1 // pred_check_branch
      %56 = sbr.rel (0) target = $region49
    $region48: #{tpu_custom_call.1} parent=1 // pred_region
      _
    $region49: #{tpu_custom_call.1} parent=1 // pred_fallthru
      _
    // Predicated region
    $region50: #{tpu_custom_call.1} parent=1 // pred_check
      _
    $region51: #{tpu_custom_call.1} parent=1 // pred_check_branch
      %58 = sbr.rel (0) target = $region53
    $region52: #{tpu_custom_call.1} parent=1 // pred_region
      _
    $region53: #{tpu_custom_call.1} parent=1 // pred_fallthru
      _
    // Predicated region
    $region54: #{tpu_custom_call.1} parent=1 // pred_check
      _
    $region55: #{tpu_custom_call.1} parent=1 // pred_check_branch
      %60 = sbr.rel (0) target = $region57
    $region56: #{tpu_custom_call.1} parent=1 // pred_region
      %61 = dma.done [#allocation3], 256
    $region57: #{tpu_custom_call.1} parent=1 // pred_fallthru
      _
    %v62 = vld [vmem:[#allocation2] sm:$0xff]
    %v63 = vld [vmem:[#allocation2 + $0x8] sm:$0xff]
    %v64 = vld [vmem:[%s1] sm:$0x1]
    %v65 = vld [vmem:[%s2] sm:$0x1]
    %vm66 = vcmask 261120
    %v67 = vsel %vm66, %v62, 0.0
    %68 = vadd.xlane.f32.xlu0 %v67
    %v69 = vpop.xlane.xlu0 %68
    %v70 = vsel %vm66, %v63, 0.0
    %71 = vadd.xlane.f32.xlu0 %v70
    %v72 = vpop.xlane.xlu0 %71
    %v73 = vrcp.pop 32.0
    %v74 = vmul.f32 %v69, %v73
    %v75 = vmul.f32 %v72, %v73
    %v76 = vsub.f32 %v62, %v74
    %v77 = vsub.f32 %v63, %v75
    %v78 = vmul.f32 %v76, %v76
    %v79 = vmul.f32 %v77, %v77
    %v80 = vsel %vm66, %v78, 0.0
    %81 = vadd.xlane.f32.xlu0 %v80
    %v82 = vpop.xlane.xlu0 %81
    %v83 = vsel %vm66, %v79, 0.0
    %84 = vadd.xlane.f32.xlu0 %v83
    %v85 = vpop.xlane.xlu0 %84
    %v86 = vmul.f32 %v82, %v73
    %v87 = vmul.f32 %v85, %v73
    %v88 = vadd.f32 %v86, 1e-05
    %v89 = vadd.f32 %v87, 1e-05
    %v90 = vrsqrt.pop %v88
    %v91 = vrsqrt.pop %v89
    %v92 = vmul.f32 %v76, %v90
    %v93 = vmul.f32 %v77, %v91
    %v95 = vlaneseq
    %v96 = vshrl.u32 %v95, 7
    %v97 = vsub.s32 0, %v96
    %v98 = vrot.slane %v64, %v97
    %v100 = vmul.f32 %v92, %v98
    %v101 = vmul.f32 %v93, %v98
    %v103 = vlaneseq
    %v104 = vshrl.u32 %v103, 7
    %v105 = vsub.s32 0, %v104
    %v106 = vrot.slane %v65, %v105
    %v108 = vadd.f32 %v100, %v106
    %v109 = vadd.f32 %v101, %v106
    %v110 = vld [vmem:[%s3] sm:$0xff]
    %v111 = vld [vmem:[%s3 + $0x8] sm:$0xff]
    %v112 = vld [vmem:[%s3 + $0x10] sm:$0xff]
    %v113 = vld [vmem:[%s3 + $0x18] sm:$0xff]
    %v114 = vld [vmem:[%s4] sm:$0x1]
    %v116 = vlaneseq
    %v117 = vshrl.u32 %v116, 7
    %v118 = vsub.s32 0, %v117
    %v119 = vrot.slane %v114, %v118
    %v122 = vsel %vm66, %v108, 0
    %v125 = vsel %vm66, %v109, 0
    %127 = vmatprep.subr.mxu0 0.0
    %128 = vmatpush1.msra.mxu0 %v110
    %129 = vmatprep.subr.mxu0 0.0
    %130 = vmatpush1.msra.mxu0 %v111
    %131 = vmatprep.subr.mxu0 0.0
    %132 = vmatpush1.msra.mxu0 %v112
    %133 = vmatprep.subr.mxu0 0.0
    %134 = vmatpush1.msra.mxu0 %v113
    %135 = vmatprep.subr.mxu0 0.0
    %136 = vmatpush1.msra.mxu0 0.0
    %137 = vmatprep.subr.mxu0 0.0
    %138 = vmatpush1.msra.mxu0 0.0
    %139 = vmatprep.subr.mxu0 0.0
    %140 = vmatpush1.msra.mxu0 0.0
    %141 = vmatprep.subr.mxu0 0.0
    %142 = vmatpush1.msra.mxu0 0.0
    %143 = vmatprep.subr.mxu0 0.0
    %144 = vmatpush1.msra.mxu0 0.0
    %145 = vmatprep.subr.mxu0 0.0
    %146 = vmatpush1.msra.mxu0 0.0
    %147 = vmatprep.subr.mxu0 0.0
    %148 = vmatpush1.msra.mxu0 0.0
    %149 = vmatprep.subr.mxu0 0.0
    %150 = vmatpush1.msra.mxu0 0.0
    %151 = vmatprep.subr.mxu0 0.0
    %152 = vmatpush1.msra.mxu0 0.0
    %153 = vmatprep.subr.mxu0 0.0
    %154 = vmatpush1.msra.mxu0 0.0
    %155 = vmatprep.subr.mxu0 0.0
    %156 = vmatpush1.msra.mxu0 0.0
    %157 = vmatprep.subr.mxu0 0.0
    %158 = vmatpush1.msra.mxu0 0.0
    %159 = vmatprep.subr.mxu0 0.0
    %160 = vmatpush1.msra.mxu0 0.0
    %161 = vmatprep.subr.mxu0 0.0
    %162 = vmatpush1.msra.mxu0 0.0
    %163 = vmatprep.subr.mxu0 0.0
    %164 = vmatpush1.msra.mxu0 0.0
    %165 = vmatprep.subr.mxu0 0.0
    %166 = vmatpush1.msra.mxu0 0.0
    %167 = vmatprep.subr.mxu0 0.0
    %168 = vmatpush1.msra.mxu0 0.0
    %169 = vmatprep.subr.mxu0 0.0
    %170 = vmatpush1.msra.mxu0 0.0
    %171 = vmatprep.subr.mxu0 0.0
    %172 = vmatpush1.msra.mxu0 0.0
    %173 = vmatprep.subr.mxu0 0.0
    %174 = vmatpush1.msra.mxu0 0.0
    %175 = vmatprep.subr.mxu0 0.0
    %176 = vmatpush1.msra.mxu0 0.0
    %177 = vmatprep.subr.mxu0 0.0
    %178 = vmatpush1.msra.mxu0 0.0
    %179 = vmatprep.subr.mxu0 0.0
    %180 = vmatpush1.msra.mxu0 0.0
    %181 = vmatprep.subr.mxu0 0.0
    %182 = vmatpush1.msra.mxu0 0.0
    %183 = vmatprep.subr.mxu0 0.0
    %184 = vmatpush1.msra.mxu0 0.0
    %185 = vmatprep.subr.mxu0 0.0
    %186 = vmatpush1.msra.mxu0 0.0
    %187 = vmatprep.subr.mxu0 0.0
    %188 = vmatpush1.msra.mxu0 0.0
    %189 = vmatprep.subr.mxu0 0.0
    %190 = vmatpush1.msra.mxu0 0.0
    %191 = vmatprep.mubr.f32.mxu0 0.0
    %192 = vmatmul.mubr.f32.gmra.mrb[0].mxu0 %v122
    %v193 = vpop.f32.mrb[0].mxu0
    %v194 = vadd.f32 %v119, %v193
    %v195 = vpop.f32.mrb[0].mxu0
    %196 = vmatprep.mubr.f32.mxu0 0.0
    %197 = vmatmul.mubr.f32.gmra.mrb[0].mxu0 %v125
    %v198 = vpop.f32.mrb[0].mxu0
    %v199 = vadd.f32 %v119, %v198
    %v200 = vpop.f32.mrb[0].mxu0
    %201 = vdwg.mxu0
    %203 = vrot.lane.b32.xlu0 %v194, 96
    %v204 = vpop.permute.xlu0 %203
    %vm205 = vcmask 64512
    %v206 = vsel %vm205, %v194, 0
    %v208 = vsel %vm205, %v204, 0
    %210 = vmatprep.subr.mxu0 0.0
    %211 = vmatpush1.xpose.msra.mxu0 %v208
    %212 = vmatprep.subr.mxu0 0.0
    %213 = vmatpush1.xpose.msra.mxu0 0.0
    %214 = vmatprep.subr.mxu0 0.0
    %215 = vmatpush1.xpose.msra.mxu0 0.0
    %216 = vmatprep.subr.mxu0 0.0
    %217 = vmatpush1.xpose.msra.mxu0 0.0
    %218 = vmatprep.subr.mxu0 0.0
    %219 = vmatpush1.xpose.msra.mxu0 0.0
    %220 = vmatprep.subr.mxu0 0.0
    %221 = vmatpush1.xpose.msra.mxu0 0.0
    %222 = vmatprep.subr.mxu0 0.0
    %223 = vmatpush1.xpose.msra.mxu0 0.0
    %224 = vmatprep.subr.mxu0 0.0
    %225 = vmatpush1.xpose.msra.mxu0 0.0
    %226 = vmatprep.subr.mxu0 0.0
    %227 = vmatpush1.xpose.msra.mxu0 0.0
    %228 = vmatprep.subr.mxu0 0.0
    %229 = vmatpush1.xpose.msra.mxu0 0.0
    %230 = vmatprep.subr.mxu0 0.0
    %231 = vmatpush1.xpose.msra.mxu0 0.0
    %232 = vmatprep.subr.mxu0 0.0
    %233 = vmatpush1.xpose.msra.mxu0 0.0
    %234 = vmatprep.subr.mxu0 0.0
    %235 = vmatpush1.xpose.msra.mxu0 0.0
    %236 = vmatprep.subr.mxu0 0.0
    %237 = vmatpush1.xpose.msra.mxu0 0.0
    %238 = vmatprep.subr.mxu0 0.0
    %239 = vmatpush1.xpose.msra.mxu0 0.0
    %240 = vmatprep.subr.mxu0 0.0
    %241 = vmatpush1.xpose.msra.mxu0 0.0
    %242 = vmatprep.subr.mxu0 0.0
    %243 = vmatpush1.xpose.msra.mxu0 0.0
    %244 = vmatprep.subr.mxu0 0.0
    %245 = vmatpush1.xpose.msra.mxu0 0.0
    %246 = vmatprep.subr.mxu0 0.0
    %247 = vmatpush1.xpose.msra.mxu0 0.0
    %248 = vmatprep.subr.mxu0 0.0
    %249 = vmatpush1.xpose.msra.mxu0 0.0
    %250 = vmatprep.subr.mxu0 0.0
    %251 = vmatpush1.xpose.msra.mxu0 0.0
    %252 = vmatprep.subr.mxu0 0.0
    %253 = vmatpush1.xpose.msra.mxu0 0.0
    %254 = vmatprep.subr.mxu0 0.0
    %255 = vmatpush1.xpose.msra.mxu0 0.0
    %256 = vmatprep.subr.mxu0 0.0
    %257 = vmatpush1.xpose.msra.mxu0 0.0
    %258 = vmatprep.subr.mxu0 0.0
    %259 = vmatpush1.xpose.msra.mxu0 0.0
    %260 = vmatprep.subr.mxu0 0.0
    %261 = vmatpush1.xpose.msra.mxu0 0.0
    %262 = vmatprep.subr.mxu0 0.0
    %263 = vmatpush1.xpose.msra.mxu0 0.0
    %264 = vmatprep.subr.mxu0 0.0
    %265 = vmatpush1.xpose.msra.mxu0 0.0
    %266 = vmatprep.subr.mxu0 0.0
    %267 = vmatpush1.xpose.msra.mxu0 0.0
    %268 = vmatprep.subr.mxu0 0.0
    %269 = vmatpush1.xpose.msra.mxu0 0.0
    %270 = vmatprep.subr.mxu0 0.0
    %271 = vmatpush1.xpose.msra.mxu0 0.0
    %272 = vmatprep.subr.mxu0 0.0
    %273 = vmatpush1.xpose.msra.mxu0 0.0
    %274 = vmatprep.mubr.f32.mxu0 0.0
    %275 = vmatmul.mubr.f32.gmra.mrb[0].mxu0 %v206
    %v276 = vpop.f32.mrb[0].mxu0
    %v277 = vadd.f32 0.0, %v276
    %v278 = vpop.f32.mrb[0].mxu0
    %279 = vdwg.mxu0
    %281 = vrot.lane.b32.xlu0 %v199, 96
    %v282 = vpop.permute.xlu0 %281
    %v283 = vsel %vm205, %v199, 0
    %v285 = vsel %vm205, %v282, 0
    %287 = vmatprep.subr.mxu0 0.0
    %288 = vmatpush1.xpose.msra.mxu0 %v285
    %289 = vmatprep.subr.mxu0 0.0
    %290 = vmatpush1.xpose.msra.mxu0 0.0
    %291 = vmatprep.subr.mxu0 0.0
    %292 = vmatpush1.xpose.msra.mxu0 0.0
    %293 = vmatprep.subr.mxu0 0.0
    %294 = vmatpush1.xpose.msra.mxu0 0.0
    %295 = vmatprep.subr.mxu0 0.0
    %296 = vmatpush1.xpose.msra.mxu0 0.0
    %297 = vmatprep.subr.mxu0 0.0
    %298 = vmatpush1.xpose.msra.mxu0 0.0
    %299 = vmatprep.subr.mxu0 0.0
    %300 = vmatpush1.xpose.msra.mxu0 0.0
    %301 = vmatprep.subr.mxu0 0.0
    %302 = vmatpush1.xpose.msra.mxu0 0.0
    %303 = vmatprep.subr.mxu0 0.0
    %304 = vmatpush1.xpose.msra.mxu0 0.0
    %305 = vmatprep.subr.mxu0 0.0
    %306 = vmatpush1.xpose.msra.mxu0 0.0
    %307 = vmatprep.subr.mxu0 0.0
    %308 = vmatpush1.xpose.msra.mxu0 0.0
    %309 = vmatprep.subr.mxu0 0.0
    %310 = vmatpush1.xpose.msra.mxu0 0.0
    %311 = vmatprep.subr.mxu0 0.0
    %312 = vmatpush1.xpose.msra.mxu0 0.0
    %313 = vmatprep.subr.mxu0 0.0
    %314 = vmatpush1.xpose.msra.mxu0 0.0
    %315 = vmatprep.subr.mxu0 0.0
    %316 = vmatpush1.xpose.msra.mxu0 0.0
    %317 = vmatprep.subr.mxu0 0.0
    %318 = vmatpush1.xpose.msra.mxu0 0.0
    %319 = vmatprep.subr.mxu0 0.0
    %320 = vmatpush1.xpose.msra.mxu0 0.0
    %321 = vmatprep.subr.mxu0 0.0
    %322 = vmatpush1.xpose.msra.mxu0 0.0
    %323 = vmatprep.subr.mxu0 0.0
    %324 = vmatpush1.xpose.msra.mxu0 0.0
    %325 = vmatprep.subr.mxu0 0.0
    %326 = vmatpush1.xpose.msra.mxu0 0.0
    %327 = vmatprep.subr.mxu0 0.0
    %328 = vmatpush1.xpose.msra.mxu0 0.0
    %329 = vmatprep.subr.mxu0 0.0
    %330 = vmatpush1.xpose.msra.mxu0 0.0
    %331 = vmatprep.subr.mxu0 0.0
    %332 = vmatpush1.xpose.msra.mxu0 0.0
    %333 = vmatprep.subr.mxu0 0.0
    %334 = vmatpush1.xpose.msra.mxu0 0.0
    %335 = vmatprep.subr.mxu0 0.0
    %336 = vmatpush1.xpose.msra.mxu0 0.0
    %337 = vmatprep.subr.mxu0 0.0
    %338 = vmatpush1.xpose.msra.mxu0 0.0
    %339 = vmatprep.subr.mxu0 0.0
    %340 = vmatpush1.xpose.msra.mxu0 0.0
    %341 = vmatprep.subr.mxu0 0.0
    %342 = vmatpush1.xpose.msra.mxu0 0.0
    %343 = vmatprep.subr.mxu0 0.0
    %344 = vmatpush1.xpose.msra.mxu0 0.0
    %345 = vmatprep.subr.mxu0 0.0
    %346 = vmatpush1.xpose.msra.mxu0 0.0
    %347 = vmatprep.subr.mxu0 0.0
    %348 = vmatpush1.xpose.msra.mxu0 0.0
    %349 = vmatprep.subr.mxu0 0.0
    %350 = vmatpush1.xpose.msra.mxu0 0.0
    %351 = vmatprep.mubr.f32.mxu0 0.0
    %352 = vmatmul.mubr.f32.gmra.mrb[0].mxu0 %v283
    %v353 = vpop.f32.mrb[0].mxu0
    %v354 = vadd.f32 0.0, %v353
    %v355 = vpop.f32.mrb[0].mxu0
    %356 = vdwg.mxu0
    %v357 = vsel %vm205, %v277, -inf
    %358 = vmax.xlane.f32.xlu0 %v357
    %v359 = vpop.xlane.xlu0 %358
    %v360 = vsel %vm205, %v354, -inf
    %361 = vmax.xlane.f32.xlu0 %v360
    %v362 = vpop.xlane.xlu0 %361
    %v363 = vsub.f32 %v277, %v359
    %v364 = vsub.f32 %v354, %v362
    %v365 = vmul.f32 %v363, 1.442695
    %v366 = vpow.pop %v365
    %v367 = vmul.f32 %v364, 1.442695
    %v368 = vpow.pop %v367
    %v369 = vsel %vm205, %v366, 0.0
    %370 = vadd.xlane.f32.xlu0 %v369
    %v371 = vpop.xlane.xlu0 %370
    %v372 = vsel %vm205, %v368, 0.0
    %373 = vadd.xlane.f32.xlu0 %v372
    %v374 = vpop.xlane.xlu0 %373
    %v375 = vrcp.pop %v371
    %v376 = vrcp.pop %v374
    %v377 = vmul.f32 %v366, %v375
    %v378 = vmul.f32 %v368, %v376
    %v379 = vadd.f32 %v377, 0.0
    %v380 = vadd.f32 %v378, 0.0
    %381 = vrot.lane.b32.xlu0 %v194, 64
    %v382 = vpop.permute.xlu0 %381
    %v385 = vsel %vm205, %v377, 0
    %387 = vmatprep.subr.mxu0 0.0
    %388 = vmatpush1.msra.mxu0 %v382
    %389 = vmatprep.subr.mxu0 0.0
    %390 = vmatpush1.msra.mxu0 0.0
    %391 = vmatprep.subr.mxu0 0.0
    %392 = vmatpush1.msra.mxu0 0.0
    %393 = vmatprep.subr.mxu0 0.0
    %394 = vmatpush1.msra.mxu0 0.0
    %395 = vmatprep.subr.mxu0 0.0
    %396 = vmatpush1.msra.mxu0 0.0
    %397 = vmatprep.subr.mxu0 0.0
    %398 = vmatpush1.msra.mxu0 0.0
    %399 = vmatprep.subr.mxu0 0.0
    %400 = vmatpush1.msra.mxu0 0.0
    %401 = vmatprep.subr.mxu0 0.0
    %402 = vmatpush1.msra.mxu0 0.0
    %403 = vmatprep.subr.mxu0 0.0
    %404 = vmatpush1.msra.mxu0 0.0
    %405 = vmatprep.subr.mxu0 0.0
    %406 = vmatpush1.msra.mxu0 0.0
    %407 = vmatprep.subr.mxu0 0.0
    %408 = vmatpush1.msra.mxu0 0.0
    %409 = vmatprep.subr.mxu0 0.0
    %410 = vmatpush1.msra.mxu0 0.0
    %411 = vmatprep.subr.mxu0 0.0
    %412 = vmatpush1.msra.mxu0 0.0
    %413 = vmatprep.subr.mxu0 0.0
    %414 = vmatpush1.msra.mxu0 0.0
    %415 = vmatprep.subr.mxu0 0.0
    %416 = vmatpush1.msra.mxu0 0.0
    %417 = vmatprep.subr.mxu0 0.0
    %418 = vmatpush1.msra.mxu0 0.0
    %419 = vmatprep.subr.mxu0 0.0
    %420 = vmatpush1.msra.mxu0 0.0
    %421 = vmatprep.subr.mxu0 0.0
    %422 = vmatpush1.msra.mxu0 0.0
    %423 = vmatprep.subr.mxu0 0.0
    %424 = vmatpush1.msra.mxu0 0.0
    %425 = vmatprep.subr.mxu0 0.0
    %426 = vmatpush1.msra.mxu0 0.0
    %427 = vmatprep.subr.mxu0 0.0
    %428 = vmatpush1.msra.mxu0 0.0
    %429 = vmatprep.subr.mxu0 0.0
    %430 = vmatpush1.msra.mxu0 0.0
    %431 = vmatprep.subr.mxu0 0.0
    %432 = vmatpush1.msra.mxu0 0.0
    %433 = vmatprep.subr.mxu0 0.0
    %434 = vmatpush1.msra.mxu0 0.0
    %435 = vmatprep.subr.mxu0 0.0
    %436 = vmatpush1.msra.mxu0 0.0
    %437 = vmatprep.subr.mxu0 0.0
    %438 = vmatpush1.msra.mxu0 0.0
    %439 = vmatprep.subr.mxu0 0.0
    %440 = vmatpush1.msra.mxu0 0.0
    %441 = vmatprep.subr.mxu0 0.0
    %442 = vmatpush1.msra.mxu0 0.0
    %443 = vmatprep.subr.mxu0 0.0
    %444 = vmatpush1.msra.mxu0 0.0
    %445 = vmatprep.subr.mxu0 0.0
    %446 = vmatpush1.msra.mxu0 0.0
    %447 = vmatprep.subr.mxu0 0.0
    %448 = vmatpush1.msra.mxu0 0.0
    %449 = vmatprep.subr.mxu0 0.0
    %450 = vmatpush1.msra.mxu0 0.0
    %451 = vmatprep.mubr.f32.mxu0 0.0
    %452 = vmatmul.mubr.f32.gmra.mrb[0].mxu0 %v385
    %v453 = vpop.f32.mrb[0].mxu0
    %v454 = vadd.f32 0.0, %v453
    %v455 = vpop.f32.mrb[0].mxu0
    %456 = vdwg.mxu0
    %457 = vrot.lane.b32.xlu0 %v199, 64
    %v458 = vpop.permute.xlu0 %457
    %v461 = vsel %vm205, %v378, 0
    %463 = vmatprep.subr.mxu0 0.0
    %464 = vmatpush1.msra.mxu0 %v458
    %465 = vmatprep.subr.mxu0 0.0
    %466 = vmatpush1.msra.mxu0 0.0
    %467 = vmatprep.subr.mxu0 0.0
    %468 = vmatpush1.msra.mxu0 0.0
    %469 = vmatprep.subr.mxu0 0.0
    %470 = vmatpush1.msra.mxu0 0.0
    %471 = vmatprep.subr.mxu0 0.0
    %472 = vmatpush1.msra.mxu0 0.0
    %473 = vmatprep.subr.mxu0 0.0
    %474 = vmatpush1.msra.mxu0 0.0
    %475 = vmatprep.subr.mxu0 0.0
    %476 = vmatpush1.msra.mxu0 0.0
    %477 = vmatprep.subr.mxu0 0.0
    %478 = vmatpush1.msra.mxu0 0.0
    %479 = vmatprep.subr.mxu0 0.0
    %480 = vmatpush1.msra.mxu0 0.0
    %481 = vmatprep.subr.mxu0 0.0
    %482 = vmatpush1.msra.mxu0 0.0
    %483 = vmatprep.subr.mxu0 0.0
    %484 = vmatpush1.msra.mxu0 0.0
    %485 = vmatprep.subr.mxu0 0.0
    %486 = vmatpush1.msra.mxu0 0.0
    %487 = vmatprep.subr.mxu0 0.0
    %488 = vmatpush1.msra.mxu0 0.0
    %489 = vmatprep.subr.mxu0 0.0
    %490 = vmatpush1.msra.mxu0 0.0
    %491 = vmatprep.subr.mxu0 0.0
    %492 = vmatpush1.msra.mxu0 0.0
    %493 = vmatprep.subr.mxu0 0.0
    %494 = vmatpush1.msra.mxu0 0.0
    %495 = vmatprep.subr.mxu0 0.0
    %496 = vmatpush1.msra.mxu0 0.0
    %497 = vmatprep.subr.mxu0 0.0
    %498 = vmatpush1.msra.mxu0 0.0
    %499 = vmatprep.subr.mxu0 0.0
    %500 = vmatpush1.msra.mxu0 0.0
    %501 = vmatprep.subr.mxu0 0.0
    %502 = vmatpush1.msra.mxu0 0.0
    %503 = vmatprep.subr.mxu0 0.0
    %504 = vmatpush1.msra.mxu0 0.0
    %505 = vmatprep.subr.mxu0 0.0
    %506 = vmatpush1.msra.mxu0 0.0
    %507 = vmatprep.subr.mxu0 0.0
    %508 = vmatpush1.msra.mxu0 0.0
    %509 = vmatprep.subr.mxu0 0.0
    %510 = vmatpush1.msra.mxu0 0.0
    %511 = vmatprep.subr.mxu0 0.0
    %512 = vmatpush1.msra.mxu0 0.0
    %513 = vmatprep.subr.mxu0 0.0
    %514 = vmatpush1.msra.mxu0 0.0
    %515 = vmatprep.subr.mxu0 0.0
    %516 = vmatpush1.msra.mxu0 0.0
    %517 = vmatprep.subr.mxu0 0.0
    %518 = vmatpush1.msra.mxu0 0.0
    %519 = vmatprep.subr.mxu0 0.0
    %520 = vmatpush1.msra.mxu0 0.0
    %521 = vmatprep.subr.mxu0 0.0
    %522 = vmatpush1.msra.mxu0 0.0
    %523 = vmatprep.subr.mxu0 0.0
    %524 = vmatpush1.msra.mxu0 0.0
    %525 = vmatprep.subr.mxu0 0.0
    %526 = vmatpush1.msra.mxu0 0.0
    %527 = vmatprep.mubr.f32.mxu0 0.0
    %528 = vmatmul.mubr.f32.gmra.mrb[0].mxu0 %v461
    %v529 = vpop.f32.mrb[0].mxu0
    %v530 = vadd.f32 0.0, %v529
    %v531 = vpop.f32.mrb[0].mxu0
    %532 = vdwg.mxu0
    %v533 = vld [vmem:[%s5] sm:$0xff]
    %534 = vrot.lane.b32.xlu0 %v194, 120
    %v535 = vpop.permute.xlu0 %534
    %536 = vrot.lane.b32.xlu0 %v194, 88
    %v537 = vpop.permute.xlu0 %536
    %v538 = vsel %vm205, %v535, 0
    %v540 = vsel %vm205, %v537, 0
    %542 = vmatprep.subr.mxu0 0.0
    %543 = vmatpush1.xpose.msra.mxu0 %v540
    %544 = vmatprep.subr.mxu0 0.0
    %545 = vmatpush1.xpose.msra.mxu0 0.0
    %546 = vmatprep.subr.mxu0 0.0
    %547 = vmatpush1.xpose.msra.mxu0 0.0
    %548 = vmatprep.subr.mxu0 0.0
    %549 = vmatpush1.xpose.msra.mxu0 0.0
    %550 = vmatprep.subr.mxu0 0.0
    %551 = vmatpush1.xpose.msra.mxu0 0.0
    %552 = vmatprep.subr.mxu0 0.0
    %553 = vmatpush1.xpose.msra.mxu0 0.0
    %554 = vmatprep.subr.mxu0 0.0
    %555 = vmatpush1.xpose.msra.mxu0 0.0
    %556 = vmatprep.subr.mxu0 0.0
    %557 = vmatpush1.xpose.msra.mxu0 0.0
    %558 = vmatprep.subr.mxu0 0.0
    %559 = vmatpush1.xpose.msra.mxu0 0.0
    %560 = vmatprep.subr.mxu0 0.0
    %561 = vmatpush1.xpose.msra.mxu0 0.0
    %562 = vmatprep.subr.mxu0 0.0
    %563 = vmatpush1.xpose.msra.mxu0 0.0
    %564 = vmatprep.subr.mxu0 0.0
    %565 = vmatpush1.xpose.msra.mxu0 0.0
    %566 = vmatprep.subr.mxu0 0.0
    %567 = vmatpush1.xpose.msra.mxu0 0.0
    %568 = vmatprep.subr.mxu0 0.0
    %569 = vmatpush1.xpose.msra.mxu0 0.0
    %570 = vmatprep.subr.mxu0 0.0
    %571 = vmatpush1.xpose.msra.mxu0 0.0
    %572 = vmatprep.subr.mxu0 0.0
    %573 = vmatpush1.xpose.msra.mxu0 0.0
    %574 = vmatprep.subr.mxu0 0.0
    %575 = vmatpush1.xpose.msra.mxu0 0.0
    %576 = vmatprep.subr.mxu0 0.0
    %577 = vmatpush1.xpose.msra.mxu0 0.0
    %578 = vmatprep.subr.mxu0 0.0
    %579 = vmatpush1.xpose.msra.mxu0 0.0
    %580 = vmatprep.subr.mxu0 0.0
    %581 = vmatpush1.xpose.msra.mxu0 0.0
    %582 = vmatprep.subr.mxu0 0.0
    %583 = vmatpush1.xpose.msra.mxu0 0.0
    %584 = vmatprep.subr.mxu0 0.0
    %585 = vmatpush1.xpose.msra.mxu0 0.0
    %586 = vmatprep.subr.mxu0 0.0
    %587 = vmatpush1.xpose.msra.mxu0 0.0
    %588 = vmatprep.subr.mxu0 0.0
    %589 = vmatpush1.xpose.msra.mxu0 0.0
    %590 = vmatprep.subr.mxu0 0.0
    %591 = vmatpush1.xpose.msra.mxu0 0.0
    %592 = vmatprep.subr.mxu0 0.0
    %593 = vmatpush1.xpose.msra.mxu0 0.0
    %594 = vmatprep.subr.mxu0 0.0
    %595 = vmatpush1.xpose.msra.mxu0 0.0
    %596 = vmatprep.subr.mxu0 0.0
    %597 = vmatpush1.xpose.msra.mxu0 0.0
    %598 = vmatprep.subr.mxu0 0.0
    %599 = vmatpush1.xpose.msra.mxu0 0.0
    %600 = vmatprep.subr.mxu0 0.0
    %601 = vmatpush1.xpose.msra.mxu0 0.0
    %602 = vmatprep.subr.mxu0 0.0
    %603 = vmatpush1.xpose.msra.mxu0 0.0
    %604 = vmatprep.subr.mxu0 0.0
    %605 = vmatpush1.xpose.msra.mxu0 0.0
    %606 = vmatprep.mubr.f32.mxu0 0.0
    %607 = vmatmul.mubr.f32.gmra.mrb[0].mxu0 %v538
    %v608 = vpop.f32.mrb[0].mxu0
    %v609 = vadd.f32 0.0, %v608
    %v610 = vpop.f32.mrb[0].mxu0
    %611 = vdwg.mxu0
    %612 = vrot.lane.b32.xlu0 %v199, 120
    %v613 = vpop.permute.xlu0 %612
    %614 = vrot.lane.b32.xlu0 %v199, 88
    %v615 = vpop.permute.xlu0 %614
    %v616 = vsel %vm205, %v613, 0
    %v618 = vsel %vm205, %v615, 0
    %620 = vmatprep.subr.mxu0 0.0
    %621 = vmatpush1.xpose.msra.mxu0 %v618
    %622 = vmatprep.subr.mxu0 0.0
    %623 = vmatpush1.xpose.msra.mxu0 0.0
    %624 = vmatprep.subr.mxu0 0.0
    %625 = vmatpush1.xpose.msra.mxu0 0.0
    %626 = vmatprep.subr.mxu0 0.0
    %627 = vmatpush1.xpose.msra.mxu0 0.0
    %628 = vmatprep.subr.mxu0 0.0
    %629 = vmatpush1.xpose.msra.mxu0 0.0
    %630 = vmatprep.subr.mxu0 0.0
    %631 = vmatpush1.xpose.msra.mxu0 0.0
    %632 = vmatprep.subr.mxu0 0.0
    %633 = vmatpush1.xpose.msra.mxu0 0.0
    %634 = vmatprep.subr.mxu0 0.0
    %635 = vmatpush1.xpose.msra.mxu0 0.0
    %636 = vmatprep.subr.mxu0 0.0
    %637 = vmatpush1.xpose.msra.mxu0 0.0
    %638 = vmatprep.subr.mxu0 0.0
    %639 = vmatpush1.xpose.msra.mxu0 0.0
    %640 = vmatprep.subr.mxu0 0.0
    %641 = vmatpush1.xpose.msra.mxu0 0.0
    %642 = vmatprep.subr.mxu0 0.0
    %643 = vmatpush1.xpose.msra.mxu0 0.0
    %644 = vmatprep.subr.mxu0 0.0
    %645 = vmatpush1.xpose.msra.mxu0 0.0
    %646 = vmatprep.subr.mxu0 0.0
    %647 = vmatpush1.xpose.msra.mxu0 0.0
    %648 = vmatprep.subr.mxu0 0.0
    %649 = vmatpush1.xpose.msra.mxu0 0.0
    %650 = vmatprep.subr.mxu0 0.0
    %651 = vmatpush1.xpose.msra.mxu0 0.0
    %652 = vmatprep.subr.mxu0 0.0
    %653 = vmatpush1.xpose.msra.mxu0 0.0
    %654 = vmatprep.subr.mxu0 0.0
    %655 = vmatpush1.xpose.msra.mxu0 0.0
    %656 = vmatprep.subr.mxu0 0.0
    %657 = vmatpush1.xpose.msra.mxu0 0.0
    %658 = vmatprep.subr.mxu0 0.0
    %659 = vmatpush1.xpose.msra.mxu0 0.0
    %660 = vmatprep.subr.mxu0 0.0
    %661 = vmatpush1.xpose.msra.mxu0 0.0
    %662 = vmatprep.subr.mxu0 0.0
    %663 = vmatpush1.xpose.msra.mxu0 0.0
    %664 = vmatprep.subr.mxu0 0.0
    %665 = vmatpush1.xpose.msra.mxu0 0.0
    %666 = vmatprep.subr.mxu0 0.0
    %667 = vmatpush1.xpose.msra.mxu0 0.0
    %668 = vmatprep.subr.mxu0 0.0
    %669 = vmatpush1.xpose.msra.mxu0 0.0
    %670 = vmatprep.subr.mxu0 0.0
    %671 = vmatpush1.xpose.msra.mxu0 0.0
    %672 = vmatprep.subr.mxu0 0.0
    %673 = vmatpush1.xpose.msra.mxu0 0.0
    %674 = vmatprep.subr.mxu0 0.0
    %675 = vmatpush1.xpose.msra.mxu0 0.0
    %676 = vmatprep.subr.mxu0 0.0
    %677 = vmatpush1.xpose.msra.mxu0 0.0
    %678 = vmatprep.subr.mxu0 0.0
    %679 = vmatpush1.xpose.msra.mxu0 0.0
    %680 = vmatprep.subr.mxu0 0.0
    %681 = vmatpush1.xpose.msra.mxu0 0.0
    %682 = vmatprep.subr.mxu0 0.0
    %683 = vmatpush1.xpose.msra.mxu0 0.0
    %684 = vmatprep.mubr.f32.mxu0 0.0
    %685 = vmatmul.mubr.f32.gmra.mrb[0].mxu0 %v616
    %v686 = vpop.f32.mrb[0].mxu0
    %v687 = vadd.f32 0.0, %v686
    %v688 = vpop.f32.mrb[0].mxu0
    %689 = vdwg.mxu0
    %v690 = vsel %vm205, %v609, -inf
    %691 = vmax.xlane.f32.xlu0 %v690
    %v692 = vpop.xlane.xlu0 %691
    %v693 = vsel %vm205, %v687, -inf
    %694 = vmax.xlane.f32.xlu0 %v693
    %v695 = vpop.xlane.xlu0 %694
    %v696 = vsub.f32 %v609, %v692
    %v697 = vsub.f32 %v687, %v695
    %v698 = vmul.f32 %v696, 1.442695
    %v699 = vpow.pop %v698
    %v700 = vmul.f32 %v697, 1.442695
    %v701 = vpow.pop %v700
    %v702 = vsel %vm205, %v699, 0.0
    %703 = vadd.xlane.f32.xlu0 %v702
    %v704 = vpop.xlane.xlu0 %703
    %v705 = vsel %vm205, %v701, 0.0
    %706 = vadd.xlane.f32.xlu0 %v705
    %v707 = vpop.xlane.xlu0 %706
    %v708 = vrcp.pop %v704
    %v709 = vrcp.pop %v707
    %v710 = vmul.f32 %v699, %v708
    %v711 = vmul.f32 %v701, %v709
    %v712 = vadd.f32 %v379, %v710
    %v713 = vadd.f32 %v380, %v711
    %714 = vrot.lane.b32.xlu0 %v194, 56
    %v715 = vpop.permute.xlu0 %714
    %v718 = vsel %vm205, %v710, 0
    %720 = vmatprep.subr.mxu0 0.0
    %721 = vmatpush1.msra.mxu0 %v715
    %722 = vmatprep.subr.mxu0 0.0
    %723 = vmatpush1.msra.mxu0 0.0
    %724 = vmatprep.subr.mxu0 0.0
    %725 = vmatpush1.msra.mxu0 0.0
    %726 = vmatprep.subr.mxu0 0.0
    %727 = vmatpush1.msra.mxu0 0.0
    %728 = vmatprep.subr.mxu0 0.0
    %729 = vmatpush1.msra.mxu0 0.0
    %730 = vmatprep.subr.mxu0 0.0
    %731 = vmatpush1.msra.mxu0 0.0
    %732 = vmatprep.subr.mxu0 0.0
    %733 = vmatpush1.msra.mxu0 0.0
    %734 = vmatprep.subr.mxu0 0.0
    %735 = vmatpush1.msra.mxu0 0.0
    %736 = vmatprep.subr.mxu0 0.0
    %737 = vmatpush1.msra.mxu0 0.0
    %738 = vmatprep.subr.mxu0 0.0
    %739 = vmatpush1.msra.mxu0 0.0
    %740 = vmatprep.subr.mxu0 0.0
    %741 = vmatpush1.msra.mxu0 0.0
    %742 = vmatprep.subr.mxu0 0.0
    %743 = vmatpush1.msra.mxu0 0.0
    %744 = vmatprep.subr.mxu0 0.0
    %745 = vmatpush1.msra.mxu0 0.0
    %746 = vmatprep.subr.mxu0 0.0
    %747 = vmatpush1.msra.mxu0 0.0
    %748 = vmatprep.subr.mxu0 0.0
    %749 = vmatpush1.msra.mxu0 0.0
    %750 = vmatprep.subr.mxu0 0.0
    %751 = vmatpush1.msra.mxu0 0.0
    %752 = vmatprep.subr.mxu0 0.0
    %753 = vmatpush1.msra.mxu0 0.0
    %754 = vmatprep.subr.mxu0 0.0
    %755 = vmatpush1.msra.mxu0 0.0
    %756 = vmatprep.subr.mxu0 0.0
    %757 = vmatpush1.msra.mxu0 0.0
    %758 = vmatprep.subr.mxu0 0.0
    %759 = vmatpush1.msra.mxu0 0.0
    %760 = vmatprep.subr.mxu0 0.0
    %761 = vmatpush1.msra.mxu0 0.0
    %762 = vmatprep.subr.mxu0 0.0
    %763 = vmatpush1.msra.mxu0 0.0
    %764 = vmatprep.subr.mxu0 0.0
    %765 = vmatpush1.msra.mxu0 0.0
    %766 = vmatprep.subr.mxu0 0.0
    %767 = vmatpush1.msra.mxu0 0.0
    %768 = vmatprep.subr.mxu0 0.0
    %769 = vmatpush1.msra.mxu0 0.0
    %770 = vmatprep.subr.mxu0 0.0
    %771 = vmatpush1.msra.mxu0 0.0
    %772 = vmatprep.subr.mxu0 0.0
    %773 = vmatpush1.msra.mxu0 0.0
    %774 = vmatprep.subr.mxu0 0.0
    %775 = vmatpush1.msra.mxu0 0.0
    %776 = vmatprep.subr.mxu0 0.0
    %777 = vmatpush1.msra.mxu0 0.0
    %778 = vmatprep.subr.mxu0 0.0
    %779 = vmatpush1.msra.mxu0 0.0
    %780 = vmatprep.subr.mxu0 0.0
    %781 = vmatpush1.msra.mxu0 0.0
    %782 = vmatprep.subr.mxu0 0.0
    %783 = vmatpush1.msra.mxu0 0.0
    %784 = vmatprep.mubr.f32.mxu0 0.0
    %785 = vmatmul.mubr.f32.gmra.mrb[0].mxu0 %v718
    %v786 = vpop.f32.mrb[0].mxu0
    %v787 = vadd.f32 0.0, %v786
    %v788 = vpop.f32.mrb[0].mxu0
    %789 = vdwg.mxu0
    %790 = vrot.lane.b32.xlu0 %v199, 56
    %v791 = vpop.permute.xlu0 %790
    %v794 = vsel %vm205, %v711, 0
    %796 = vmatprep.subr.mxu0 0.0
    %797 = vmatpush1.msra.mxu0 %v791
    %798 = vmatprep.subr.mxu0 0.0
    %799 = vmatpush1.msra.mxu0 0.0
    %800 = vmatprep.subr.mxu0 0.0
    %801 = vmatpush1.msra.mxu0 0.0
    %802 = vmatprep.subr.mxu0 0.0
    %803 = vmatpush1.msra.mxu0 0.0
    %804 = vmatprep.subr.mxu0 0.0
    %805 = vmatpush1.msra.mxu0 0.0
    %806 = vmatprep.subr.mxu0 0.0
    %807 = vmatpush1.msra.mxu0 0.0
    %808 = vmatprep.subr.mxu0 0.0
    %809 = vmatpush1.msra.mxu0 0.0
    %810 = vmatprep.subr.mxu0 0.0
    %811 = vmatpush1.msra.mxu0 0.0
    %812 = vmatprep.subr.mxu0 0.0
    %813 = vmatpush1.msra.mxu0 0.0
    %814 = vmatprep.subr.mxu0 0.0
    %815 = vmatpush1.msra.mxu0 0.0
    %816 = vmatprep.subr.mxu0 0.0
    %817 = vmatpush1.msra.mxu0 0.0
    %818 = vmatprep.subr.mxu0 0.0
    %819 = vmatpush1.msra.mxu0 0.0
    %820 = vmatprep.subr.mxu0 0.0
    %821 = vmatpush1.msra.mxu0 0.0
    %822 = vmatprep.subr.mxu0 0.0
    %823 = vmatpush1.msra.mxu0 0.0
    %824 = vmatprep.subr.mxu0 0.0
    %825 = vmatpush1.msra.mxu0 0.0
    %826 = vmatprep.subr.mxu0 0.0
    %827 = vmatpush1.msra.mxu0 0.0
    %828 = vmatprep.subr.mxu0 0.0
    %829 = vmatpush1.msra.mxu0 0.0
    %830 = vmatprep.subr.mxu0 0.0
    %831 = vmatpush1.msra.mxu0 0.0
    %832 = vmatprep.subr.mxu0 0.0
    %833 = vmatpush1.msra.mxu0 0.0
    %834 = vmatprep.subr.mxu0 0.0
    %835 = vmatpush1.msra.mxu0 0.0
    %836 = vmatprep.subr.mxu0 0.0
    %837 = vmatpush1.msra.mxu0 0.0
    %838 = vmatprep.subr.mxu0 0.0
    %839 = vmatpush1.msra.mxu0 0.0
    %840 = vmatprep.subr.mxu0 0.0
    %841 = vmatpush1.msra.mxu0 0.0
    %842 = vmatprep.subr.mxu0 0.0
    %843 = vmatpush1.msra.mxu0 0.0
    %844 = vmatprep.subr.mxu0 0.0
    %845 = vmatpush1.msra.mxu0 0.0
    %846 = vmatprep.subr.mxu0 0.0
    %847 = vmatpush1.msra.mxu0 0.0
    %848 = vmatprep.subr.mxu0 0.0
    %849 = vmatpush1.msra.mxu0 0.0
    %850 = vmatprep.subr.mxu0 0.0
    %851 = vmatpush1.msra.mxu0 0.0
    %852 = vmatprep.subr.mxu0 0.0
    %853 = vmatpush1.msra.mxu0 0.0
    %854 = vmatprep.subr.mxu0 0.0
    %855 = vmatpush1.msra.mxu0 0.0
    %856 = vmatprep.subr.mxu0 0.0
    %857 = vmatpush1.msra.mxu0 0.0
    %858 = vmatprep.subr.mxu0 0.0
    %859 = vmatpush1.msra.mxu0 0.0
    %860 = vmatprep.mubr.f32.mxu0 0.0
    %861 = vmatmul.mubr.f32.gmra.mrb[0].mxu0 %v794
    %v862 = vpop.f32.mrb[0].mxu0
    %v863 = vadd.f32 0.0, %v862
    %v864 = vpop.f32.mrb[0].mxu0
    %865 = vdwg.mxu0
    %v866 = vld [vmem:[%s5 + $0x8] sm:$0xff]
    %v868 = vsel %vm205, %v787, 0
    %v871 = vsel %vm205, %v863, 0
    %873 = vmatprep.subr.mxu0 0.0
    %874 = vmatpush1.msra.mxu0 %v866
    %875 = vmatprep.subr.mxu0 0.0
    %876 = vmatpush1.msra.mxu0 0.0
    %877 = vmatprep.subr.mxu0 0.0
    %878 = vmatpush1.msra.mxu0 0.0
    %879 = vmatprep.subr.mxu0 0.0
    %880 = vmatpush1.msra.mxu0 0.0
    %881 = vmatprep.subr.mxu0 0.0
    %882 = vmatpush1.msra.mxu0 0.0
    %883 = vmatprep.subr.mxu0 0.0
    %884 = vmatpush1.msra.mxu0 0.0
    %885 = vmatprep.subr.mxu0 0.0
    %886 = vmatpush1.msra.mxu0 0.0
    %887 = vmatprep.subr.mxu0 0.0
    %888 = vmatpush1.msra.mxu0 0.0
    %889 = vmatprep.subr.mxu0 0.0
    %890 = vmatpush1.msra.mxu0 0.0
    %891 = vmatprep.subr.mxu0 0.0
    %892 = vmatpush1.msra.mxu0 0.0
    %893 = vmatprep.subr.mxu0 0.0
    %894 = vmatpush1.msra.mxu0 0.0
    %895 = vmatprep.subr.mxu0 0.0
    %896 = vmatpush1.msra.mxu0 0.0
    %897 = vmatprep.subr.mxu0 0.0
    %898 = vmatpush1.msra.mxu0 0.0
    %899 = vmatprep.subr.mxu0 0.0
    %900 = vmatpush1.msra.mxu0 0.0
    %901 = vmatprep.subr.mxu0 0.0
    %902 = vmatpush1.msra.mxu0 0.0
    %903 = vmatprep.subr.mxu0 0.0
    %904 = vmatpush1.msra.mxu0 0.0
    %905 = vmatprep.subr.mxu0 0.0
    %906 = vmatpush1.msra.mxu0 0.0
    %907 = vmatprep.subr.mxu0 0.0
    %908 = vmatpush1.msra.mxu0 0.0
    %909 = vmatprep.subr.mxu0 0.0
    %910 = vmatpush1.msra.mxu0 0.0
    %911 = vmatprep.subr.mxu0 0.0
    %912 = vmatpush1.msra.mxu0 0.0
    %913 = vmatprep.subr.mxu0 0.0
    %914 = vmatpush1.msra.mxu0 0.0
    %915 = vmatprep.subr.mxu0 0.0
    %916 = vmatpush1.msra.mxu0 0.0
    %917 = vmatprep.subr.mxu0 0.0
    %918 = vmatpush1.msra.mxu0 0.0
    %919 = vmatprep.subr.mxu0 0.0
    %920 = vmatpush1.msra.mxu0 0.0
    %921 = vmatprep.subr.mxu0 0.0
    %922 = vmatpush1.msra.mxu0 0.0
    %923 = vmatprep.subr.mxu0 0.0
    %924 = vmatpush1.msra.mxu0 0.0
    %925 = vmatprep.subr.mxu0 0.0
    %926 = vmatpush1.msra.mxu0 0.0
    %927 = vmatprep.subr.mxu0 0.0
    %928 = vmatpush1.msra.mxu0 0.0
    %929 = vmatprep.subr.mxu0 0.0
    %930 = vmatpush1.msra.mxu0 0.0
    %931 = vmatprep.subr.mxu0 0.0
    %932 = vmatpush1.msra.mxu0 0.0
    %933 = vmatprep.subr.mxu0 0.0
    %934 = vmatpush1.msra.mxu0 0.0
    %935 = vmatprep.subr.mxu0 0.0
    %936 = vmatpush1.msra.mxu0 0.0
    %937 = vmatprep.mubr.f32.mxu0 0.0
    %938 = vmatmul.mubr.f32.gmra.mrb[0].mxu0 %v868
    %v939 = vpop.f32.mrb[0].mxu0
    %v940 = vadd.f32 0.0, %v939
    %v941 = vpop.f32.mrb[0].mxu0
    %942 = vmatprep.mubr.f32.mxu0 0.0
    %943 = vmatmul.mubr.f32.gmra.mrb[0].mxu0 %v871
    %v944 = vpop.f32.mrb[0].mxu0
    %v945 = vadd.f32 0.0, %v944
    %v946 = vpop.f32.mrb[0].mxu0
    %947 = vdwg.mxu0
    %v949 = vsel %vm205, %v454, 0
    %v952 = vsel %vm205, %v530, 0
    %954 = vmatprep.subr.mxu0 0.0
    %955 = vmatpush1.msra.mxu0 %v533
    %956 = vmatprep.subr.mxu0 0.0
    %957 = vmatpush1.msra.mxu0 0.0
    %958 = vmatprep.subr.mxu0 0.0
    %959 = vmatpush1.msra.mxu0 0.0
    %960 = vmatprep.subr.mxu0 0.0
    %961 = vmatpush1.msra.mxu0 0.0
    %962 = vmatprep.subr.mxu0 0.0
    %963 = vmatpush1.msra.mxu0 0.0
    %964 = vmatprep.subr.mxu0 0.0
    %965 = vmatpush1.msra.mxu0 0.0
    %966 = vmatprep.subr.mxu0 0.0
    %967 = vmatpush1.msra.mxu0 0.0
    %968 = vmatprep.subr.mxu0 0.0
    %969 = vmatpush1.msra.mxu0 0.0
    %970 = vmatprep.subr.mxu0 0.0
    %971 = vmatpush1.msra.mxu0 0.0
    %972 = vmatprep.subr.mxu0 0.0
    %973 = vmatpush1.msra.mxu0 0.0
    %974 = vmatprep.subr.mxu0 0.0
    %975 = vmatpush1.msra.mxu0 0.0
    %976 = vmatprep.subr.mxu0 0.0
    %977 = vmatpush1.msra.mxu0 0.0
    %978 = vmatprep.subr.mxu0 0.0
    %979 = vmatpush1.msra.mxu0 0.0
    %980 = vmatprep.subr.mxu0 0.0
    %981 = vmatpush1.msra.mxu0 0.0
    %982 = vmatprep.subr.mxu0 0.0
    %983 = vmatpush1.msra.mxu0 0.0
    %984 = vmatprep.subr.mxu0 0.0
    %985 = vmatpush1.msra.mxu0 0.0
    %986 = vmatprep.subr.mxu0 0.0
    %987 = vmatpush1.msra.mxu0 0.0
    %988 = vmatprep.subr.mxu0 0.0
    %989 = vmatpush1.msra.mxu0 0.0
    %990 = vmatprep.subr.mxu0 0.0
    %991 = vmatpush1.msra.mxu0 0.0
    %992 = vmatprep.subr.mxu0 0.0
    %993 = vmatpush1.msra.mxu0 0.0
    %994 = vmatprep.subr.mxu0 0.0
    %995 = vmatpush1.msra.mxu0 0.0
    %996 = vmatprep.subr.mxu0 0.0
    %997 = vmatpush1.msra.mxu0 0.0
    %998 = vmatprep.subr.mxu0 0.0
    %999 = vmatpush1.msra.mxu0 0.0
    %1000 = vmatprep.subr.mxu0 0.0
    %1001 = vmatpush1.msra.mxu0 0.0
    %1002 = vmatprep.subr.mxu0 0.0
    %1003 = vmatpush1.msra.mxu0 0.0
    %1004 = vmatprep.subr.mxu0 0.0
    %1005 = vmatpush1.msra.mxu0 0.0
    %1006 = vmatprep.subr.mxu0 0.0
    %1007 = vmatpush1.msra.mxu0 0.0
    %1008 = vmatprep.subr.mxu0 0.0
    %1009 = vmatpush1.msra.mxu0 0.0
    %1010 = vmatprep.subr.mxu0 0.0
    %1011 = vmatpush1.msra.mxu0 0.0
    %1012 = vmatprep.subr.mxu0 0.0
    %1013 = vmatpush1.msra.mxu0 0.0
    %1014 = vmatprep.subr.mxu0 0.0
    %1015 = vmatpush1.msra.mxu0 0.0
    %1016 = vmatprep.subr.mxu0 0.0
    %1017 = vmatpush1.msra.mxu0 0.0
    %1018 = vmatprep.mubr.f32.mxu0 0.0
    %1019 = vmatmul.mubr.f32.gmra.mrb[0].mxu0 %v949
    %v1020 = vpop.f32.mrb[0].mxu0
    %v1021 = vadd.f32 %v940, %v1020
    %v1022 = vpop.f32.mrb[0].mxu0
    %1023 = vmatprep.mubr.f32.mxu0 0.0
    %1024 = vmatmul.mubr.f32.gmra.mrb[0].mxu0 %v952
    %v1025 = vpop.f32.mrb[0].mxu0
    %v1026 = vadd.f32 %v945, %v1025
    %v1027 = vpop.f32.mrb[0].mxu0
    %1028 = vdwg.mxu0
    %1029 = vrot.lane.b32.xlu0 %v194, 112
    %v1030 = vpop.permute.xlu0 %1029
    %1031 = vrot.lane.b32.xlu0 %v194, 80
    %v1032 = vpop.permute.xlu0 %1031
    %v1033 = vsel %vm205, %v1030, 0
    %v1035 = vsel %vm205, %v1032, 0
    %1037 = vmatprep.subr.mxu0 0.0
    %1038 = vmatpush1.xpose.msra.mxu0 %v1035
    %1039 = vmatprep.subr.mxu0 0.0
    %1040 = vmatpush1.xpose.msra.mxu0 0.0
    %1041 = vmatprep.subr.mxu0 0.0
    %1042 = vmatpush1.xpose.msra.mxu0 0.0
    %1043 = vmatprep.subr.mxu0 0.0
    %1044 = vmatpush1.xpose.msra.mxu0 0.0
    %1045 = vmatprep.subr.mxu0 0.0
    %1046 = vmatpush1.xpose.msra.mxu0 0.0
    %1047 = vmatprep.subr.mxu0 0.0
    %1048 = vmatpush1.xpose.msra.mxu0 0.0
    %1049 = vmatprep.subr.mxu0 0.0
    %1050 = vmatpush1.xpose.msra.mxu0 0.0
    %1051 = vmatprep.subr.mxu0 0.0
    %1052 = vmatpush1.xpose.msra.mxu0 0.0
    %1053 = vmatprep.subr.mxu0 0.0
    %1054 = vmatpush1.xpose.msra.mxu0 0.0
    %1055 = vmatprep.subr.mxu0 0.0
    %1056 = vmatpush1.xpose.msra.mxu0 0.0
    %1057 = vmatprep.subr.mxu0 0.0
    %1058 = vmatpush1.xpose.msra.mxu0 0.0
    %1059 = vmatprep.subr.mxu0 0.0
    %1060 = vmatpush1.xpose.msra.mxu0 0.0
    %1061 = vmatprep.subr.mxu0 0.0
    %1062 = vmatpush1.xpose.msra.mxu0 0.0
    %1063 = vmatprep.subr.mxu0 0.0
    %1064 = vmatpush1.xpose.msra.mxu0 0.0
    %1065 = vmatprep.subr.mxu0 0.0
    %1066 = vmatpush1.xpose.msra.mxu0 0.0
    %1067 = vmatprep.subr.mxu0 0.0
    %1068 = vmatpush1.xpose.msra.mxu0 0.0
    %1069 = vmatprep.subr.mxu0 0.0
    %1070 = vmatpush1.xpose.msra.mxu0 0.0
    %1071 = vmatprep.subr.mxu0 0.0
    %1072 = vmatpush1.xpose.msra.mxu0 0.0
    %1073 = vmatprep.subr.mxu0 0.0
    %1074 = vmatpush1.xpose.msra.mxu0 0.0
    %1075 = vmatprep.subr.mxu0 0.0
    %1076 = vmatpush1.xpose.msra.mxu0 0.0
    %1077 = vmatprep.subr.mxu0 0.0
    %1078 = vmatpush1.xpose.msra.mxu0 0.0
    %1079 = vmatprep.subr.mxu0 0.0
    %1080 = vmatpush1.xpose.msra.mxu0 0.0
    %1081 = vmatprep.subr.mxu0 0.0
    %1082 = vmatpush1.xpose.msra.mxu0 0.0
    %1083 = vmatprep.subr.mxu0 0.0
    %1084 = vmatpush1.xpose.msra.mxu0 0.0
    %1085 = vmatprep.subr.mxu0 0.0
    %1086 = vmatpush1.xpose.msra.mxu0 0.0
    %1087 = vmatprep.subr.mxu0 0.0
    %1088 = vmatpush1.xpose.msra.mxu0 0.0
    %1089 = vmatprep.subr.mxu0 0.0
    %1090 = vmatpush1.xpose.msra.mxu0 0.0
    %1091 = vmatprep.subr.mxu0 0.0
    %1092 = vmatpush1.xpose.msra.mxu0 0.0
    %1093 = vmatprep.subr.mxu0 0.0
    %1094 = vmatpush1.xpose.msra.mxu0 0.0
    %1095 = vmatprep.subr.mxu0 0.0
    %1096 = vmatpush1.xpose.msra.mxu0 0.0
    %1097 = vmatprep.subr.mxu0 0.0
    %1098 = vmatpush1.xpose.msra.mxu0 0.0
    %1099 = vmatprep.subr.mxu0 0.0
    %1100 = vmatpush1.xpose.msra.mxu0 0.0
    %1101 = vmatprep.mubr.f32.mxu0 0.0
    %1102 = vmatmul.mubr.f32.gmra.mrb[0].mxu0 %v1033
    %v1103 = vpop.f32.mrb[0].mxu0
    %v1104 = vadd.f32 0.0, %v1103
    %v1105 = vpop.f32.mrb[0].mxu0
    %1106 = vdwg.mxu0
    %1107 = vrot.lane.b32.xlu0 %v199, 112
    %v1108 = vpop.permute.xlu0 %1107
    %1109 = vrot.lane.b32.xlu0 %v199, 80
    %v1110 = vpop.permute.xlu0 %1109
    %v1111 = vsel %vm205, %v1108, 0
    %v1113 = vsel %vm205, %v1110, 0
    %1115 = vmatprep.subr.mxu0 0.0
    %1116 = vmatpush1.xpose.msra.mxu0 %v1113
    %1117 = vmatprep.subr.mxu0 0.0
    %1118 = vmatpush1.xpose.msra.mxu0 0.0
    %1119 = vmatprep.subr.mxu0 0.0
    %1120 = vmatpush1.xpose.msra.mxu0 0.0
    %1121 = vmatprep.subr.mxu0 0.0
    %1122 = vmatpush1.xpose.msra.mxu0 0.0
    %1123 = vmatprep.subr.mxu0 0.0
    %1124 = vmatpush1.xpose.msra.mxu0 0.0
    %1125 = vmatprep.subr.mxu0 0.0
    %1126 = vmatpush1.xpose.msra.mxu0 0.0
    %1127 = vmatprep.subr.mxu0 0.0
    %1128 = vmatpush1.xpose.msra.mxu0 0.0
    %1129 = vmatprep.subr.mxu0 0.0
    %1130 = vmatpush1.xpose.msra.mxu0 0.0
    %1131 = vmatprep.subr.mxu0 0.0
    %1132 = vmatpush1.xpose.msra.mxu0 0.0
    %1133 = vmatprep.subr.mxu0 0.0
    %1134 = vmatpush1.xpose.msra.mxu0 0.0
    %1135 = vmatprep.subr.mxu0 0.0
    %1136 = vmatpush1.xpose.msra.mxu0 0.0
    %1137 = vmatprep.subr.mxu0 0.0
    %1138 = vmatpush1.xpose.msra.mxu0 0.0
    %1139 = vmatprep.subr.mxu0 0.0
    %1140 = vmatpush1.xpose.msra.mxu0 0.0
    %1141 = vmatprep.subr.mxu0 0.0
    %1142 = vmatpush1.xpose.msra.mxu0 0.0
    %1143 = vmatprep.subr.mxu0 0.0
    %1144 = vmatpush1.xpose.msra.mxu0 0.0
    %1145 = vmatprep.subr.mxu0 0.0
    %1146 = vmatpush1.xpose.msra.mxu0 0.0
    %1147 = vmatprep.subr.mxu0 0.0
    %1148 = vmatpush1.xpose.msra.mxu0 0.0
    %1149 = vmatprep.subr.mxu0 0.0
    %1150 = vmatpush1.xpose.msra.mxu0 0.0
    %1151 = vmatprep.subr.mxu0 0.0
    %1152 = vmatpush1.xpose.msra.mxu0 0.0
    %1153 = vmatprep.subr.mxu0 0.0
    %1154 = vmatpush1.xpose.msra.mxu0 0.0
    %1155 = vmatprep.subr.mxu0 0.0
    %1156 = vmatpush1.xpose.msra.mxu0 0.0
    %1157 = vmatprep.subr.mxu0 0.0
    %1158 = vmatpush1.xpose.msra.mxu0 0.0
    %1159 = vmatprep.subr.mxu0 0.0
    %1160 = vmatpush1.xpose.msra.mxu0 0.0
    %1161 = vmatprep.subr.mxu0 0.0
    %1162 = vmatpush1.xpose.msra.mxu0 0.0
    %1163 = vmatprep.subr.mxu0 0.0
    %1164 = vmatpush1.xpose.msra.mxu0 0.0
    %1165 = vmatprep.subr.mxu0 0.0
    %1166 = vmatpush1.xpose.msra.mxu0 0.0
    %1167 = vmatprep.subr.mxu0 0.0
    %1168 = vmatpush1.xpose.msra.mxu0 0.0
    %1169 = vmatprep.subr.mxu0 0.0
    %1170 = vmatpush1.xpose.msra.mxu0 0.0
    %1171 = vmatprep.subr.mxu0 0.0
    %1172 = vmatpush1.xpose.msra.mxu0 0.0
    %1173 = vmatprep.subr.mxu0 0.0
    %1174 = vmatpush1.xpose.msra.mxu0 0.0
    %1175 = vmatprep.subr.mxu0 0.0
    %1176 = vmatpush1.xpose.msra.mxu0 0.0
    %1177 = vmatprep.subr.mxu0 0.0
    %1178 = vmatpush1.xpose.msra.mxu0 0.0
    %1179 = vmatprep.mubr.f32.mxu0 0.0
    %1180 = vmatmul.mubr.f32.gmra.mrb[0].mxu0 %v1111
    %v1181 = vpop.f32.mrb[0].mxu0
    %v1182 = vadd.f32 0.0, %v1181
    %v1183 = vpop.f32.mrb[0].mxu0
    %1184 = vdwg.mxu0
    %v1185 = vsel %vm205, %v1104, -inf
    %1186 = vmax.xlane.f32.xlu0 %v1185
    %v1187 = vpop.xlane.xlu0 %1186
    %v1188 = vsel %vm205, %v1182, -inf
    %1189 = vmax.xlane.f32.xlu0 %v1188
    %v1190 = vpop.xlane.xlu0 %1189
    %v1191 = vsub.f32 %v1104, %v1187
    %v1192 = vsub.f32 %v1182, %v1190
    %v1193 = vmul.f32 %v1191, 1.442695
    %v1194 = vpow.pop %v1193
    %v1195 = vmul.f32 %v1192, 1.442695
    %v1196 = vpow.pop %v1195
    %v1197 = vsel %vm205, %v1194, 0.0
    %1198 = vadd.xlane.f32.xlu0 %v1197
    %v1199 = vpop.xlane.xlu0 %1198
    %v1200 = vsel %vm205, %v1196, 0.0
    %1201 = vadd.xlane.f32.xlu0 %v1200
    %v1202 = vpop.xlane.xlu0 %1201
    %v1203 = vrcp.pop %v1199
    %v1204 = vrcp.pop %v1202
    %v1205 = vmul.f32 %v1194, %v1203
    %v1206 = vmul.f32 %v1196, %v1204
    %v1207 = vadd.f32 %v712, %v1205
    %v1208 = vadd.f32 %v713, %v1206
    %1209 = vrot.lane.b32.xlu0 %v194, 48
    %v1210 = vpop.permute.xlu0 %1209
    %v1213 = vsel %vm205, %v1205, 0
    %1215 = vmatprep.subr.mxu0 0.0
    %1216 = vmatpush1.msra.mxu0 %v1210
    %1217 = vmatprep.subr.mxu0 0.0
    %1218 = vmatpush1.msra.mxu0 0.0
    %1219 = vmatprep.subr.mxu0 0.0
    %1220 = vmatpush1.msra.mxu0 0.0
    %1221 = vmatprep.subr.mxu0 0.0
    %1222 = vmatpush1.msra.mxu0 0.0
    %1223 = vmatprep.subr.mxu0 0.0
    %1224 = vmatpush1.msra.mxu0 0.0
    %1225 = vmatprep.subr.mxu0 0.0
    %1226 = vmatpush1.msra.mxu0 0.0
    %1227 = vmatprep.subr.mxu0 0.0
    %1228 = vmatpush1.msra.mxu0 0.0
    %1229 = vmatprep.subr.mxu0 0.0
    %1230 = vmatpush1.msra.mxu0 0.0
    %1231 = vmatprep.subr.mxu0 0.0
    %1232 = vmatpush1.msra.mxu0 0.0
    %1233 = vmatprep.subr.mxu0 0.0
    %1234 = vmatpush1.msra.mxu0 0.0
    %1235 = vmatprep.subr.mxu0 0.0
    %1236 = vmatpush1.msra.mxu0 0.0
    %1237 = vmatprep.subr.mxu0 0.0
    %1238 = vmatpush1.msra.mxu0 0.0
    %1239 = vmatprep.subr.mxu0 0.0
    %1240 = vmatpush1.msra.mxu0 0.0
    %1241 = vmatprep.subr.mxu0 0.0
    %1242 = vmatpush1.msra.mxu0 0.0
    %1243 = vmatprep.subr.mxu0 0.0
    %1244 = vmatpush1.msra.mxu0 0.0
    %1245 = vmatprep.subr.mxu0 0.0
    %1246 = vmatpush1.msra.mxu0 0.0
    %1247 = vmatprep.subr.mxu0 0.0
    %1248 = vmatpush1.msra.mxu0 0.0
    %1249 = vmatprep.subr.mxu0 0.0
    %1250 = vmatpush1.msra.mxu0 0.0
    %1251 = vmatprep.subr.mxu0 0.0
    %1252 = vmatpush1.msra.mxu0 0.0
    %1253 = vmatprep.subr.mxu0 0.0
    %1254 = vmatpush1.msra.mxu0 0.0
    %1255 = vmatprep.subr.mxu0 0.0
    %1256 = vmatpush1.msra.mxu0 0.0
    %1257 = vmatprep.subr.mxu0 0.0
    %1258 = vmatpush1.msra.mxu0 0.0
    %1259 = vmatprep.subr.mxu0 0.0
    %1260 = vmatpush1.msra.mxu0 0.0
    %1261 = vmatprep.subr.mxu0 0.0
    %1262 = vmatpush1.msra.mxu0 0.0
    %1263 = vmatprep.subr.mxu0 0.0
    %1264 = vmatpush1.msra.mxu0 0.0
    %1265 = vmatprep.subr.mxu0 0.0
    %1266 = vmatpush1.msra.mxu0 0.0
    %1267 = vmatprep.subr.mxu0 0.0
    %1268 = vmatpush1.msra.mxu0 0.0
    %1269 = vmatprep.subr.mxu0 0.0
    %1270 = vmatpush1.msra.mxu0 0.0
    %1271 = vmatprep.subr.mxu0 0.0
    %1272 = vmatpush1.msra.mxu0 0.0
    %1273 = vmatprep.subr.mxu0 0.0
    %1274 = vmatpush1.msra.mxu0 0.0
    %1275 = vmatprep.subr.mxu0 0.0
    %1276 = vmatpush1.msra.mxu0 0.0
    %1277 = vmatprep.subr.mxu0 0.0
    %1278 = vmatpush1.msra.mxu0 0.0
    %1279 = vmatprep.mubr.f32.mxu0 0.0
    %1280 = vmatmul.mubr.f32.gmra.mrb[0].mxu0 %v1213
    %v1281 = vpop.f32.mrb[0].mxu0
    %v1282 = vadd.f32 0.0, %v1281
    %v1283 = vpop.f32.mrb[0].mxu0
    %1284 = vdwg.mxu0
    %1285 = vrot.lane.b32.xlu0 %v199, 48
    %v1286 = vpop.permute.xlu0 %1285
    %v1289 = vsel %vm205, %v1206, 0
    %1291 = vmatprep.subr.mxu0 0.0
    %1292 = vmatpush1.msra.mxu0 %v1286
    %1293 = vmatprep.subr.mxu0 0.0
    %1294 = vmatpush1.msra.mxu0 0.0
    %1295 = vmatprep.subr.mxu0 0.0
    %1296 = vmatpush1.msra.mxu0 0.0
    %1297 = vmatprep.subr.mxu0 0.0
    %1298 = vmatpush1.msra.mxu0 0.0
    %1299 = vmatprep.subr.mxu0 0.0
    %1300 = vmatpush1.msra.mxu0 0.0
    %1301 = vmatprep.subr.mxu0 0.0
    %1302 = vmatpush1.msra.mxu0 0.0
    %1303 = vmatprep.subr.mxu0 0.0
    %1304 = vmatpush1.msra.mxu0 0.0
    %1305 = vmatprep.subr.mxu0 0.0
    %1306 = vmatpush1.msra.mxu0 0.0
    %1307 = vmatprep.subr.mxu0 0.0
    %1308 = vmatpush1.msra.mxu0 0.0
    %1309 = vmatprep.subr.mxu0 0.0
    %1310 = vmatpush1.msra.mxu0 0.0
    %1311 = vmatprep.subr.mxu0 0.0
    %1312 = vmatpush1.msra.mxu0 0.0
    %1313 = vmatprep.subr.mxu0 0.0
    %1314 = vmatpush1.msra.mxu0 0.0
    %1315 = vmatprep.subr.mxu0 0.0
    %1316 = vmatpush1.msra.mxu0 0.0
    %1317 = vmatprep.subr.mxu0 0.0
    %1318 = vmatpush1.msra.mxu0 0.0
    %1319 = vmatprep.subr.mxu0 0.0
    %1320 = vmatpush1.msra.mxu0 0.0
    %1321 = vmatprep.subr.mxu0 0.0
    %1322 = vmatpush1.msra.mxu0 0.0
    %1323 = vmatprep.subr.mxu0 0.0
    %1324 = vmatpush1.msra.mxu0 0.0
    %1325 = vmatprep.subr.mxu0 0.0
    %1326 = vmatpush1.msra.mxu0 0.0
    %1327 = vmatprep.subr.mxu0 0.0
    %1328 = vmatpush1.msra.mxu0 0.0
    %1329 = vmatprep.subr.mxu0 0.0
    %1330 = vmatpush1.msra.mxu0 0.0
    %1331 = vmatprep.subr.mxu0 0.0
    %1332 = vmatpush1.msra.mxu0 0.0
    %1333 = vmatprep.subr.mxu0 0.0
    %1334 = vmatpush1.msra.mxu0 0.0
    %1335 = vmatprep.subr.mxu0 0.0
    %1336 = vmatpush1.msra.mxu0 0.0
    %1337 = vmatprep.subr.mxu0 0.0
    %1338 = vmatpush1.msra.mxu0 0.0
    %1339 = vmatprep.subr.mxu0 0.0
    %1340 = vmatpush1.msra.mxu0 0.0
    %1341 = vmatprep.subr.mxu0 0.0
    %1342 = vmatpush1.msra.mxu0 0.0
    %1343 = vmatprep.subr.mxu0 0.0
    %1344 = vmatpush1.msra.mxu0 0.0
    %1345 = vmatprep.subr.mxu0 0.0
    %1346 = vmatpush1.msra.mxu0 0.0
    %1347 = vmatprep.subr.mxu0 0.0
    %1348 = vmatpush1.msra.mxu0 0.0
    %1349 = vmatprep.subr.mxu0 0.0
    %1350 = vmatpush1.msra.mxu0 0.0
    %1351 = vmatprep.subr.mxu0 0.0
    %1352 = vmatpush1.msra.mxu0 0.0
    %1353 = vmatprep.subr.mxu0 0.0
    %1354 = vmatpush1.msra.mxu0 0.0
    %1355 = vmatprep.mubr.f32.mxu0 0.0
    %1356 = vmatmul.mubr.f32.gmra.mrb[0].mxu0 %v1289
    %v1357 = vpop.f32.mrb[0].mxu0
    %v1358 = vadd.f32 0.0, %v1357
    %v1359 = vpop.f32.mrb[0].mxu0
    %1360 = vdwg.mxu0
    %v1361 = vld [vmem:[%s5 + $0x10] sm:$0xff]
    %v1363 = vsel %vm205, %v1282, 0
    %v1366 = vsel %vm205, %v1358, 0
    %1368 = vmatprep.subr.mxu0 0.0
    %1369 = vmatpush1.msra.mxu0 %v1361
    %1370 = vmatprep.subr.mxu0 0.0
    %1371 = vmatpush1.msra.mxu0 0.0
    %1372 = vmatprep.subr.mxu0 0.0
    %1373 = vmatpush1.msra.mxu0 0.0
    %1374 = vmatprep.subr.mxu0 0.0
    %1375 = vmatpush1.msra.mxu0 0.0
    %1376 = vmatprep.subr.mxu0 0.0
    %1377 = vmatpush1.msra.mxu0 0.0
    %1378 = vmatprep.subr.mxu0 0.0
    %1379 = vmatpush1.msra.mxu0 0.0
    %1380 = vmatprep.subr.mxu0 0.0
    %1381 = vmatpush1.msra.mxu0 0.0
    %1382 = vmatprep.subr.mxu0 0.0
    %1383 = vmatpush1.msra.mxu0 0.0
    %1384 = vmatprep.subr.mxu0 0.0
    %1385 = vmatpush1.msra.mxu0 0.0
    %1386 = vmatprep.subr.mxu0 0.0
    %1387 = vmatpush1.msra.mxu0 0.0
    %1388 = vmatprep.subr.mxu0 0.0
    %1389 = vmatpush1.msra.mxu0 0.0
    %1390 = vmatprep.subr.mxu0 0.0
    %1391 = vmatpush1.msra.mxu0 0.0
    %1392 = vmatprep.subr.mxu0 0.0
    %1393 = vmatpush1.msra.mxu0 0.0
    %1394 = vmatprep.subr.mxu0 0.0
    %1395 = vmatpush1.msra.mxu0 0.0
    %1396 = vmatprep.subr.mxu0 0.0
    %1397 = vmatpush1.msra.mxu0 0.0
    %1398 = vmatprep.subr.mxu0 0.0
    %1399 = vmatpush1.msra.mxu0 0.0
    %1400 = vmatprep.subr.mxu0 0.0
    %1401 = vmatpush1.msra.mxu0 0.0
    %1402 = vmatprep.subr.mxu0 0.0
    %1403 = vmatpush1.msra.mxu0 0.0
    %1404 = vmatprep.subr.mxu0 0.0
    %1405 = vmatpush1.msra.mxu0 0.0
    %1406 = vmatprep.subr.mxu0 0.0
    %1407 = vmatpush1.msra.mxu0 0.0
    %1408 = vmatprep.subr.mxu0 0.0
    %1409 = vmatpush1.msra.mxu0 0.0
    %1410 = vmatprep.subr.mxu0 0.0
    %1411 = vmatpush1.msra.mxu0 0.0
    %1412 = vmatprep.subr.mxu0 0.0
    %1413 = vmatpush1.msra.mxu0 0.0
    %1414 = vmatprep.subr.mxu0 0.0
    %1415 = vmatpush1.msra.mxu0 0.0
    %1416 = vmatprep.subr.mxu0 0.0
    %1417 = vmatpush1.msra.mxu0 0.0
    %1418 = vmatprep.subr.mxu0 0.0
    %1419 = vmatpush1.msra.mxu0 0.0
    %1420 = vmatprep.subr.mxu0 0.0
    %1421 = vmatpush1.msra.mxu0 0.0
    %1422 = vmatprep.subr.mxu0 0.0
    %1423 = vmatpush1.msra.mxu0 0.0
    %1424 = vmatprep.subr.mxu0 0.0
    %1425 = vmatpush1.msra.mxu0 0.0
    %1426 = vmatprep.subr.mxu0 0.0
    %1427 = vmatpush1.msra.mxu0 0.0
    %1428 = vmatprep.subr.mxu0 0.0
    %1429 = vmatpush1.msra.mxu0 0.0
    %1430 = vmatprep.subr.mxu0 0.0
    %1431 = vmatpush1.msra.mxu0 0.0
    %1432 = vmatprep.mubr.f32.mxu0 0.0
    %1433 = vmatmul.mubr.f32.gmra.mrb[0].mxu0 %v1363
    %v1434 = vpop.f32.mrb[0].mxu0
    %v1435 = vadd.f32 0.0, %v1434
    %v1436 = vpop.f32.mrb[0].mxu0
    %1437 = vmatprep.mubr.f32.mxu0 0.0
    %1438 = vmatmul.mubr.f32.gmra.mrb[0].mxu0 %v1366
    %v1439 = vpop.f32.mrb[0].mxu0
    %v1440 = vadd.f32 0.0, %v1439
    %v1441 = vpop.f32.mrb[0].mxu0
    %1442 = vdwg.mxu0
    %v1443 = vadd.f32 %v1021, %v1435
    %v1444 = vadd.f32 %v1026, %v1440
    %1445 = vrot.lane.b32.xlu0 %v194, 104
    %v1446 = vpop.permute.xlu0 %1445
    %1447 = vrot.lane.b32.xlu0 %v194, 72
    %v1448 = vpop.permute.xlu0 %1447
    %v1449 = vsel %vm205, %v1446, 0
    %v1451 = vsel %vm205, %v1448, 0
    %1453 = vmatprep.subr.mxu0 0.0
    %1454 = vmatpush1.xpose.msra.mxu0 %v1451
    %1455 = vmatprep.subr.mxu0 0.0
    %1456 = vmatpush1.xpose.msra.mxu0 0.0
    %1457 = vmatprep.subr.mxu0 0.0
    %1458 = vmatpush1.xpose.msra.mxu0 0.0
    %1459 = vmatprep.subr.mxu0 0.0
    %1460 = vmatpush1.xpose.msra.mxu0 0.0
    %1461 = vmatprep.subr.mxu0 0.0
    %1462 = vmatpush1.xpose.msra.mxu0 0.0
    %1463 = vmatprep.subr.mxu0 0.0
    %1464 = vmatpush1.xpose.msra.mxu0 0.0
    %1465 = vmatprep.subr.mxu0 0.0
    %1466 = vmatpush1.xpose.msra.mxu0 0.0
    %1467 = vmatprep.subr.mxu0 0.0
    %1468 = vmatpush1.xpose.msra.mxu0 0.0
    %1469 = vmatprep.subr.mxu0 0.0
    %1470 = vmatpush1.xpose.msra.mxu0 0.0
    %1471 = vmatprep.subr.mxu0 0.0
    %1472 = vmatpush1.xpose.msra.mxu0 0.0
    %1473 = vmatprep.subr.mxu0 0.0
    %1474 = vmatpush1.xpose.msra.mxu0 0.0
    %1475 = vmatprep.subr.mxu0 0.0
    %1476 = vmatpush1.xpose.msra.mxu0 0.0
    %1477 = vmatprep.subr.mxu0 0.0
    %1478 = vmatpush1.xpose.msra.mxu0 0.0
    %1479 = vmatprep.subr.mxu0 0.0
    %1480 = vmatpush1.xpose.msra.mxu0 0.0
    %1481 = vmatprep.subr.mxu0 0.0
    %1482 = vmatpush1.xpose.msra.mxu0 0.0
    %1483 = vmatprep.subr.mxu0 0.0
    %1484 = vmatpush1.xpose.msra.mxu0 0.0
    %1485 = vmatprep.subr.mxu0 0.0
    %1486 = vmatpush1.xpose.msra.mxu0 0.0
    %1487 = vmatprep.subr.mxu0 0.0
    %1488 = vmatpush1.xpose.msra.mxu0 0.0
    %1489 = vmatprep.subr.mxu0 0.0
    %1490 = vmatpush1.xpose.msra.mxu0 0.0
    %1491 = vmatprep.subr.mxu0 0.0
    %1492 = vmatpush1.xpose.msra.mxu0 0.0
    %1493 = vmatprep.subr.mxu0 0.0
    %1494 = vmatpush1.xpose.msra.mxu0 0.0
    %1495 = vmatprep.subr.mxu0 0.0
    %1496 = vmatpush1.xpose.msra.mxu0 0.0
    %1497 = vmatprep.subr.mxu0 0.0
    %1498 = vmatpush1.xpose.msra.mxu0 0.0
    %1499 = vmatprep.subr.mxu0 0.0
    %1500 = vmatpush1.xpose.msra.mxu0 0.0
    %1501 = vmatprep.subr.mxu0 0.0
    %1502 = vmatpush1.xpose.msra.mxu0 0.0
    %1503 = vmatprep.subr.mxu0 0.0
    %1504 = vmatpush1.xpose.msra.mxu0 0.0
    %1505 = vmatprep.subr.mxu0 0.0
    %1506 = vmatpush1.xpose.msra.mxu0 0.0
    %1507 = vmatprep.subr.mxu0 0.0
    %1508 = vmatpush1.xpose.msra.mxu0 0.0
    %1509 = vmatprep.subr.mxu0 0.0
    %1510 = vmatpush1.xpose.msra.mxu0 0.0
    %1511 = vmatprep.subr.mxu0 0.0
    %1512 = vmatpush1.xpose.msra.mxu0 0.0
    %1513 = vmatprep.subr.mxu0 0.0
    %1514 = vmatpush1.xpose.msra.mxu0 0.0
    %1515 = vmatprep.subr.mxu0 0.0
    %1516 = vmatpush1.xpose.msra.mxu0 0.0
    %1517 = vmatprep.mubr.f32.mxu0 0.0
    %1518 = vmatmul.mubr.f32.gmra.mrb[0].mxu0 %v1449
    %v1519 = vpop.f32.mrb[0].mxu0
    %v1520 = vadd.f32 0.0, %v1519
    %v1521 = vpop.f32.mrb[0].mxu0
    %1522 = vdwg.mxu0
    %1523 = vrot.lane.b32.xlu0 %v199, 104
    %v1524 = vpop.permute.xlu0 %1523
    %1525 = vrot.lane.b32.xlu0 %v199, 72
    %v1526 = vpop.permute.xlu0 %1525
    %v1527 = vsel %vm205, %v1524, 0
    %v1529 = vsel %vm205, %v1526, 0
    %1531 = vmatprep.subr.mxu0 0.0
    %1532 = vmatpush1.xpose.msra.mxu0 %v1529
    %1533 = vmatprep.subr.mxu0 0.0
    %1534 = vmatpush1.xpose.msra.mxu0 0.0
    %1535 = vmatprep.subr.mxu0 0.0
    %1536 = vmatpush1.xpose.msra.mxu0 0.0
    %1537 = vmatprep.subr.mxu0 0.0
    %1538 = vmatpush1.xpose.msra.mxu0 0.0
    %1539 = vmatprep.subr.mxu0 0.0
    %1540 = vmatpush1.xpose.msra.mxu0 0.0
    %1541 = vmatprep.subr.mxu0 0.0
    %1542 = vmatpush1.xpose.msra.mxu0 0.0
    %1543 = vmatprep.subr.mxu0 0.0
    %1544 = vmatpush1.xpose.msra.mxu0 0.0
    %1545 = vmatprep.subr.mxu0 0.0
    %1546 = vmatpush1.xpose.msra.mxu0 0.0
    %1547 = vmatprep.subr.mxu0 0.0
    %1548 = vmatpush1.xpose.msra.mxu0 0.0
    %1549 = vmatprep.subr.mxu0 0.0
    %1550 = vmatpush1.xpose.msra.mxu0 0.0
    %1551 = vmatprep.subr.mxu0 0.0
    %1552 = vmatpush1.xpose.msra.mxu0 0.0
    %1553 = vmatprep.subr.mxu0 0.0
    %1554 = vmatpush1.xpose.msra.mxu0 0.0
    %1555 = vmatprep.subr.mxu0 0.0
    %1556 = vmatpush1.xpose.msra.mxu0 0.0
    %1557 = vmatprep.subr.mxu0 0.0
    %1558 = vmatpush1.xpose.msra.mxu0 0.0
    %1559 = vmatprep.subr.mxu0 0.0
    %1560 = vmatpush1.xpose.msra.mxu0 0.0
    %1561 = vmatprep.subr.mxu0 0.0
    %1562 = vmatpush1.xpose.msra.mxu0 0.0
    %1563 = vmatprep.subr.mxu0 0.0
    %1564 = vmatpush1.xpose.msra.mxu0 0.0
    %1565 = vmatprep.subr.mxu0 0.0
    %1566 = vmatpush1.xpose.msra.mxu0 0.0
    %1567 = vmatprep.subr.mxu0 0.0
    %1568 = vmatpush1.xpose.msra.mxu0 0.0
    %1569 = vmatprep.subr.mxu0 0.0
    %1570 = vmatpush1.xpose.msra.mxu0 0.0
    %1571 = vmatprep.subr.mxu0 0.0
    %1572 = vmatpush1.xpose.msra.mxu0 0.0
    %1573 = vmatprep.subr.mxu0 0.0
    %1574 = vmatpush1.xpose.msra.mxu0 0.0
    %1575 = vmatprep.subr.mxu0 0.0
    %1576 = vmatpush1.xpose.msra.mxu0 0.0
    %1577 = vmatprep.subr.mxu0 0.0
    %1578 = vmatpush1.xpose.msra.mxu0 0.0
    %1579 = vmatprep.subr.mxu0 0.0
    %1580 = vmatpush1.xpose.msra.mxu0 0.0
    %1581 = vmatprep.subr.mxu0 0.0
    %1582 = vmatpush1.xpose.msra.mxu0 0.0
    %1583 = vmatprep.subr.mxu0 0.0
    %1584 = vmatpush1.xpose.msra.mxu0 0.0
    %1585 = vmatprep.subr.mxu0 0.0
    %1586 = vmatpush1.xpose.msra.mxu0 0.0
    %1587 = vmatprep.subr.mxu0 0.0
    %1588 = vmatpush1.xpose.msra.mxu0 0.0
    %1589 = vmatprep.subr.mxu0 0.0
    %1590 = vmatpush1.xpose.msra.mxu0 0.0
    %1591 = vmatprep.subr.mxu0 0.0
    %1592 = vmatpush1.xpose.msra.mxu0 0.0
    %1593 = vmatprep.subr.mxu0 0.0
    %1594 = vmatpush1.xpose.msra.mxu0 0.0
    %1595 = vmatprep.mubr.f32.mxu0 0.0
    %1596 = vmatmul.mubr.f32.gmra.mrb[0].mxu0 %v1527
    %v1597 = vpop.f32.mrb[0].mxu0
    %v1598 = vadd.f32 0.0, %v1597
    %v1599 = vpop.f32.mrb[0].mxu0
    %1600 = vdwg.mxu0
    %v1601 = vsel %vm205, %v1520, -inf
    %1602 = vmax.xlane.f32.xlu0 %v1601
    %v1603 = vpop.xlane.xlu0 %1602
    %v1604 = vsel %vm205, %v1598, -inf
    %1605 = vmax.xlane.f32.xlu0 %v1604
    %v1606 = vpop.xlane.xlu0 %1605
    %v1607 = vsub.f32 %v1520, %v1603
    %v1608 = vsub.f32 %v1598, %v1606
    %v1609 = vmul.f32 %v1607, 1.442695
    %v1610 = vpow.pop %v1609
    %v1611 = vmul.f32 %v1608, 1.442695
    %v1612 = vpow.pop %v1611
    %v1613 = vsel %vm205, %v1610, 0.0
    %1614 = vadd.xlane.f32.xlu0 %v1613
    %v1615 = vpop.xlane.xlu0 %1614
    %v1616 = vsel %vm205, %v1612, 0.0
    %1617 = vadd.xlane.f32.xlu0 %v1616
    %v1618 = vpop.xlane.xlu0 %1617
    %v1619 = vrcp.pop %v1615
    %v1620 = vrcp.pop %v1618
    %v1621 = vmul.f32 %v1610, %v1619
    %v1622 = vmul.f32 %v1612, %v1620
    %v1623 = vadd.f32 %v1207, %v1621
    %v1624 = vadd.f32 %v1208, %v1622
    %1625 = vrot.lane.b32.xlu0 %v194, 40
    %v1626 = vpop.permute.xlu0 %1625
    %v1629 = vsel %vm205, %v1621, 0
    %1631 = vmatprep.subr.mxu0 0.0
    %1632 = vmatpush1.msra.mxu0 %v1626
    %1633 = vmatprep.subr.mxu0 0.0
    %1634 = vmatpush1.msra.mxu0 0.0
    %1635 = vmatprep.subr.mxu0 0.0
    %1636 = vmatpush1.msra.mxu0 0.0
    %1637 = vmatprep.subr.mxu0 0.0
    %1638 = vmatpush1.msra.mxu0 0.0
    %1639 = vmatprep.subr.mxu0 0.0
    %1640 = vmatpush1.msra.mxu0 0.0
    %1641 = vmatprep.subr.mxu0 0.0
    %1642 = vmatpush1.msra.mxu0 0.0
    %1643 = vmatprep.subr.mxu0 0.0
    %1644 = vmatpush1.msra.mxu0 0.0
    %1645 = vmatprep.subr.mxu0 0.0
    %1646 = vmatpush1.msra.mxu0 0.0
    %1647 = vmatprep.subr.mxu0 0.0
    %1648 = vmatpush1.msra.mxu0 0.0
    %1649 = vmatprep.subr.mxu0 0.0
    %1650 = vmatpush1.msra.mxu0 0.0
    %1651 = vmatprep.subr.mxu0 0.0
    %1652 = vmatpush1.msra.mxu0 0.0
    %1653 = vmatprep.subr.mxu0 0.0
    %1654 = vmatpush1.msra.mxu0 0.0
    %1655 = vmatprep.subr.mxu0 0.0
    %1656 = vmatpush1.msra.mxu0 0.0
    %1657 = vmatprep.subr.mxu0 0.0
    %1658 = vmatpush1.msra.mxu0 0.0
    %1659 = vmatprep.subr.mxu0 0.0
    %1660 = vmatpush1.msra.mxu0 0.0
    %1661 = vmatprep.subr.mxu0 0.0
    %1662 = vmatpush1.msra.mxu0 0.0
    %1663 = vmatprep.subr.mxu0 0.0
    %1664 = vmatpush1.msra.mxu0 0.0
    %1665 = vmatprep.subr.mxu0 0.0
    %1666 = vmatpush1.msra.mxu0 0.0
    %1667 = vmatprep.subr.mxu0 0.0
    %1668 = vmatpush1.msra.mxu0 0.0
    %1669 = vmatprep.subr.mxu0 0.0
    %1670 = vmatpush1.msra.mxu0 0.0
    %1671 = vmatprep.subr.mxu0 0.0
    %1672 = vmatpush1.msra.mxu0 0.0
    %1673 = vmatprep.subr.mxu0 0.0
    %1674 = vmatpush1.msra.mxu0 0.0
    %1675 = vmatprep.subr.mxu0 0.0
    %1676 = vmatpush1.msra.mxu0 0.0
    %1677 = vmatprep.subr.mxu0 0.0
    %1678 = vmatpush1.msra.mxu0 0.0
    %1679 = vmatprep.subr.mxu0 0.0
    %1680 = vmatpush1.msra.mxu0 0.0
    %1681 = vmatprep.subr.mxu0 0.0
    %1682 = vmatpush1.msra.mxu0 0.0
    %1683 = vmatprep.subr.mxu0 0.0
    %1684 = vmatpush1.msra.mxu0 0.0
    %1685 = vmatprep.subr.mxu0 0.0
    %1686 = vmatpush1.msra.mxu0 0.0
    %1687 = vmatprep.subr.mxu0 0.0
    %1688 = vmatpush1.msra.mxu0 0.0
    %1689 = vmatprep.subr.mxu0 0.0
    %1690 = vmatpush1.msra.mxu0 0.0
    %1691 = vmatprep.subr.mxu0 0.0
    %1692 = vmatpush1.msra.mxu0 0.0
    %1693 = vmatprep.subr.mxu0 0.0
    %1694 = vmatpush1.msra.mxu0 0.0
    %1695 = vmatprep.mubr.f32.mxu0 0.0
    %1696 = vmatmul.mubr.f32.gmra.mrb[0].mxu0 %v1629
    %v1697 = vpop.f32.mrb[0].mxu0
    %v1698 = vadd.f32 0.0, %v1697
    %v1699 = vpop.f32.mrb[0].mxu0
    %1700 = vdwg.mxu0
    %1701 = vrot.lane.b32.xlu0 %v199, 40
    %v1702 = vpop.permute.xlu0 %1701
    %v1705 = vsel %vm205, %v1622, 0
    %1707 = vmatprep.subr.mxu0 0.0
    %1708 = vmatpush1.msra.mxu0 %v1702
    %1709 = vmatprep.subr.mxu0 0.0
    %1710 = vmatpush1.msra.mxu0 0.0
    %1711 = vmatprep.subr.mxu0 0.0
    %1712 = vmatpush1.msra.mxu0 0.0
    %1713 = vmatprep.subr.mxu0 0.0
    %1714 = vmatpush1.msra.mxu0 0.0
    %1715 = vmatprep.subr.mxu0 0.0
    %1716 = vmatpush1.msra.mxu0 0.0
    %1717 = vmatprep.subr.mxu0 0.0
    %1718 = vmatpush1.msra.mxu0 0.0
    %1719 = vmatprep.subr.mxu0 0.0
    %1720 = vmatpush1.msra.mxu0 0.0
    %1721 = vmatprep.subr.mxu0 0.0
    %1722 = vmatpush1.msra.mxu0 0.0
    %1723 = vmatprep.subr.mxu0 0.0
    %1724 = vmatpush1.msra.mxu0 0.0
    %1725 = vmatprep.subr.mxu0 0.0
    %1726 = vmatpush1.msra.mxu0 0.0
    %1727 = vmatprep.subr.mxu0 0.0
    %1728 = vmatpush1.msra.mxu0 0.0
    %1729 = vmatprep.subr.mxu0 0.0
    %1730 = vmatpush1.msra.mxu0 0.0
    %1731 = vmatprep.subr.mxu0 0.0
    %1732 = vmatpush1.msra.mxu0 0.0
    %1733 = vmatprep.subr.mxu0 0.0
    %1734 = vmatpush1.msra.mxu0 0.0
    %1735 = vmatprep.subr.mxu0 0.0
    %1736 = vmatpush1.msra.mxu0 0.0
    %1737 = vmatprep.subr.mxu0 0.0
    %1738 = vmatpush1.msra.mxu0 0.0
    %1739 = vmatprep.subr.mxu0 0.0
    %1740 = vmatpush1.msra.mxu0 0.0
    %1741 = vmatprep.subr.mxu0 0.0
    %1742 = vmatpush1.msra.mxu0 0.0
    %1743 = vmatprep.subr.mxu0 0.0
    %1744 = vmatpush1.msra.mxu0 0.0
    %1745 = vmatprep.subr.mxu0 0.0
    %1746 = vmatpush1.msra.mxu0 0.0
    %1747 = vmatprep.subr.mxu0 0.0
    %1748 = vmatpush1.msra.mxu0 0.0
    %1749 = vmatprep.subr.mxu0 0.0
    %1750 = vmatpush1.msra.mxu0 0.0
    %1751 = vmatprep.subr.mxu0 0.0
    %1752 = vmatpush1.msra.mxu0 0.0
    %1753 = vmatprep.subr.mxu0 0.0
    %1754 = vmatpush1.msra.mxu0 0.0
    %1755 = vmatprep.subr.mxu0 0.0
    %1756 = vmatpush1.msra.mxu0 0.0
    %1757 = vmatprep.subr.mxu0 0.0
    %1758 = vmatpush1.msra.mxu0 0.0
    %1759 = vmatprep.subr.mxu0 0.0
    %1760 = vmatpush1.msra.mxu0 0.0
    %1761 = vmatprep.subr.mxu0 0.0
    %1762 = vmatpush1.msra.mxu0 0.0
    %1763 = vmatprep.subr.mxu0 0.0
    %1764 = vmatpush1.msra.mxu0 0.0
    %1765 = vmatprep.subr.mxu0 0.0
    %1766 = vmatpush1.msra.mxu0 0.0
    %1767 = vmatprep.subr.mxu0 0.0
    %1768 = vmatpush1.msra.mxu0 0.0
    %1769 = vmatprep.subr.mxu0 0.0
    %1770 = vmatpush1.msra.mxu0 0.0
    %1771 = vmatprep.mubr.f32.mxu0 0.0
    %1772 = vmatmul.mubr.f32.gmra.mrb[0].mxu0 %v1705
    %v1773 = vpop.f32.mrb[0].mxu0
    %v1774 = vadd.f32 0.0, %v1773
    %v1775 = vpop.f32.mrb[0].mxu0
    %1776 = vdwg.mxu0
    %v1777 = vld [vmem:[%s5 + $0x18] sm:$0xff]
    %v1779 = vsel %vm205, %v1698, 0
    %v1782 = vsel %vm205, %v1774, 0
    %1784 = vmatprep.subr.mxu0 0.0
    %1785 = vmatpush1.msra.mxu0 %v1777
    %1786 = vmatprep.subr.mxu0 0.0
    %1787 = vmatpush1.msra.mxu0 0.0
    %1788 = vmatprep.subr.mxu0 0.0
    %1789 = vmatpush1.msra.mxu0 0.0
    %1790 = vmatprep.subr.mxu0 0.0
    %1791 = vmatpush1.msra.mxu0 0.0
    %1792 = vmatprep.subr.mxu0 0.0
    %1793 = vmatpush1.msra.mxu0 0.0
    %1794 = vmatprep.subr.mxu0 0.0
    %1795 = vmatpush1.msra.mxu0 0.0
    %1796 = vmatprep.subr.mxu0 0.0
    %1797 = vmatpush1.msra.mxu0 0.0
    %1798 = vmatprep.subr.mxu0 0.0
    %1799 = vmatpush1.msra.mxu0 0.0
    %1800 = vmatprep.subr.mxu0 0.0
    %1801 = vmatpush1.msra.mxu0 0.0
    %1802 = vmatprep.subr.mxu0 0.0
    %1803 = vmatpush1.msra.mxu0 0.0
    %1804 = vmatprep.subr.mxu0 0.0
    %1805 = vmatpush1.msra.mxu0 0.0
    %1806 = vmatprep.subr.mxu0 0.0
    %1807 = vmatpush1.msra.mxu0 0.0
    %1808 = vmatprep.subr.mxu0 0.0
    %1809 = vmatpush1.msra.mxu0 0.0
    %1810 = vmatprep.subr.mxu0 0.0
    %1811 = vmatpush1.msra.mxu0 0.0
    %1812 = vmatprep.subr.mxu0 0.0
    %1813 = vmatpush1.msra.mxu0 0.0
    %1814 = vmatprep.subr.mxu0 0.0
    %1815 = vmatpush1.msra.mxu0 0.0
    %1816 = vmatprep.subr.mxu0 0.0
    %1817 = vmatpush1.msra.mxu0 0.0
    %1818 = vmatprep.subr.mxu0 0.0
    %1819 = vmatpush1.msra.mxu0 0.0
    %1820 = vmatprep.subr.mxu0 0.0
    %1821 = vmatpush1.msra.mxu0 0.0
    %1822 = vmatprep.subr.mxu0 0.0
    %1823 = vmatpush1.msra.mxu0 0.0
    %1824 = vmatprep.subr.mxu0 0.0
    %1825 = vmatpush1.msra.mxu0 0.0
    %1826 = vmatprep.subr.mxu0 0.0
    %1827 = vmatpush1.msra.mxu0 0.0
    %1828 = vmatprep.subr.mxu0 0.0
    %1829 = vmatpush1.msra.mxu0 0.0
    %1830 = vmatprep.subr.mxu0 0.0
    %1831 = vmatpush1.msra.mxu0 0.0
    %1832 = vmatprep.subr.mxu0 0.0
    %1833 = vmatpush1.msra.mxu0 0.0
    %1834 = vmatprep.subr.mxu0 0.0
    %1835 = vmatpush1.msra.mxu0 0.0
    %1836 = vmatprep.subr.mxu0 0.0
    %1837 = vmatpush1.msra.mxu0 0.0
    %1838 = vmatprep.subr.mxu0 0.0
    %1839 = vmatpush1.msra.mxu0 0.0
    %1840 = vmatprep.subr.mxu0 0.0
    %1841 = vmatpush1.msra.mxu0 0.0
    %1842 = vmatprep.subr.mxu0 0.0
    %1843 = vmatpush1.msra.mxu0 0.0
    %1844 = vmatprep.subr.mxu0 0.0
    %1845 = vmatpush1.msra.mxu0 0.0
    %1846 = vmatprep.subr.mxu0 0.0
    %1847 = vmatpush1.msra.mxu0 0.0
    %1848 = vmatprep.mubr.f32.mxu0 0.0
    %1849 = vmatmul.mubr.f32.gmra.mrb[0].mxu0 %v1779
    %v1850 = vpop.f32.mrb[0].mxu0
    %v1851 = vadd.f32 0.0, %v1850
    %v1852 = vpop.f32.mrb[0].mxu0
    %1853 = vmatprep.mubr.f32.mxu0 0.0
    %1854 = vmatmul.mubr.f32.gmra.mrb[0].mxu0 %v1782
    %v1855 = vpop.f32.mrb[0].mxu0
    %v1856 = vadd.f32 0.0, %v1855
    %v1857 = vpop.f32.mrb[0].mxu0
    %1858 = vdwg.mxu0
    %v1859 = vadd.f32 %v1443, %v1851
    %v1860 = vadd.f32 %v1444, %v1856
    %v1861 = vmul.f32 %v1623, 0.25
    %v1862 = vmul.f32 %v1624, 0.25
    %1863 = vst.msk [vmem:[#allocation6] sm:$0xff] %vm205, %v1861
    %1864 = vst.msk [vmem:[#allocation6 + $0x8] sm:$0xff] %vm205, %v1862
    %v1865 = vadd.f32 %v108, %v1859
    %v1866 = vadd.f32 %v109, %v1860
    %v1867 = vld [vmem:[%s6] sm:$0x1]
    %v1869 = vlaneseq
    %v1870 = vshrl.u32 %v1869, 7
    %v1871 = vsub.s32 0, %v1870
    %v1872 = vrot.slane %v1867, %v1871
    %v1874 = vadd.f32 %v1865, %v1872
    %v1875 = vadd.f32 %v1866, %v1872
    %v1876 = vld [vmem:[%s7] sm:$0x1]
    %v1877 = vld [vmem:[%s8] sm:$0x1]
    %v1878 = vsel %vm66, %v1874, 0.0
    %1879 = vadd.xlane.f32.xlu0 %v1878
    %v1880 = vpop.xlane.xlu0 %1879
    %v1881 = vsel %vm66, %v1875, 0.0
    %1882 = vadd.xlane.f32.xlu0 %v1881
    %v1883 = vpop.xlane.xlu0 %1882
    %v1884 = vmul.f32 %v1880, %v73
    %v1885 = vmul.f32 %v1883, %v73
    %v1886 = vsub.f32 %v1874, %v1884
    %v1887 = vsub.f32 %v1875, %v1885
    %v1888 = vmul.f32 %v1886, %v1886
    %v1889 = vmul.f32 %v1887, %v1887
    %v1890 = vsel %vm66, %v1888, 0.0
    %1891 = vadd.xlane.f32.xlu0 %v1890
    %v1892 = vpop.xlane.xlu0 %1891
    %v1893 = vsel %vm66, %v1889, 0.0
    %1894 = vadd.xlane.f32.xlu0 %v1893
    %v1895 = vpop.xlane.xlu0 %1894
    %v1896 = vmul.f32 %v1892, %v73
    %v1897 = vmul.f32 %v1895, %v73
    %v1898 = vadd.f32 %v1896, 1e-05
    %v1899 = vadd.f32 %v1897, 1e-05
    %v1900 = vrsqrt.pop %v1898
    %v1901 = vrsqrt.pop %v1899
    %v1902 = vmul.f32 %v1886, %v1900
    %v1903 = vmul.f32 %v1887, %v1901
    %v1905 = vlaneseq
    %v1906 = vshrl.u32 %v1905, 7
    %v1907 = vsub.s32 0, %v1906
    %v1908 = vrot.slane %v1876, %v1907
    %v1910 = vmul.f32 %v1902, %v1908
    %v1911 = vmul.f32 %v1903, %v1908
    %v1913 = vlaneseq
    %v1914 = vshrl.u32 %v1913, 7
    %v1915 = vsub.s32 0, %v1914
    %v1916 = vrot.slane %v1877, %v1915
    %v1918 = vadd.f32 %v1910, %v1916
    %v1919 = vadd.f32 %v1911, %v1916
    %v1920 = vld [vmem:[%s9] sm:$0xff]
    %v1921 = vld [vmem:[%s9 + $0x8] sm:$0xff]
    %v1922 = vld [vmem:[%s9 + $0x10] sm:$0xff]
    %v1923 = vld [vmem:[%s9 + $0x18] sm:$0xff]
    %v1924 = vld [vmem:[%s10] sm:$0x1]
    %v1926 = vlaneseq
    %v1927 = vshrl.u32 %v1926, 7
    %v1928 = vsub.s32 0, %v1927
    %v1929 = vrot.slane %v1924, %v1928
    %v1932 = vsel %vm66, %v1918, 0
    %v1935 = vsel %vm66, %v1919, 0
    %1937 = vmatprep.subr.mxu0 0.0
    %1938 = vmatpush1.msra.mxu0 %v1920
    %1939 = vmatprep.subr.mxu0 0.0
    %1940 = vmatpush1.msra.mxu0 %v1921
    %1941 = vmatprep.subr.mxu0 0.0
    %1942 = vmatpush1.msra.mxu0 %v1922
    %1943 = vmatprep.subr.mxu0 0.0
    %1944 = vmatpush1.msra.mxu0 %v1923
    %1945 = vmatprep.subr.mxu0 0.0
    %1946 = vmatpush1.msra.mxu0 0.0
    %1947 = vmatprep.subr.mxu0 0.0
    %1948 = vmatpush1.msra.mxu0 0.0
    %1949 = vmatprep.subr.mxu0 0.0
    %1950 = vmatpush1.msra.mxu0 0.0
    %1951 = vmatprep.subr.mxu0 0.0
    %1952 = vmatpush1.msra.mxu0 0.0
    %1953 = vmatprep.subr.mxu0 0.0
    %1954 = vmatpush1.msra.mxu0 0.0
    %1955 = vmatprep.subr.mxu0 0.0
    %1956 = vmatpush1.msra.mxu0 0.0
    %1957 = vmatprep.subr.mxu0 0.0
    %1958 = vmatpush1.msra.mxu0 0.0
    %1959 = vmatprep.subr.mxu0 0.0
    %1960 = vmatpush1.msra.mxu0 0.0
    %1961 = vmatprep.subr.mxu0 0.0
    %1962 = vmatpush1.msra.mxu0 0.0
    %1963 = vmatprep.subr.mxu0 0.0
    %1964 = vmatpush1.msra.mxu0 0.0
    %1965 = vmatprep.subr.mxu0 0.0
    %1966 = vmatpush1.msra.mxu0 0.0
    %1967 = vmatprep.subr.mxu0 0.0
    %1968 = vmatpush1.msra.mxu0 0.0
    %1969 = vmatprep.subr.mxu0 0.0
    %1970 = vmatpush1.msra.mxu0 0.0
    %1971 = vmatprep.subr.mxu0 0.0
    %1972 = vmatpush1.msra.mxu0 0.0
    %1973 = vmatprep.subr.mxu0 0.0
    %1974 = vmatpush1.msra.mxu0 0.0
    %1975 = vmatprep.subr.mxu0 0.0
    %1976 = vmatpush1.msra.mxu0 0.0
    %1977 = vmatprep.subr.mxu0 0.0
    %1978 = vmatpush1.msra.mxu0 0.0
    %1979 = vmatprep.subr.mxu0 0.0
    %1980 = vmatpush1.msra.mxu0 0.0
    %1981 = vmatprep.subr.mxu0 0.0
    %1982 = vmatpush1.msra.mxu0 0.0
    %1983 = vmatprep.subr.mxu0 0.0
    %1984 = vmatpush1.msra.mxu0 0.0
    %1985 = vmatprep.subr.mxu0 0.0
    %1986 = vmatpush1.msra.mxu0 0.0
    %1987 = vmatprep.subr.mxu0 0.0
    %1988 = vmatpush1.msra.mxu0 0.0
    %1989 = vmatprep.subr.mxu0 0.0
    %1990 = vmatpush1.msra.mxu0 0.0
    %1991 = vmatprep.subr.mxu0 0.0
    %1992 = vmatpush1.msra.mxu0 0.0
    %1993 = vmatprep.subr.mxu0 0.0
    %1994 = vmatpush1.msra.mxu0 0.0
    %1995 = vmatprep.subr.mxu0 0.0
    %1996 = vmatpush1.msra.mxu0 0.0
    %1997 = vmatprep.subr.mxu0 0.0
    %1998 = vmatpush1.msra.mxu0 0.0
    %1999 = vmatprep.subr.mxu0 0.0
    %2000 = vmatpush1.msra.mxu0 0.0
    %2001 = vmatprep.mubr.f32.mxu0 0.0
    %2002 = vmatmul.mubr.f32.gmra.mrb[0].mxu0 %v1932
    %v2003 = vpop.f32.mrb[0].mxu0
    %v2004 = vadd.f32 %v1929, %v2003
    %v2005 = vpop.f32.mrb[0].mxu0
    %2006 = vmatprep.mubr.f32.mxu0 0.0
    %2007 = vmatmul.mubr.f32.gmra.mrb[0].mxu0 %v1935
    %v2008 = vpop.f32.mrb[0].mxu0
    %v2009 = vadd.f32 %v1929, %v2008
    %v2010 = vpop.f32.mrb[0].mxu0
    %2011 = vdwg.mxu0
    %v2012 = vmul.f32 %v2004, 0.5
    %v2013 = vmul.f32 %v2009, 0.5
    %v2014 = vmul.f32 %v2004, 0.044715
    %v2015 = vmul.f32 %v2009, 0.044715
    %v2016 = vmul.f32 %v2014, %v2004
    %v2017 = vmul.f32 %v2015, %v2009
    %v2018 = vmul.f32 %v2016, %v2004
    %v2019 = vmul.f32 %v2017, %v2009
    %v2020 = vadd.f32 %v2004, %v2018
    %v2021 = vadd.f32 %v2009, %v2019
    %v2022 = vmul.f32 %v2020, 0.7978846
    %v2023 = vmul.f32 %v2021, 0.7978846
    %v2024 = vtanh.pop %v2022
    %v2025 = vtanh.pop %v2023
    %v2026 = vadd.f32 %v2024, 1.0
    %v2027 = vadd.f32 %v2025, 1.0
    %v2028 = vmul.f32 %v2012, %v2026
    %v2029 = vmul.f32 %v2013, %v2027
    %v2030 = vld [vmem:[%s11] sm:$0xff]
    %v2031 = vld [vmem:[%s11 + $0x8] sm:$0xff]
    %v2032 = vld [vmem:[%s11 + $0x10] sm:$0xff]
    %v2033 = vld [vmem:[%s11 + $0x18] sm:$0xff]
    %v2034 = vld [vmem:[%s11 + $0x20] sm:$0xff]
    %v2035 = vld [vmem:[%s11 + $0x28] sm:$0xff]
    %v2036 = vld [vmem:[%s11 + $0x30] sm:$0xff]
    %v2037 = vld [vmem:[%s11 + $0x38] sm:$0xff]
    %v2038 = vld [vmem:[%s12] sm:$0x1]
    %v2040 = vlaneseq
    %v2041 = vshrl.u32 %v2040, 7
    %v2042 = vsub.s32 0, %v2041
    %v2043 = vrot.slane %v2038, %v2042
    %vm2045 = vcmask 523264
    %v2047 = vsel %vm2045, %v2028, 0
    %v2050 = vsel %vm2045, %v2029, 0
    %2052 = vmatprep.subr.mxu0 0.0
    %2053 = vmatpush1.msra.mxu0 %v2030
    %2054 = vmatprep.subr.mxu0 0.0
    %2055 = vmatpush1.msra.mxu0 %v2031
    %2056 = vmatprep.subr.mxu0 0.0
    %2057 = vmatpush1.msra.mxu0 %v2032
    %2058 = vmatprep.subr.mxu0 0.0
    %2059 = vmatpush1.msra.mxu0 %v2033
    %2060 = vmatprep.subr.mxu0 0.0
    %2061 = vmatpush1.msra.mxu0 %v2034
    %2062 = vmatprep.subr.mxu0 0.0
    %2063 = vmatpush1.msra.mxu0 %v2035
    %2064 = vmatprep.subr.mxu0 0.0
    %2065 = vmatpush1.msra.mxu0 %v2036
    %2066 = vmatprep.subr.mxu0 0.0
    %2067 = vmatpush1.msra.mxu0 %v2037
    %2068 = vmatprep.subr.mxu0 0.0
    %2069 = vmatpush1.msra.mxu0 0.0
    %2070 = vmatprep.subr.mxu0 0.0
    %2071 = vmatpush1.msra.mxu0 0.0
    %2072 = vmatprep.subr.mxu0 0.0
    %2073 = vmatpush1.msra.mxu0 0.0
    %2074 = vmatprep.subr.mxu0 0.0
    %2075 = vmatpush1.msra.mxu0 0.0
    %2076 = vmatprep.subr.mxu0 0.0
    %2077 = vmatpush1.msra.mxu0 0.0
    %2078 = vmatprep.subr.mxu0 0.0
    %2079 = vmatpush1.msra.mxu0 0.0
    %2080 = vmatprep.subr.mxu0 0.0
    %2081 = vmatpush1.msra.mxu0 0.0
    %2082 = vmatprep.subr.mxu0 0.0
    %2083 = vmatpush1.msra.mxu0 0.0
    %2084 = vmatprep.subr.mxu0 0.0
    %2085 = vmatpush1.msra.mxu0 0.0
    %2086 = vmatprep.subr.mxu0 0.0
    %2087 = vmatpush1.msra.mxu0 0.0
    %2088 = vmatprep.subr.mxu0 0.0
    %2089 = vmatpush1.msra.mxu0 0.0
    %2090 = vmatprep.subr.mxu0 0.0
    %2091 = vmatpush1.msra.mxu0 0.0
    %2092 = vmatprep.subr.mxu0 0.0
    %2093 = vmatpush1.msra.mxu0 0.0
    %2094 = vmatprep.subr.mxu0 0.0
    %2095 = vmatpush1.msra.mxu0 0.0
    %2096 = vmatprep.subr.mxu0 0.0
    %2097 = vmatpush1.msra.mxu0 0.0
    %2098 = vmatprep.subr.mxu0 0.0
    %2099 = vmatpush1.msra.mxu0 0.0
    %2100 = vmatprep.subr.mxu0 0.0
    %2101 = vmatpush1.msra.mxu0 0.0
    %2102 = vmatprep.subr.mxu0 0.0
    %2103 = vmatpush1.msra.mxu0 0.0
    %2104 = vmatprep.subr.mxu0 0.0
    %2105 = vmatpush1.msra.mxu0 0.0
    %2106 = vmatprep.subr.mxu0 0.0
    %2107 = vmatpush1.msra.mxu0 0.0
    %2108 = vmatprep.subr.mxu0 0.0
    %2109 = vmatpush1.msra.mxu0 0.0
    %2110 = vmatprep.subr.mxu0 0.0
    %2111 = vmatpush1.msra.mxu0 0.0
    %2112 = vmatprep.subr.mxu0 0.0
    %2113 = vmatpush1.msra.mxu0 0.0
    %2114 = vmatprep.subr.mxu0 0.0
    %2115 = vmatpush1.msra.mxu0 0.0
    %2116 = vmatprep.mubr.f32.mxu0 0.0
    %2117 = vmatmul.mubr.f32.gmra.mrb[0].mxu0 %v2047
    %v2118 = vpop.f32.mrb[0].mxu0
    %v2119 = vadd.f32 %v2043, %v2118
    %v2120 = vpop.f32.mrb[0].mxu0
    %2121 = vmatprep.mubr.f32.mxu0 0.0
    %2122 = vmatmul.mubr.f32.gmra.mrb[0].mxu0 %v2050
    %v2123 = vpop.f32.mrb[0].mxu0
    %v2124 = vadd.f32 %v2043, %v2123
    %v2125 = vpop.f32.mrb[0].mxu0
    %2126 = vdwg.mxu0
    %v2127 = vadd.f32 %v1874, %v2119
    %v2128 = vadd.f32 %v1875, %v2124
    %2129 = vst.msk [vmem:[#allocation5] sm:$0xff] %vm66, %v2127
    %2130 = vst.msk [vmem:[#allocation5 + $0x8] sm:$0xff] %vm66, %v2128
    // Predicated region
    $region58: #{tpu_custom_call.1} parent=1 // pred_check
      _
    $region59: #{tpu_custom_call.1} parent=1 // pred_check_branch
      %2132 = sbr.rel (0) target = $region61
    $region60: #{tpu_custom_call.1} parent=1 // pred_region
      %s2134 = ssub.s32 256, 256
      %2135 = vsyncadd [#allocation4], %s2134
      %s2136 = sshll.u32 [#allocation5], 4
      %s2137 = int_to_ptr.vmem [resolvable:$true] %s2136
      %2142 = dma.vmem_to_hbm [thread:$0]  %s2137, 256, %s13, [#allocation4], 128, 128, 8
    $region61: #{tpu_custom_call.1} parent=1 // pred_fallthru
      _
    // Predicated region
    $region62: #{tpu_custom_call.1} parent=1 // pred_check
      _
    $region63: #{tpu_custom_call.1} parent=1 // pred_check_branch
      %2144 = sbr.rel (0) target = $region65
    $region64: #{tpu_custom_call.1} parent=1 // pred_region
      %s2146 = ssub.s32 256, 256
      %2147 = vsyncadd [#allocation7], %s2146
      %s2148 = sshll.u32 [#allocation6], 4
      %s2149 = int_to_ptr.vmem [resolvable:$true] %s2148
      %2154 = dma.vmem_to_hbm [thread:$0]  %s2149, 256, %s14, [#allocation7], 128, 128, 8
    $region65: #{tpu_custom_call.1} parent=1 // pred_fallthru
      _
    // Predicated region
    $region66: #{tpu_custom_call.1} parent=1 // pred_check
      _
    $region67: #{tpu_custom_call.1} parent=1 // pred_check_branch
      %2156 = sbr.rel (0) target = $region69
    $region68: #{tpu_custom_call.1} parent=1 // pred_region
      %2157 = dma.done [#allocation4], 256
    $region69: #{tpu_custom_call.1} parent=1 // pred_fallthru
      _
    // Predicated region
    $region70: #{tpu_custom_call.1} parent=1 // pred_check
      _
    $region71: #{tpu_custom_call.1} parent=1 // pred_check_branch
      %2159 = sbr.rel (0) target = $region73
    $region72: #{tpu_custom_call.1} parent=1 // pred_region
      %2160 = dma.done [#allocation7], 256
    $region73: #{tpu_custom_call.1} parent=1 // pred_fallthru
      _
    %2161 = vsyncpa [#allocation3], 1
    %2162 = vsyncpa [#allocation4], 1
    %2163 = vsyncpa [#allocation7], 1

// kernel: tpu_custom_call.1
$region0: #{tpu_custom_call.1}
  #allocation0 [shape = 'u32[]', space=smem, size = 0x4, offset = 0x4, fixed_abs, tag = 'smem constant byte address 0x4 - core index']
  #allocation1 [shape = 'u32[144,128]{1,0:T(1,128)}', space=vmem, size = 0x12000, scoped, tag = 'internal scratch']
  %s0 = inlined_call_operand.hbm [shape: f32[2,8,32], index: 0, kind: input, shape index: {}]
  %s1 = inlined_call_operand.vmem [shape: f32[1,32], index: 1, kind: input, shape index: {}]
  %s2 = inlined_call_operand.vmem [shape: f32[1,32], index: 2, kind: input, shape index: {}]
  %s3 = inlined_call_operand.vmem [shape: f32[32,96], index: 3, kind: input, shape index: {}]
  %s4 = inlined_call_operand.vmem [shape: f32[1,96], index: 4, kind: input, shape index: {}]
  %s5 = inlined_call_operand.vmem [shape: f32[32,32], index: 5, kind: input, shape index: {}]
  %s6 = inlined_call_operand.vmem [shape: f32[1,32], index: 6, kind: input, shape index: {}]
  %s7 = inlined_call_operand.vmem [shape: f32[1,32], index: 7, kind: input, shape index: {}]
  %s8 = inlined_call_operand.vmem [shape: f32[1,32], index: 8, kind: input, shape index: {}]
  %s9 = inlined_call_operand.vmem [shape: f32[32,64], index: 9, kind: input, shape index: {}]
  %s10 = inlined_call_operand.vmem [shape: f32[1,64], index: 10, kind: input, shape index: {}]
  %s11 = inlined_call_operand.vmem [shape: f32[64,32], index: 11, kind: input, shape index: {}]
  %s12 = inlined_call_operand.vmem [shape: f32[1,32], index: 12, kind: input, shape index: {}]
  %s13 = inlined_call_operand.hbm [shape: f32[2,8,32], index: 13, kind: output, shape index: {0}]
  %s14 = inlined_call_operand.hbm [shape: f32[2,8,8], index: 14, kind: output, shape index: {1}]
  %15 = xla_tuple %s13, %s14
  %s16 = sld [smem:[#allocation0]]
  $region74: #{tpu_custom_call.1} parent=0
    _
  %s18 = ssub.s32 1, %s16
  %s19 = scalar_select 0, %s18, %s16
  $region1: #{tpu_custom_call.1} parent=0
    #allocation2 [shape = 'u8[8192]{0}', space=vmem, size = 0x2000, scoped, tag = 'input window, operand 0, single buffered']
    #allocation3 [shape = 's32[1]{0}', space=sflag, size = 0x4, scoped, tag = 'scoped memory for tpu_custom_call.1']
    #allocation4 [shape = 's32[1]{0}', space=sflag, size = 0x4, scoped, tag = 'scoped memory for tpu_custom_call.1']
    #allocation5 [shape = 'u8[8192]{0}', space=vmem, size = 0x2000, scoped, tag = 'output window, operand 0, single buffered']
    #allocation6 [shape = 'u8[8192]{0}', space=vmem, size = 0x2000, scoped, tag = 'output window, operand 1, single buffered']
    #allocation7 [shape = 's32[1]{0}', space=sflag, size = 0x4, scoped, tag = 'scoped memory for tpu_custom_call.1']
    %20 = vsyncpa [#allocation3], 0
    %21 = vsyncpa [#allocation4], 0
    %22 = vsyncpa [#allocation7], 0
    // Predicated region
    $region2: #{tpu_custom_call.1} parent=1 // pred_check
      _
    $region3: #{tpu_custom_call.1} parent=1 // pred_check_branch
      %24 = sbr.rel (0) target = $region5
    $region4: #{tpu_custom_call.1} parent=1 // pred_region
      %s26 = ssub.s32 256, 256
      %27 = vsyncadd [#allocation3], %s26
      %s28 = sshll.u32 [#allocation2], 4
      %s29 = int_to_ptr.vmem [resolvable:$true] %s28
      %34 = dma.hbm_to_vmem [thread:$0]  %s0, 256, %s29, [#allocation3], 128, 128, 8
    $region5: #{tpu_custom_call.1} parent=1 // pred_fallthru
      _
    // Predicated region
    $region6: #{tpu_custom_call.1} parent=1 // pred_check
      _
    $region7: #{tpu_custom_call.1} parent=1 // pred_check_branch
      %36 = sbr.rel (0) target = $region9
    $region8: #{tpu_custom_call.1} parent=1 // pred_region
      _
    $region9: #{tpu_custom_call.1} parent=1 // pred_fallthru
      _
    // Predicated region
    $region10: #{tpu_custom_call.1} parent=1 // pred_check
      _
    $region11: #{tpu_custom_call.1} parent=1 // pred_check_branch
      %38 = sbr.rel (0) target = $region13
    $region12: #{tpu_custom_call.1} parent=1 // pred_region
      _
    $region13: #{tpu_custom_call.1} parent=1 // pred_fallthru
      _
    // Predicated region
    $region14: #{tpu_custom_call.1} parent=1 // pred_check
      _
    $region15: #{tpu_custom_call.1} parent=1 // pred_check_branch
      %40 = sbr.rel (0) target = $region17
    $region16: #{tpu_custom_call.1} parent=1 // pred_region
      _
    $region17: #{tpu_custom_call.1} parent=1 // pred_fallthru
      _
    // Predicated region
    $region18: #{tpu_custom_call.1} parent=1 // pred_check
      _
    $region19: #{tpu_custom_call.1} parent=1 // pred_check_branch
      %42 = sbr.rel (0) target = $region21
    $region20: #{tpu_custom_call.1} parent=1 // pred_region
      _
    $region21: #{tpu_custom_call.1} parent=1 // pred_fallthru
      _
    // Predicated region
    $region22: #{tpu_custom_call.1} parent=1 // pred_check
      _
    $region23: #{tpu_custom_call.1} parent=1 // pred_check_branch
      %44 = sbr.rel (0) target = $region25
    $region24: #{tpu_custom_call.1} parent=1 // pred_region
      _
    $region25: #{tpu_custom_call.1} parent=1 // pred_fallthru
      _
    // Predicated region
    $region26: #{tpu_custom_call.1} parent=1 // pred_check
      _
    $region27: #{tpu_custom_call.1} parent=1 // pred_check_branch
      %46 = sbr.rel (0) target = $region29
    $region28: #{tpu_custom_call.1} parent=1 // pred_region
      _
    $region29: #{tpu_custom_call.1} parent=1 // pred_fallthru
      _
    // Predicated region
    $region30: #{tpu_custom_call.1} parent=1 // pred_check
      _
    $region31: #{tpu_custom_call.1} parent=1 // pred_check_branch
      %48 = sbr.rel (0) target = $region33
    $region32: #{tpu_custom_call.1} parent=1 // pred_region
      _
    $region33: #{tpu_custom_call.1} parent=1 // pred_fallthru
      _
    // Predicated region
    $region34: #{tpu_custom_call.1} parent=1 // pred_check
      _
    $region35: #{tpu_custom_call.1} parent=1 // pred_check_branch
      %50 = sbr.rel (0) target = $region37
    $region36: #{tpu_custom_call.1} parent=1 // pred_region
      _
    $region37: #{tpu_custom_call.1} parent=1 // pred_fallthru
      _
    // Predicated region
    $region38: #{tpu_custom_call.1} parent=1 // pred_check
      _
    $region39: #{tpu_custom_call.1} parent=1 // pred_check_branch
      %52 = sbr.rel (0) target = $region41
    $region40: #{tpu_custom_call.1} parent=1 // pred_region
      _
    $region41: #{tpu_custom_call.1} parent=1 // pred_fallthru
      _
    // Predicated region
    $region42: #{tpu_custom_call.1} parent=1 // pred_check
      _
    $region43: #{tpu_custom_call.1} parent=1 // pred_check_branch
      %54 = sbr.rel (0) target = $region45
    $region44: #{tpu_custom_call.1} parent=1 // pred_region
      _
    $region45: #{tpu_custom_call.1} parent=1 // pred_fallthru
      _
    // Predicated region
    $region46: #{tpu_custom_call.1} parent=1 // pred_check
      _
    $region47: #{tpu_custom_call.1} parent=1 // pred_check_branch
      %56 = sbr.rel (0) target = $region49
    $region48: #{tpu_custom_call.1} parent=1 // pred_region
      _
    $region49: #{tpu_custom_call.1} parent=1 // pred_fallthru
      _
    // Predicated region
    $region50: #{tpu_custom_call.1} parent=1 // pred_check
      _
    $region51: #{tpu_custom_call.1} parent=1 // pred_check_branch
      %58 = sbr.rel (0) target = $region53
    $region52: #{tpu_custom_call.1} parent=1 // pred_region
      _
    $region53: #{tpu_custom_call.1} parent=1 // pred_fallthru
      _
    // Predicated region
    $region54: #{tpu_custom_call.1} parent=1 // pred_check
      _
    $region55: #{tpu_custom_call.1} parent=1 // pred_check_branch
      %60 = sbr.rel (0) target = $region57
    $region56: #{tpu_custom_call.1} parent=1 // pred_region
      %61 = dma.done [#allocation3], 256
    $region57: #{tpu_custom_call.1} parent=1 // pred_fallthru
      _
    %v62 = vld [vmem:[#allocation2] sm:$0xff]
    %v63 = vld [vmem:[#allocation2 + $0x8] sm:$0xff]
    %v64 = vld [vmem:[%s1] sm:$0x1]
    %v65 = vld [vmem:[%s2] sm:$0x1]
    %vm66 = vcmask 261120
    %v67 = vsel %vm66, %v62, 0.0
    %68 = vadd.xlane.f32.xlu0 %v67
    %v69 = vpop.xlane.xlu0 %68
    %v70 = vsel %vm66, %v63, 0.0
    %71 = vadd.xlane.f32.xlu0 %v70
    %v72 = vpop.xlane.xlu0 %71
    %v73 = vrcp.pop 32.0
    %v74 = vmul.f32 %v69, %v73
    %v75 = vmul.f32 %v72, %v73
    %v76 = vsub.f32 %v62, %v74
    %v77 = vsub.f32 %v63, %v75
    %v78 = vmul.f32 %v76, %v76
    %v79 = vmul.f32 %v77, %v77
    %v80 = vsel %vm66, %v78, 0.0
    %81 = vadd.xlane.f32.xlu0 %v80
    %v82 = vpop.xlane.xlu0 %81
    %v83 = vsel %vm66, %v79, 0.0
    %84 = vadd.xlane.f32.xlu0 %v83
    %v85 = vpop.xlane.xlu0 %84
    %v86 = vmul.f32 %v82, %v73
    %v87 = vmul.f32 %v85, %v73
    %v88 = vadd.f32 %v86, 1e-05
    %v89 = vadd.f32 %v87, 1e-05
    %v90 = vrsqrt.pop %v88
    %v91 = vrsqrt.pop %v89
    %v92 = vmul.f32 %v76, %v90
    %v93 = vmul.f32 %v77, %v91
    %v95 = vlaneseq
    %v96 = vshrl.u32 %v95, 7
    %v97 = vsub.s32 0, %v96
    %v98 = vrot.slane %v64, %v97
    %v100 = vmul.f32 %v92, %v98
    %v101 = vmul.f32 %v93, %v98
    %v103 = vlaneseq
    %v104 = vshrl.u32 %v103, 7
    %v105 = vsub.s32 0, %v104
    %v106 = vrot.slane %v65, %v105
    %v108 = vadd.f32 %v100, %v106
    %v109 = vadd.f32 %v101, %v106
    %v110 = vld [vmem:[%s3] sm:$0xff]
    %v111 = vld [vmem:[%s3 + $0x8] sm:$0xff]
    %v112 = vld [vmem:[%s3 + $0x10] sm:$0xff]
    %v113 = vld [vmem:[%s3 + $0x18] sm:$0xff]
    %v114 = vld [vmem:[%s4] sm:$0x1]
    %v116 = vlaneseq
    %v117 = vshrl.u32 %v116, 7
    %v118 = vsub.s32 0, %v117
    %v119 = vrot.slane %v114, %v118
    %v122 = vsel %vm66, %v108, 0
    %v125 = vsel %vm66, %v109, 0
    %127 = vmatprep.subr.mxu0 0.0
    %128 = vmatpush1.msra.mxu0 %v110
    %129 = vmatprep.subr.mxu0 0.0
    %130 = vmatpush1.msra.mxu0 %v111
    %131 = vmatprep.subr.mxu0 0.0
    %132 = vmatpush1.msra.mxu0 %v112
    %133 = vmatprep.subr.mxu0 0.0
    %134 = vmatpush1.msra.mxu0 %v113
    %135 = vmatprep.subr.mxu0 0.0
    %136 = vmatpush1.msra.mxu0 0.0
    %137 = vmatprep.subr.mxu0 0.0
    %138 = vmatpush1.msra.mxu0 0.0
    %139 = vmatprep.subr.mxu0 0.0
    %140 = vmatpush1.msra.mxu0 0.0
    %141 = vmatprep.subr.mxu0 0.0
    %142 = vmatpush1.msra.mxu0 0.0
    %143 = vmatprep.subr.mxu0 0.0
    %144 = vmatpush1.msra.mxu0 0.0
    %145 = vmatprep.subr.mxu0 0.0
    %146 = vmatpush1.msra.mxu0 0.0
    %147 = vmatprep.subr.mxu0 0.0
    %148 = vmatpush1.msra.mxu0 0.0
    %149 = vmatprep.subr.mxu0 0.0
    %150 = vmatpush1.msra.mxu0 0.0
    %151 = vmatprep.subr.mxu0 0.0
    %152 = vmatpush1.msra.mxu0 0.0
    %153 = vmatprep.subr.mxu0 0.0
    %154 = vmatpush1.msra.mxu0 0.0
    %155 = vmatprep.subr.mxu0 0.0
    %156 = vmatpush1.msra.mxu0 0.0
    %157 = vmatprep.subr.mxu0 0.0
    %158 = vmatpush1.msra.mxu0 0.0
    %159 = vmatprep.subr.mxu0 0.0
    %160 = vmatpush1.msra.mxu0 0.0
    %161 = vmatprep.subr.mxu0 0.0
    %162 = vmatpush1.msra.mxu0 0.0
    %163 = vmatprep.subr.mxu0 0.0
    %164 = vmatpush1.msra.mxu0 0.0
    %165 = vmatprep.subr.mxu0 0.0
    %166 = vmatpush1.msra.mxu0 0.0
    %167 = vmatprep.subr.mxu0 0.0
    %168 = vmatpush1.msra.mxu0 0.0
    %169 = vmatprep.subr.mxu0 0.0
    %170 = vmatpush1.msra.mxu0 0.0
    %171 = vmatprep.subr.mxu0 0.0
    %172 = vmatpush1.msra.mxu0 0.0
    %173 = vmatprep.subr.mxu0 0.0
    %174 = vmatpush1.msra.mxu0 0.0
    %175 = vmatprep.subr.mxu0 0.0
    %176 = vmatpush1.msra.mxu0 0.0
    %177 = vmatprep.subr.mxu0 0.0
    %178 = vmatpush1.msra.mxu0 0.0
    %179 = vmatprep.subr.mxu0 0.0
    %180 = vmatpush1.msra.mxu0 0.0
    %181 = vmatprep.subr.mxu0 0.0
    %182 = vmatpush1.msra.mxu0 0.0
    %183 = vmatprep.subr.mxu0 0.0
    %184 = vmatpush1.msra.mxu0 0.0
    %185 = vmatprep.subr.mxu0 0.0
    %186 = vmatpush1.msra.mxu0 0.0
    %187 = vmatprep.subr.mxu0 0.0
    %188 = vmatpush1.msra.mxu0 0.0
    %189 = vmatprep.subr.mxu0 0.0
    %190 = vmatpush1.msra.mxu0 0.0
    %191 = vmatprep.mubr.f32.mxu0 0.0
    %192 = vmatmul.mubr.f32.gmra.mrb[0].mxu0 %v122
    %v193 = vpop.f32.mrb[0].mxu0
    %v194 = vadd.f32 %v119, %v193
    %v195 = vpop.f32.mrb[0].mxu0
    %196 = vmatprep.mubr.f32.mxu0 0.0
    %197 = vmatmul.mubr.f32.gmra.mrb[0].mxu0 %v125
    %v198 = vpop.f32.mrb[0].mxu0
    %v199 = vadd.f32 %v119, %v198
    %v200 = vpop.f32.mrb[0].mxu0
    %201 = vdwg.mxu0
    %203 = vrot.lane.b32.xlu0 %v194, 96
    %v204 = vpop.permute.xlu0 %203
    %vm205 = vcmask 64512
    %v206 = vsel %vm205, %v194, 0
    %v208 = vsel %vm205, %v204, 0
    %210 = vmatprep.subr.mxu0 0.0
    %211 = vmatpush1.xpose.msra.mxu0 %v208
    %212 = vmatprep.subr.mxu0 0.0
    %213 = vmatpush1.xpose.msra.mxu0 0.0
    %214 = vmatprep.subr.mxu0 0.0
    %215 = vmatpush1.xpose.msra.mxu0 0.0
    %216 = vmatprep.subr.mxu0 0.0
    %217 = vmatpush1.xpose.msra.mxu0 0.0
    %218 = vmatprep.subr.mxu0 0.0
    %219 = vmatpush1.xpose.msra.mxu0 0.0
    %220 = vmatprep.subr.mxu0 0.0
    %221 = vmatpush1.xpose.msra.mxu0 0.0
    %222 = vmatprep.subr.mxu0 0.0
    %223 = vmatpush1.xpose.msra.mxu0 0.0
    %224 = vmatprep.subr.mxu0 0.0
    %225 = vmatpush1.xpose.msra.mxu0 0.0
    %226 = vmatprep.subr.mxu0 0.0
    %227 = vmatpush1.xpose.msra.mxu0 0.0
    %228 = vmatprep.subr.mxu0 0.0
    %229 = vmatpush1.xpose.msra.mxu0 0.0
    %230 = vmatprep.subr.mxu0 0.0
    %231 = vmatpush1.xpose.msra.mxu0 0.0
    %232 = vmatprep.subr.mxu0 0.0
    %233 = vmatpush1.xpose.msra.mxu0 0.0
    %234 = vmatprep.subr.mxu0 0.0
    %235 = vmatpush1.xpose.msra.mxu0 0.0
    %236 = vmatprep.subr.mxu0 0.0
    %237 = vmatpush1.xpose.msra.mxu0 0.0
    %238 = vmatprep.subr.mxu0 0.0
    %239 = vmatpush1.xpose.msra.mxu0 0.0
    %240 = vmatprep.subr.mxu0 0.0
    %241 = vmatpush1.xpose.msra.mxu0 0.0
    %242 = vmatprep.subr.mxu0 0.0
    %243 = vmatpush1.xpose.msra.mxu0 0.0
    %244 = vmatprep.subr.mxu0 0.0
    %245 = vmatpush1.xpose.msra.mxu0 0.0
    %246 = vmatprep.subr.mxu0 0.0
    %247 = vmatpush1.xpose.msra.mxu0 0.0
    %248 = vmatprep.subr.mxu0 0.0
    %249 = vmatpush1.xpose.msra.mxu0 0.0
    %250 = vmatprep.subr.mxu0 0.0
    %251 = vmatpush1.xpose.msra.mxu0 0.0
    %252 = vmatprep.subr.mxu0 0.0
    %253 = vmatpush1.xpose.msra.mxu0 0.0
    %254 = vmatprep.subr.mxu0 0.0
    %255 = vmatpush1.xpose.msra.mxu0 0.0
    %256 = vmatprep.subr.mxu0 0.0
    %257 = vmatpush1.xpose.msra.mxu0 0.0
    %258 = vmatprep.subr.mxu0 0.0
    %259 = vmatpush1.xpose.msra.mxu0 0.0
    %260 = vmatprep.subr.mxu0 0.0
    %261 = vmatpush1.xpose.msra.mxu0 0.0
    %262 = vmatprep.subr.mxu0 0.0
    %263 = vmatpush1.xpose.msra.mxu0 0.0
    %264 = vmatprep.subr.mxu0 0.0
    %265 = vmatpush1.xpose.msra.mxu0 0.0
    %266 = vmatprep.subr.mxu0 0.0
    %267 = vmatpush1.xpose.msra.mxu0 0.0
    %268 = vmatprep.subr.mxu0 0.0
    %269 = vmatpush1.xpose.msra.mxu0 0.0
    %270 = vmatprep.subr.mxu0 0.0
    %271 = vmatpush1.xpose.msra.mxu0 0.0
    %272 = vmatprep.subr.mxu0 0.0
    %273 = vmatpush1.xpose.msra.mxu0 0.0
    %274 = vmatprep.mubr.f32.mxu0 0.0
    %275 = vmatmul.mubr.f32.gmra.mrb[0].mxu0 %v206
    %v276 = vpop.f32.mrb[0].mxu0
    %v277 = vadd.f32 0.0, %v276
    %v278 = vpop.f32.mrb[0].mxu0
    %279 = vdwg.mxu0
    %281 = vrot.lane.b32.xlu0 %v199, 96
    %v282 = vpop.permute.xlu0 %281
    %v283 = vsel %vm205, %v199, 0
    %v285 = vsel %vm205, %v282, 0
    %287 = vmatprep.subr.mxu0 0.0
    %288 = vmatpush1.xpose.msra.mxu0 %v285
    %289 = vmatprep.subr.mxu0 0.0
    %290 = vmatpush1.xpose.msra.mxu0 0.0
    %291 = vmatprep.subr.mxu0 0.0
    %292 = vmatpush1.xpose.msra.mxu0 0.0
    %293 = vmatprep.subr.mxu0 0.0
    %294 = vmatpush1.xpose.msra.mxu0 0.0
    %295 = vmatprep.subr.mxu0 0.0
    %296 = vmatpush1.xpose.msra.mxu0 0.0
    %297 = vmatprep.subr.mxu0 0.0
    %298 = vmatpush1.xpose.msra.mxu0 0.0
    %299 = vmatprep.subr.mxu0 0.0
    %300 = vmatpush1.xpose.msra.mxu0 0.0
    %301 = vmatprep.subr.mxu0 0.0
    %302 = vmatpush1.xpose.msra.mxu0 0.0
    %303 = vmatprep.subr.mxu0 0.0
    %304 = vmatpush1.xpose.msra.mxu0 0.0
    %305 = vmatprep.subr.mxu0 0.0
    %306 = vmatpush1.xpose.msra.mxu0 0.0
    %307 = vmatprep.subr.mxu0 0.0
    %308 = vmatpush1.xpose.msra.mxu0 0.0
    %309 = vmatprep.subr.mxu0 0.0
    %310 = vmatpush1.xpose.msra.mxu0 0.0
    %311 = vmatprep.subr.mxu0 0.0
    %312 = vmatpush1.xpose.msra.mxu0 0.0
    %313 = vmatprep.subr.mxu0 0.0
    %314 = vmatpush1.xpose.msra.mxu0 0.0
    %315 = vmatprep.subr.mxu0 0.0
    %316 = vmatpush1.xpose.msra.mxu0 0.0
    %317 = vmatprep.subr.mxu0 0.0
    %318 = vmatpush1.xpose.msra.mxu0 0.0
    %319 = vmatprep.subr.mxu0 0.0
    %320 = vmatpush1.xpose.msra.mxu0 0.0
    %321 = vmatprep.subr.mxu0 0.0
    %322 = vmatpush1.xpose.msra.mxu0 0.0
    %323 = vmatprep.subr.mxu0 0.0
    %324 = vmatpush1.xpose.msra.mxu0 0.0
    %325 = vmatprep.subr.mxu0 0.0
    %326 = vmatpush1.xpose.msra.mxu0 0.0
    %327 = vmatprep.subr.mxu0 0.0
    %328 = vmatpush1.xpose.msra.mxu0 0.0
    %329 = vmatprep.subr.mxu0 0.0
    %330 = vmatpush1.xpose.msra.mxu0 0.0
    %331 = vmatprep.subr.mxu0 0.0
    %332 = vmatpush1.xpose.msra.mxu0 0.0
    %333 = vmatprep.subr.mxu0 0.0
    %334 = vmatpush1.xpose.msra.mxu0 0.0
    %335 = vmatprep.subr.mxu0 0.0
    %336 = vmatpush1.xpose.msra.mxu0 0.0
    %337 = vmatprep.subr.mxu0 0.0
    %338 = vmatpush1.xpose.msra.mxu0 0.0
    %339 = vmatprep.subr.mxu0 0.0
    %340 = vmatpush1.xpose.msra.mxu0 0.0
    %341 = vmatprep.subr.mxu0 0.0
    %342 = vmatpush1.xpose.msra.mxu0 0.0
    %343 = vmatprep.subr.mxu0 0.0
    %344 = vmatpush1.xpose.msra.mxu0 0.0
    %345 = vmatprep.subr.mxu0 0.0
    %346 = vmatpush1.xpose.msra.mxu0 0.0
    %347 = vmatprep.subr.mxu0 0.0
    %348 = vmatpush1.xpose.msra.mxu0 0.0
    %349 = vmatprep.subr.mxu0 0.0
    %350 = vmatpush1.xpose.msra.mxu0 0.0
    %351 = vmatprep.mubr.f32.mxu0 0.0
    %352 = vmatmul.mubr.f32.gmra.mrb[0].mxu0 %v283
    %v353 = vpop.f32.mrb[0].mxu0
    %v354 = vadd.f32 0.0, %v353
    %v355 = vpop.f32.mrb[0].mxu0
    %356 = vdwg.mxu0
    %v357 = vsel %vm205, %v277, -inf
    %358 = vmax.xlane.f32.xlu0 %v357
    %v359 = vpop.xlane.xlu0 %358
    %v360 = vsel %vm205, %v354, -inf
    %361 = vmax.xlane.f32.xlu0 %v360
    %v362 = vpop.xlane.xlu0 %361
    %v363 = vsub.f32 %v277, %v359
    %v364 = vsub.f32 %v354, %v362
    %v365 = vmul.f32 %v363, 1.442695
    %v366 = vpow.pop %v365
    %v367 = vmul.f32 %v364, 1.442695
    %v368 = vpow.pop %v367
    %v369 = vsel %vm205, %v366, 0.0
    %370 = vadd.xlane.f32.xlu0 %v369
    %v371 = vpop.xlane.xlu0 %370
    %v372 = vsel %vm205, %v368, 0.0
    %373 = vadd.xlane.f32.xlu0 %v372
    %v374 = vpop.xlane.xlu0 %373
    %v375 = vrcp.pop %v371
    %v376 = vrcp.pop %v374
    %v377 = vmul.f32 %v366, %v375
    %v378 = vmul.f32 %v368, %v376
    %v379 = vadd.f32 %v377, 0.0
    %v380 = vadd.f32 %v378, 0.0
    %381 = vrot.lane.b32.xlu0 %v194, 64
    %v382 = vpop.permute.xlu0 %381
    %v385 = vsel %vm205, %v377, 0
    %387 = vmatprep.subr.mxu0 0.0
    %388 = vmatpush1.msra.mxu0 %v382
    %389 = vmatprep.subr.mxu0 0.0
    %390 = vmatpush1.msra.mxu0 0.0
    %391 = vmatprep.subr.mxu0 0.0
    %392 = vmatpush1.msra.mxu0 0.0
    %393 = vmatprep.subr.mxu0 0.0
    %394 = vmatpush1.msra.mxu0 0.0
    %395 = vmatprep.subr.mxu0 0.0
    %396 = vmatpush1.msra.mxu0 0.0
    %397 = vmatprep.subr.mxu0 0.0
    %398 = vmatpush1.msra.mxu0 0.0
    %399 = vmatprep.subr.mxu0 0.0
    %400 = vmatpush1.msra.mxu0 0.0
    %401 = vmatprep.subr.mxu0 0.0
    %402 = vmatpush1.msra.mxu0 0.0
    %403 = vmatprep.subr.mxu0 0.0
    %404 = vmatpush1.msra.mxu0 0.0
    %405 = vmatprep.subr.mxu0 0.0
    %406 = vmatpush1.msra.mxu0 0.0
    %407 = vmatprep.subr.mxu0 0.0
    %408 = vmatpush1.msra.mxu0 0.0
    %409 = vmatprep.subr.mxu0 0.0
    %410 = vmatpush1.msra.mxu0 0.0
    %411 = vmatprep.subr.mxu0 0.0
    %412 = vmatpush1.msra.mxu0 0.0
    %413 = vmatprep.subr.mxu0 0.0
    %414 = vmatpush1.msra.mxu0 0.0
    %415 = vmatprep.subr.mxu0 0.0
    %416 = vmatpush1.msra.mxu0 0.0
    %417 = vmatprep.subr.mxu0 0.0
    %418 = vmatpush1.msra.mxu0 0.0
    %419 = vmatprep.subr.mxu0 0.0
    %420 = vmatpush1.msra.mxu0 0.0
    %421 = vmatprep.subr.mxu0 0.0
    %422 = vmatpush1.msra.mxu0 0.0
    %423 = vmatprep.subr.mxu0 0.0
    %424 = vmatpush1.msra.mxu0 0.0
    %425 = vmatprep.subr.mxu0 0.0
    %426 = vmatpush1.msra.mxu0 0.0
    %427 = vmatprep.subr.mxu0 0.0
    %428 = vmatpush1.msra.mxu0 0.0
    %429 = vmatprep.subr.mxu0 0.0
    %430 = vmatpush1.msra.mxu0 0.0
    %431 = vmatprep.subr.mxu0 0.0
    %432 = vmatpush1.msra.mxu0 0.0
    %433 = vmatprep.subr.mxu0 0.0
    %434 = vmatpush1.msra.mxu0 0.0
    %435 = vmatprep.subr.mxu0 0.0
    %436 = vmatpush1.msra.mxu0 0.0
    %437 = vmatprep.subr.mxu0 0.0
    %438 = vmatpush1.msra.mxu0 0.0
    %439 = vmatprep.subr.mxu0 0.0
    %440 = vmatpush1.msra.mxu0 0.0
    %441 = vmatprep.subr.mxu0 0.0
    %442 = vmatpush1.msra.mxu0 0.0
    %443 = vmatprep.subr.mxu0 0.0
    %444 = vmatpush1.msra.mxu0 0.0
    %445 = vmatprep.subr.mxu0 0.0
    %446 = vmatpush1.msra.mxu0 0.0
    %447 = vmatprep.subr.mxu0 0.0
    %448 = vmatpush1.msra.mxu0 0.0
    %449 = vmatprep.subr.mxu0 0.0
    %450 = vmatpush1.msra.mxu0 0.0
    %451 = vmatprep.mubr.f32.mxu0 0.0
    %452 = vmatmul.mubr.f32.gmra.mrb[0].mxu0 %v385
    %v453 = vpop.f32.mrb[0].mxu0
    %v454 = vadd.f32 0.0, %v453
    %v455 = vpop.f32.mrb[0].mxu0
    %456 = vdwg.mxu0
    %457 = vrot.lane.b32.xlu0 %v199, 64
    %v458 = vpop.permute.xlu0 %457
    %v461 = vsel %vm205, %v378, 0
    %463 = vmatprep.subr.mxu0 0.0
    %464 = vmatpush1.msra.mxu0 %v458
    %465 = vmatprep.subr.mxu0 0.0
    %466 = vmatpush1.msra.mxu0 0.0
    %467 = vmatprep.subr.mxu0 0.0
    %468 = vmatpush1.msra.mxu0 0.0
    %469 = vmatprep.subr.mxu0 0.0
    %470 = vmatpush1.msra.mxu0 0.0
    %471 = vmatprep.subr.mxu0 0.0
    %472 = vmatpush1.msra.mxu0 0.0
    %473 = vmatprep.subr.mxu0 0.0
    %474 = vmatpush1.msra.mxu0 0.0
    %475 = vmatprep.subr.mxu0 0.0
    %476 = vmatpush1.msra.mxu0 0.0
    %477 = vmatprep.subr.mxu0 0.0
    %478 = vmatpush1.msra.mxu0 0.0
    %479 = vmatprep.subr.mxu0 0.0
    %480 = vmatpush1.msra.mxu0 0.0
    %481 = vmatprep.subr.mxu0 0.0
    %482 = vmatpush1.msra.mxu0 0.0
    %483 = vmatprep.subr.mxu0 0.0
    %484 = vmatpush1.msra.mxu0 0.0
    %485 = vmatprep.subr.mxu0 0.0
    %486 = vmatpush1.msra.mxu0 0.0
    %487 = vmatprep.subr.mxu0 0.0
    %488 = vmatpush1.msra.mxu0 0.0
    %489 = vmatprep.subr.mxu0 0.0
    %490 = vmatpush1.msra.mxu0 0.0
    %491 = vmatprep.subr.mxu0 0.0
    %492 = vmatpush1.msra.mxu0 0.0
    %493 = vmatprep.subr.mxu0 0.0
    %494 = vmatpush1.msra.mxu0 0.0
    %495 = vmatprep.subr.mxu0 0.0
    %496 = vmatpush1.msra.mxu0 0.0
    %497 = vmatprep.subr.mxu0 0.0
    %498 = vmatpush1.msra.mxu0 0.0
    %499 = vmatprep.subr.mxu0 0.0
    %500 = vmatpush1.msra.mxu0 0.0
    %501 = vmatprep.subr.mxu0 0.0
    %502 = vmatpush1.msra.mxu0 0.0
    %503 = vmatprep.subr.mxu0 0.0
    %504 = vmatpush1.msra.mxu0 0.0
    %505 = vmatprep.subr.mxu0 0.0
    %506 = vmatpush1.msra.mxu0 0.0
    %507 = vmatprep.subr.mxu0 0.0
    %508 = vmatpush1.msra.mxu0 0.0
    %509 = vmatprep.subr.mxu0 0.0
    %510 = vmatpush1.msra.mxu0 0.0
    %511 = vmatprep.subr.mxu0 0.0
    %512 = vmatpush1.msra.mxu0 0.0
    %513 = vmatprep.subr.mxu0 0.0
    %514 = vmatpush1.msra.mxu0 0.0
    %515 = vmatprep.subr.mxu0 0.0
    %516 = vmatpush1.msra.mxu0 0.0
    %517 = vmatprep.subr.mxu0 0.0
    %518 = vmatpush1.msra.mxu0 0.0
    %519 = vmatprep.subr.mxu0 0.0
    %520 = vmatpush1.msra.mxu0 0.0
    %521 = vmatprep.subr.mxu0 0.0
    %522 = vmatpush1.msra.mxu0 0.0
    %523 = vmatprep.subr.mxu0 0.0
    %524 = vmatpush1.msra.mxu0 0.0
    %525 = vmatprep.subr.mxu0 0.0
    %526 = vmatpush1.msra.mxu0 0.0
    %527 = vmatprep.mubr.f32.mxu0 0.0
    %528 = vmatmul.mubr.f32.gmra.mrb[0].mxu0 %v461
    %v529 = vpop.f32.mrb[0].mxu0
    %v530 = vadd.f32 0.0, %v529
    %v531 = vpop.f32.mrb[0].mxu0
    %532 = vdwg.mxu0
    %v533 = vld [vmem:[%s5] sm:$0xff]
    %534 = vrot.lane.b32.xlu0 %v194, 120
    %v535 = vpop.permute.xlu0 %534
    %536 = vrot.lane.b32.xlu0 %v194, 88
    %v537 = vpop.permute.xlu0 %536
    %v538 = vsel %vm205, %v535, 0
    %v540 = vsel %vm205, %v537, 0
    %542 = vmatprep.subr.mxu0 0.0
    %543 = vmatpush1.xpose.msra.mxu0 %v540
    %544 = vmatprep.subr.mxu0 0.0
    %545 = vmatpush1.xpose.msra.mxu0 0.0
    %546 = vmatprep.subr.mxu0 0.0
    %547 = vmatpush1.xpose.msra.mxu0 0.0
    %548 = vmatprep.subr.mxu0 0.0
    %549 = vmatpush1.xpose.msra.mxu0 0.0
    %550 = vmatprep.subr.mxu0 0.0
    %551 = vmatpush1.xpose.msra.mxu0 0.0
    %552 = vmatprep.subr.mxu0 0.0
    %553 = vmatpush1.xpose.msra.mxu0 0.0
    %554 = vmatprep.subr.mxu0 0.0
    %555 = vmatpush1.xpose.msra.mxu0 0.0
    %556 = vmatprep.subr.mxu0 0.0
    %557 = vmatpush1.xpose.msra.mxu0 0.0
    %558 = vmatprep.subr.mxu0 0.0
    %559 = vmatpush1.xpose.msra.mxu0 0.0
    %560 = vmatprep.subr.mxu0 0.0
    %561 = vmatpush1.xpose.msra.mxu0 0.0
    %562 = vmatprep.subr.mxu0 0.0
    %563 = vmatpush1.xpose.msra.mxu0 0.0
    %564 = vmatprep.subr.mxu0 0.0
    %565 = vmatpush1.xpose.msra.mxu0 0.0
    %566 = vmatprep.subr.mxu0 0.0
    %567 = vmatpush1.xpose.msra.mxu0 0.0
    %568 = vmatprep.subr.mxu0 0.0
    %569 = vmatpush1.xpose.msra.mxu0 0.0
    %570 = vmatprep.subr.mxu0 0.0
    %571 = vmatpush1.xpose.msra.mxu0 0.0
    %572 = vmatprep.subr.mxu0 0.0
    %573 = vmatpush1.xpose.msra.mxu0 0.0
    %574 = vmatprep.subr.mxu0 0.0
    %575 = vmatpush1.xpose.msra.mxu0 0.0
    %576 = vmatprep.subr.mxu0 0.0
    %577 = vmatpush1.xpose.msra.mxu0 0.0
    %578 = vmatprep.subr.mxu0 0.0
    %579 = vmatpush1.xpose.msra.mxu0 0.0
    %580 = vmatprep.subr.mxu0 0.0
    %581 = vmatpush1.xpose.msra.mxu0 0.0
    %582 = vmatprep.subr.mxu0 0.0
    %583 = vmatpush1.xpose.msra.mxu0 0.0
    %584 = vmatprep.subr.mxu0 0.0
    %585 = vmatpush1.xpose.msra.mxu0 0.0
    %586 = vmatprep.subr.mxu0 0.0
    %587 = vmatpush1.xpose.msra.mxu0 0.0
    %588 = vmatprep.subr.mxu0 0.0
    %589 = vmatpush1.xpose.msra.mxu0 0.0
    %590 = vmatprep.subr.mxu0 0.0
    %591 = vmatpush1.xpose.msra.mxu0 0.0
    %592 = vmatprep.subr.mxu0 0.0
    %593 = vmatpush1.xpose.msra.mxu0 0.0
    %594 = vmatprep.subr.mxu0 0.0
    %595 = vmatpush1.xpose.msra.mxu0 0.0
    %596 = vmatprep.subr.mxu0 0.0
    %597 = vmatpush1.xpose.msra.mxu0 0.0
    %598 = vmatprep.subr.mxu0 0.0
    %599 = vmatpush1.xpose.msra.mxu0 0.0
    %600 = vmatprep.subr.mxu0 0.0
    %601 = vmatpush1.xpose.msra.mxu0 0.0
    %602 = vmatprep.subr.mxu0 0.0
    %603 = vmatpush1.xpose.msra.mxu0 0.0
    %604 = vmatprep.subr.mxu0 0.0
    %605 = vmatpush1.xpose.msra.mxu0 0.0
    %606 = vmatprep.mubr.f32.mxu0 0.0
    %607 = vmatmul.mubr.f32.gmra.mrb[0].mxu0 %v538
    %v608 = vpop.f32.mrb[0].mxu0
    %v609 = vadd.f32 0.0, %v608
    %v610 = vpop.f32.mrb[0].mxu0
    %611 = vdwg.mxu0
    %612 = vrot.lane.b32.xlu0 %v199, 120
    %v613 = vpop.permute.xlu0 %612
    %614 = vrot.lane.b32.xlu0 %v199, 88
    %v615 = vpop.permute.xlu0 %614
    %v616 = vsel %vm205, %v613, 0
    %v618 = vsel %vm205, %v615, 0
    %620 = vmatprep.subr.mxu0 0.0
    %621 = vmatpush1.xpose.msra.mxu0 %v618
    %622 = vmatprep.subr.mxu0 0.0
    %623 = vmatpush1.xpose.msra.mxu0 0.0
    %624 = vmatprep.subr.mxu0 0.0
    %625 = vmatpush1.xpose.msra.mxu0 0.0
    %626 = vmatprep.subr.mxu0 0.0
    %627 = vmatpush1.xpose.msra.mxu0 0.0
    %628 = vmatprep.subr.mxu0 0.0
    %629 = vmatpush1.xpose.msra.mxu0 0.0
    %630 = vmatprep.subr.mxu0 0.0
    %631 = vmatpush1.xpose.msra.mxu0 0.0
    %632 = vmatprep.subr.mxu0 0.0
    %633 = vmatpush1.xpose.msra.mxu0 0.0
    %634 = vmatprep.subr.mxu0 0.0
    %635 = vmatpush1.xpose.msra.mxu0 0.0
    %636 = vmatprep.subr.mxu0 0.0
    %637 = vmatpush1.xpose.msra.mxu0 0.0
    %638 = vmatprep.subr.mxu0 0.0
    %639 = vmatpush1.xpose.msra.mxu0 0.0
    %640 = vmatprep.subr.mxu0 0.0
    %641 = vmatpush1.xpose.msra.mxu0 0.0
    %642 = vmatprep.subr.mxu0 0.0
    %643 = vmatpush1.xpose.msra.mxu0 0.0
    %644 = vmatprep.subr.mxu0 0.0
    %645 = vmatpush1.xpose.msra.mxu0 0.0
    %646 = vmatprep.subr.mxu0 0.0
    %647 = vmatpush1.xpose.msra.mxu0 0.0
    %648 = vmatprep.subr.mxu0 0.0
    %649 = vmatpush1.xpose.msra.mxu0 0.0
    %650 = vmatprep.subr.mxu0 0.0
    %651 = vmatpush1.xpose.msra.mxu0 0.0
    %652 = vmatprep.subr.mxu0 0.0
    %653 = vmatpush1.xpose.msra.mxu0 0.0
    %654 = vmatprep.subr.mxu0 0.0
    %655 = vmatpush1.xpose.msra.mxu0 0.0
    %656 = vmatprep.subr.mxu0 0.0
    %657 = vmatpush1.xpose.msra.mxu0 0.0
    %658 = vmatprep.subr.mxu0 0.0
    %659 = vmatpush1.xpose.msra.mxu0 0.0
    %660 = vmatprep.subr.mxu0 0.0
    %661 = vmatpush1.xpose.msra.mxu0 0.0
    %662 = vmatprep.subr.mxu0 0.0
    %663 = vmatpush1.xpose.msra.mxu0 0.0
    %664 = vmatprep.subr.mxu0 0.0
    %665 = vmatpush1.xpose.msra.mxu0 0.0
    %666 = vmatprep.subr.mxu0 0.0
    %667 = vmatpush1.xpose.msra.mxu0 0.0
    %668 = vmatprep.subr.mxu0 0.0
    %669 = vmatpush1.xpose.msra.mxu0 0.0
    %670 = vmatprep.subr.mxu0 0.0
    %671 = vmatpush1.xpose.msra.mxu0 0.0
    %672 = vmatprep.subr.mxu0 0.0
    %673 = vmatpush1.xpose.msra.mxu0 0.0
    %674 = vmatprep.subr.mxu0 0.0
    %675 = vmatpush1.xpose.msra.mxu0 0.0
    %676 = vmatprep.subr.mxu0 0.0
    %677 = vmatpush1.xpose.msra.mxu0 0.0
    %678 = vmatprep.subr.mxu0 0.0
    %679 = vmatpush1.xpose.msra.mxu0 0.0
    %680 = vmatprep.subr.mxu0 0.0
    %681 = vmatpush1.xpose.msra.mxu0 0.0
    %682 = vmatprep.subr.mxu0 0.0
    %683 = vmatpush1.xpose.msra.mxu0 0.0
    %684 = vmatprep.mubr.f32.mxu0 0.0
    %685 = vmatmul.mubr.f32.gmra.mrb[0].mxu0 %v616
    %v686 = vpop.f32.mrb[0].mxu0
    %v687 = vadd.f32 0.0, %v686
    %v688 = vpop.f32.mrb[0].mxu0
    %689 = vdwg.mxu0
    %v690 = vsel %vm205, %v609, -inf
    %691 = vmax.xlane.f32.xlu0 %v690
    %v692 = vpop.xlane.xlu0 %691
    %v693 = vsel %vm205, %v687, -inf
    %694 = vmax.xlane.f32.xlu0 %v693
    %v695 = vpop.xlane.xlu0 %694
    %v696 = vsub.f32 %v609, %v692
    %v697 = vsub.f32 %v687, %v695
    %v698 = vmul.f32 %v696, 1.442695
    %v699 = vpow.pop %v698
    %v700 = vmul.f32 %v697, 1.442695
    %v701 = vpow.pop %v700
    %v702 = vsel %vm205, %v699, 0.0
    %703 = vadd.xlane.f32.xlu0 %v702
    %v704 = vpop.xlane.xlu0 %703
    %v705 = vsel %vm205, %v701, 0.0
    %706 = vadd.xlane.f32.xlu0 %v705
    %v707 = vpop.xlane.xlu0 %706
    %v708 = vrcp.pop %v704
    %v709 = vrcp.pop %v707
    %v710 = vmul.f32 %v699, %v708
    %v711 = vmul.f32 %v701, %v709
    %v712 = vadd.f32 %v379, %v710
    %v713 = vadd.f32 %v380, %v711
    %714 = vrot.lane.b32.xlu0 %v194, 56
    %v715 = vpop.permute.xlu0 %714
    %v718 = vsel %vm205, %v710, 0
    %720 = vmatprep.subr.mxu0 0.0
    %721 = vmatpush1.msra.mxu0 %v715
    %722 = vmatprep.subr.mxu0 0.0
    %723 = vmatpush1.msra.mxu0 0.0
    %724 = vmatprep.subr.mxu0 0.0
    %725 = vmatpush1.msra.mxu0 0.0
    %726 = vmatprep.subr.mxu0 0.0
    %727 = vmatpush1.msra.mxu0 0.0
    %728 = vmatprep.subr.mxu0 0.0
    %729 = vmatpush1.msra.mxu0 0.0
    %730 = vmatprep.subr.mxu0 0.0
    %731 = vmatpush1.msra.mxu0 0.0
    %732 = vmatprep.subr.mxu0 0.0
    %733 = vmatpush1.msra.mxu0 0.0
    %734 = vmatprep.subr.mxu0 0.0
    %735 = vmatpush1.msra.mxu0 0.0
    %736 = vmatprep.subr.mxu0 0.0
    %737 = vmatpush1.msra.mxu0 0.0
    %738 = vmatprep.subr.mxu0 0.0
    %739 = vmatpush1.msra.mxu0 0.0
    %740 = vmatprep.subr.mxu0 0.0
    %741 = vmatpush1.msra.mxu0 0.0
    %742 = vmatprep.subr.mxu0 0.0
    %743 = vmatpush1.msra.mxu0 0.0
    %744 = vmatprep.subr.mxu0 0.0
    %745 = vmatpush1.msra.mxu0 0.0
    %746 = vmatprep.subr.mxu0 0.0
    %747 = vmatpush1.msra.mxu0 0.0
    %748 = vmatprep.subr.mxu0 0.0
    %749 = vmatpush1.msra.mxu0 0.0
    %750 = vmatprep.subr.mxu0 0.0
    %751 = vmatpush1.msra.mxu0 0.0
    %752 = vmatprep.subr.mxu0 0.0
    %753 = vmatpush1.msra.mxu0 0.0
    %754 = vmatprep.subr.mxu0 0.0
    %755 = vmatpush1.msra.mxu0 0.0
    %756 = vmatprep.subr.mxu0 0.0
    %757 = vmatpush1.msra.mxu0 0.0
    %758 = vmatprep.subr.mxu0 0.0
    %759 = vmatpush1.msra.mxu0 0.0
    %760 = vmatprep.subr.mxu0 0.0
    %761 = vmatpush1.msra.mxu0 0.0
    %762 = vmatprep.subr.mxu0 0.0
    %763 = vmatpush1.msra.mxu0 0.0
    %764 = vmatprep.subr.mxu0 0.0
    %765 = vmatpush1.msra.mxu0 0.0
    %766 = vmatprep.subr.mxu0 0.0
    %767 = vmatpush1.msra.mxu0 0.0
    %768 = vmatprep.subr.mxu0 0.0
    %769 = vmatpush1.msra.mxu0 0.0
    %770 = vmatprep.subr.mxu0 0.0
    %771 = vmatpush1.msra.mxu0 0.0
    %772 = vmatprep.subr.mxu0 0.0
    %773 = vmatpush1.msra.mxu0 0.0
    %774 = vmatprep.subr.mxu0 0.0
    %775 = vmatpush1.msra.mxu0 0.0
    %776 = vmatprep.subr.mxu0 0.0
    %777 = vmatpush1.msra.mxu0 0.0
    %778 = vmatprep.subr.mxu0 0.0
    %779 = vmatpush1.msra.mxu0 0.0
    %780 = vmatprep.subr.mxu0 0.0
    %781 = vmatpush1.msra.mxu0 0.0
    %782 = vmatprep.subr.mxu0 0.0
    %783 = vmatpush1.msra.mxu0 0.0
    %784 = vmatprep.mubr.f32.mxu0 0.0
    %785 = vmatmul.mubr.f32.gmra.mrb[0].mxu0 %v718
    %v786 = vpop.f32.mrb[0].mxu0
    %v787 = vadd.f32 0.0, %v786
    %v788 = vpop.f32.mrb[0].mxu0
    %789 = vdwg.mxu0
    %790 = vrot.lane.b32.xlu0 %v199, 56
    %v791 = vpop.permute.xlu0 %790
    %v794 = vsel %vm205, %v711, 0
    %796 = vmatprep.subr.mxu0 0.0
    %797 = vmatpush1.msra.mxu0 %v791
    %798 = vmatprep.subr.mxu0 0.0
    %799 = vmatpush1.msra.mxu0 0.0
    %800 = vmatprep.subr.mxu0 0.0
    %801 = vmatpush1.msra.mxu0 0.0
    %802 = vmatprep.subr.mxu0 0.0
    %803 = vmatpush1.msra.mxu0 0.0
    %804 = vmatprep.subr.mxu0 0.0
    %805 = vmatpush1.msra.mxu0 0.0
    %806 = vmatprep.subr.mxu0 0.0
    %807 = vmatpush1.msra.mxu0 0.0
    %808 = vmatprep.subr.mxu0 0.0
    %809 = vmatpush1.msra.mxu0 0.0
    %810 = vmatprep.subr.mxu0 0.0
    %811 = vmatpush1.msra.mxu0 0.0
    %812 = vmatprep.subr.mxu0 0.0
    %813 = vmatpush1.msra.mxu0 0.0
    %814 = vmatprep.subr.mxu0 0.0
    %815 = vmatpush1.msra.mxu0 0.0
    %816 = vmatprep.subr.mxu0 0.0
    %817 = vmatpush1.msra.mxu0 0.0
    %818 = vmatprep.subr.mxu0 0.0
    %819 = vmatpush1.msra.mxu0 0.0
    %820 = vmatprep.subr.mxu0 0.0
    %821 = vmatpush1.msra.mxu0 0.0
    %822 = vmatprep.subr.mxu0 0.0
    %823 = vmatpush1.msra.mxu0 0.0
    %824 = vmatprep.subr.mxu0 0.0
    %825 = vmatpush1.msra.mxu0 0.0
    %826 = vmatprep.subr.mxu0 0.0
    %827 = vmatpush1.msra.mxu0 0.0
    %828 = vmatprep.subr.mxu0 0.0
    %829 = vmatpush1.msra.mxu0 0.0
    %830 = vmatprep.subr.mxu0 0.0
    %831 = vmatpush1.msra.mxu0 0.0
    %832 = vmatprep.subr.mxu0 0.0
    %833 = vmatpush1.msra.mxu0 0.0
    %834 = vmatprep.subr.mxu0 0.0
    %835 = vmatpush1.msra.mxu0 0.0
    %836 = vmatprep.subr.mxu0 0.0
    %837 = vmatpush1.msra.mxu0 0.0
    %838 = vmatprep.subr.mxu0 0.0
    %839 = vmatpush1.msra.mxu0 0.0
    %840 = vmatprep.subr.mxu0 0.0
    %841 = vmatpush1.msra.mxu0 0.0
    %842 = vmatprep.subr.mxu0 0.0
    %843 = vmatpush1.msra.mxu0 0.0
    %844 = vmatprep.subr.mxu0 0.0
    %845 = vmatpush1.msra.mxu0 0.0
    %846 = vmatprep.subr.mxu0 0.0
    %847 = vmatpush1.msra.mxu0 0.0
    %848 = vmatprep.subr.mxu0 0.0
    %849 = vmatpush1.msra.mxu0 0.0
    %850 = vmatprep.subr.mxu0 0.0
    %851 = vmatpush1.msra.mxu0 0.0
    %852 = vmatprep.subr.mxu0 0.0
    %853 = vmatpush1.msra.mxu0 0.0
    %854 = vmatprep.subr.mxu0 0.0
    %855 = vmatpush1.msra.mxu0 0.0
    %856 = vmatprep.subr.mxu0 0.0
    %857 = vmatpush1.msra.mxu0 0.0
    %858 = vmatprep.subr.mxu0 0.0
    %859 = vmatpush1.msra.mxu0 0.0
    %860 = vmatprep.mubr.f32.mxu0 0.0
    %861 = vmatmul.mubr.f32.gmra.mrb[0].mxu0 %v794
    %v862 = vpop.f32.mrb[0].mxu0
    %v863 = vadd.f32 0.0, %v862
    %v864 = vpop.f32.mrb[0].mxu0
    %865 = vdwg.mxu0
    %v866 = vld [vmem:[%s5 + $0x8] sm:$0xff]
    %v868 = vsel %vm205, %v787, 0
    %v871 = vsel %vm205, %v863, 0
    %873 = vmatprep.subr.mxu0 0.0
    %874 = vmatpush1.msra.mxu0 %v866
    %875 = vmatprep.subr.mxu0 0.0
    %876 = vmatpush1.msra.mxu0 0.0
    %877 = vmatprep.subr.mxu0 0.0
    %878 = vmatpush1.msra.mxu0 0.0
    %879 = vmatprep.subr.mxu0 0.0
    %880 = vmatpush1.msra.mxu0 0.0
    %881 = vmatprep.subr.mxu0 0.0
    %882 = vmatpush1.msra.mxu0 0.0
    %883 = vmatprep.subr.mxu0 0.0
    %884 = vmatpush1.msra.mxu0 0.0
    %885 = vmatprep.subr.mxu0 0.0
    %886 = vmatpush1.msra.mxu0 0.0
    %887 = vmatprep.subr.mxu0 0.0
    %888 = vmatpush1.msra.mxu0 0.0
    %889 = vmatprep.subr.mxu0 0.0
    %890 = vmatpush1.msra.mxu0 0.0
    %891 = vmatprep.subr.mxu0 0.0
    %892 = vmatpush1.msra.mxu0 0.0
    %893 = vmatprep.subr.mxu0 0.0
    %894 = vmatpush1.msra.mxu0 0.0
    %895 = vmatprep.subr.mxu0 0.0
    %896 = vmatpush1.msra.mxu0 0.0
    %897 = vmatprep.subr.mxu0 0.0
    %898 = vmatpush1.msra.mxu0 0.0
    %899 = vmatprep.subr.mxu0 0.0
    %900 = vmatpush1.msra.mxu0 0.0
    %901 = vmatprep.subr.mxu0 0.0
    %902 = vmatpush1.msra.mxu0 0.0
    %903 = vmatprep.subr.mxu0 0.0
    %904 = vmatpush1.msra.mxu0 0.0
    %905 = vmatprep.subr.mxu0 0.0
    %906 = vmatpush1.msra.mxu0 0.0
    %907 = vmatprep.subr.mxu0 0.0
    %908 = vmatpush1.msra.mxu0 0.0
    %909 = vmatprep.subr.mxu0 0.0
    %910 = vmatpush1.msra.mxu0 0.0
    %911 = vmatprep.subr.mxu0 0.0
    %912 = vmatpush1.msra.mxu0 0.0
    %913 = vmatprep.subr.mxu0 0.0
    %914 = vmatpush1.msra.mxu0 0.0
    %915 = vmatprep.subr.mxu0 0.0
    %916 = vmatpush1.msra.mxu0 0.0
    %917 = vmatprep.subr.mxu0 0.0
    %918 = vmatpush1.msra.mxu0 0.0
    %919 = vmatprep.subr.mxu0 0.0
    %920 = vmatpush1.msra.mxu0 0.0
    %921 = vmatprep.subr.mxu0 0.0
    %922 = vmatpush1.msra.mxu0 0.0
    %923 = vmatprep.subr.mxu0 0.0
    %924 = vmatpush1.msra.mxu0 0.0
    %925 = vmatprep.subr.mxu0 0.0
    %926 = vmatpush1.msra.mxu0 0.0
    %927 = vmatprep.subr.mxu0 0.0
    %928 = vmatpush1.msra.mxu0 0.0
    %929 = vmatprep.subr.mxu0 0.0
    %930 = vmatpush1.msra.mxu0 0.0
    %931 = vmatprep.subr.mxu0 0.0
    %932 = vmatpush1.msra.mxu0 0.0
    %933 = vmatprep.subr.mxu0 0.0
    %934 = vmatpush1.msra.mxu0 0.0
    %935 = vmatprep.subr.mxu0 0.0
    %936 = vmatpush1.msra.mxu0 0.0
    %937 = vmatprep.mubr.f32.mxu0 0.0
    %938 = vmatmul.mubr.f32.gmra.mrb[0].mxu0 %v868
    %v939 = vpop.f32.mrb[0].mxu0
    %v940 = vadd.f32 0.0, %v939
    %v941 = vpop.f32.mrb[0].mxu0
    %942 = vmatprep.mubr.f32.mxu0 0.0
    %943 = vmatmul.mubr.f32.gmra.mrb[0].mxu0 %v871
    %v944 = vpop.f32.mrb[0].mxu0
    %v945 = vadd.f32 0.0, %v944
    %v946 = vpop.f32.mrb[0].mxu0
    %947 = vdwg.mxu0
    %v949 = vsel %vm205, %v454, 0
    %v952 = vsel %vm205, %v530, 0
    %954 = vmatprep.subr.mxu0 0.0
    %955 = vmatpush1.msra.mxu0 %v533
    %956 = vmatprep.subr.mxu0 0.0
    %957 = vmatpush1.msra.mxu0 0.0
    %958 = vmatprep.subr.mxu0 0.0
    %959 = vmatpush1.msra.mxu0 0.0
    %960 = vmatprep.subr.mxu0 0.0
    %961 = vmatpush1.msra.mxu0 0.0
    %962 = vmatprep.subr.mxu0 0.0
    %963 = vmatpush1.msra.mxu0 0.0
    %964 = vmatprep.subr.mxu0 0.0
    %965 = vmatpush1.msra.mxu0 0.0
    %966 = vmatprep.subr.mxu0 0.0
    %967 = vmatpush1.msra.mxu0 0.0
    %968 = vmatprep.subr.mxu0 0.0
    %969 = vmatpush1.msra.mxu0 0.0
    %970 = vmatprep.subr.mxu0 0.0
    %971 = vmatpush1.msra.mxu0 0.0
    %972 = vmatprep.subr.mxu0 0.0
    %973 = vmatpush1.msra.mxu0 0.0
    %974 = vmatprep.subr.mxu0 0.0
    %975 = vmatpush1.msra.mxu0 0.0
    %976 = vmatprep.subr.mxu0 0.0
    %977 = vmatpush1.msra.mxu0 0.0
    %978 = vmatprep.subr.mxu0 0.0
    %979 = vmatpush1.msra.mxu0 0.0
    %980 = vmatprep.subr.mxu0 0.0
    %981 = vmatpush1.msra.mxu0 0.0
    %982 = vmatprep.subr.mxu0 0.0
    %983 = vmatpush1.msra.mxu0 0.0
    %984 = vmatprep.subr.mxu0 0.0
    %985 = vmatpush1.msra.mxu0 0.0
    %986 = vmatprep.subr.mxu0 0.0
    %987 = vmatpush1.msra.mxu0 0.0
    %988 = vmatprep.subr.mxu0 0.0
    %989 = vmatpush1.msra.mxu0 0.0
    %990 = vmatprep.subr.mxu0 0.0
    %991 = vmatpush1.msra.mxu0 0.0
    %992 = vmatprep.subr.mxu0 0.0
    %993 = vmatpush1.msra.mxu0 0.0
    %994 = vmatprep.subr.mxu0 0.0
    %995 = vmatpush1.msra.mxu0 0.0
    %996 = vmatprep.subr.mxu0 0.0
    %997 = vmatpush1.msra.mxu0 0.0
    %998 = vmatprep.subr.mxu0 0.0
    %999 = vmatpush1.msra.mxu0 0.0
    %1000 = vmatprep.subr.mxu0 0.0
    %1001 = vmatpush1.msra.mxu0 0.0
    %1002 = vmatprep.subr.mxu0 0.0
    %1003 = vmatpush1.msra.mxu0 0.0
    %1004 = vmatprep.subr.mxu0 0.0
    %1005 = vmatpush1.msra.mxu0 0.0
    %1006 = vmatprep.subr.mxu0 0.0
    %1007 = vmatpush1.msra.mxu0 0.0
    %1008 = vmatprep.subr.mxu0 0.0
    %1009 = vmatpush1.msra.mxu0 0.0
    %1010 = vmatprep.subr.mxu0 0.0
    %1011 = vmatpush1.msra.mxu0 0.0
    %1012 = vmatprep.subr.mxu0 0.0
    %1013 = vmatpush1.msra.mxu0 0.0
    %1014 = vmatprep.subr.mxu0 0.0
    %1015 = vmatpush1.msra.mxu0 0.0
    %1016 = vmatprep.subr.mxu0 0.0
    %1017 = vmatpush1.msra.mxu0 0.0
    %1018 = vmatprep.mubr.f32.mxu0 0.0
    %1019 = vmatmul.mubr.f32.gmra.mrb[0].mxu0 %v949
    %v1020 = vpop.f32.mrb[0].mxu0
    %v1021 = vadd.f32 %v940, %v1020
    %v1022 = vpop.f32.mrb[0].mxu0
    %1023 = vmatprep.mubr.f32.mxu0 0.0
    %1024 = vmatmul.mubr.f32.gmra.mrb[0].mxu0 %v952
    %v1025 = vpop.f32.mrb[0].mxu0
    %v1026 = vadd.f32 %v945, %v1025
    %v1027 = vpop.f32.mrb[0].mxu0
    %1028 = vdwg.mxu0
    %1029 = vrot.lane.b32.xlu0 %v194, 112
    %v1030 = vpop.permute.xlu0 %1029
    %1031 = vrot.lane.b32.xlu0 %v194, 80
    %v1032 = vpop.permute.xlu0 %1031
    %v1033 = vsel %vm205, %v1030, 0
    %v1035 = vsel %vm205, %v1032, 0
    %1037 = vmatprep.subr.mxu0 0.0
    %1038 = vmatpush1.xpose.msra.mxu0 %v1035
    %1039 = vmatprep.subr.mxu0 0.0
    %1040 = vmatpush1.xpose.msra.mxu0 0.0
    %1041 = vmatprep.subr.mxu0 0.0
    %1042 = vmatpush1.xpose.msra.mxu0 0.0
    %1043 = vmatprep.subr.mxu0 0.0
    %1044 = vmatpush1.xpose.msra.mxu0 0.0
    %1045 = vmatprep.subr.mxu0 0.0
    %1046 = vmatpush1.xpose.msra.mxu0 0.0
    %1047 = vmatprep.subr.mxu0 0.0
    %1048 = vmatpush1.xpose.msra.mxu0 0.0
    %1049 = vmatprep.subr.mxu0 0.0
    %1050 = vmatpush1.xpose.msra.mxu0 0.0
    %1051 = vmatprep.subr.mxu0 0.0
    %1052 = vmatpush1.xpose.msra.mxu0 0.0
    %1053 = vmatprep.subr.mxu0 0.0
    %1054 = vmatpush1.xpose.msra.mxu0 0.0
    %1055 = vmatprep.subr.mxu0 0.0
    %1056 = vmatpush1.xpose.msra.mxu0 0.0
    %1057 = vmatprep.subr.mxu0 0.0
    %1058 = vmatpush1.xpose.msra.mxu0 0.0
    %1059 = vmatprep.subr.mxu0 0.0
    %1060 = vmatpush1.xpose.msra.mxu0 0.0
    %1061 = vmatprep.subr.mxu0 0.0
    %1062 = vmatpush1.xpose.msra.mxu0 0.0
    %1063 = vmatprep.subr.mxu0 0.0
    %1064 = vmatpush1.xpose.msra.mxu0 0.0
    %1065 = vmatprep.subr.mxu0 0.0
    %1066 = vmatpush1.xpose.msra.mxu0 0.0
    %1067 = vmatprep.subr.mxu0 0.0
    %1068 = vmatpush1.xpose.msra.mxu0 0.0
    %1069 = vmatprep.subr.mxu0 0.0
    %1070 = vmatpush1.xpose.msra.mxu0 0.0
    %1071 = vmatprep.subr.mxu0 0.0
    %1072 = vmatpush1.xpose.msra.mxu0 0.0
    %1073 = vmatprep.subr.mxu0 0.0
    %1074 = vmatpush1.xpose.msra.mxu0 0.0
    %1075 = vmatprep.subr.mxu0 0.0
    %1076 = vmatpush1.xpose.msra.mxu0 0.0
    %1077 = vmatprep.subr.mxu0 0.0
    %1078 = vmatpush1.xpose.msra.mxu0 0.0
    %1079 = vmatprep.subr.mxu0 0.0
    %1080 = vmatpush1.xpose.msra.mxu0 0.0
    %1081 = vmatprep.subr.mxu0 0.0
    %1082 = vmatpush1.xpose.msra.mxu0 0.0
    %1083 = vmatprep.subr.mxu0 0.0
    %1084 = vmatpush1.xpose.msra.mxu0 0.0
    %1085 = vmatprep.subr.mxu0 0.0
    %1086 = vmatpush1.xpose.msra.mxu0 0.0
    %1087 = vmatprep.subr.mxu0 0.0
    %1088 = vmatpush1.xpose.msra.mxu0 0.0
    %1089 = vmatprep.subr.mxu0 0.0
    %1090 = vmatpush1.xpose.msra.mxu0 0.0
    %1091 = vmatprep.subr.mxu0 0.0
    %1092 = vmatpush1.xpose.msra.mxu0 0.0
    %1093 = vmatprep.subr.mxu0 0.0
    %1094 = vmatpush1.xpose.msra.mxu0 0.0
    %1095 = vmatprep.subr.mxu0 0.0
    %1096 = vmatpush1.xpose.msra.mxu0 0.0
    %1097 = vmatprep.subr.mxu0 0.0
    %1098 = vmatpush1.xpose.msra.mxu0 0.0
    %1099 = vmatprep.subr.mxu0 0.0
    %1100 = vmatpush1.xpose.msra.mxu0 0.0
    %1101 = vmatprep.mubr.f32.mxu0 0.0
    %1102 = vmatmul.mubr.f32.gmra.mrb[0].mxu0 %v1033
    %v1103 = vpop.f32.mrb[0].mxu0
    %v1104 = vadd.f32 0.0, %v1103
    %v1105 = vpop.f32.mrb[0].mxu0
    %1106 = vdwg.mxu0
    %1107 = vrot.lane.b32.xlu0 %v199, 112
    %v1108 = vpop.permute.xlu0 %1107
    %1109 = vrot.lane.b32.xlu0 %v199, 80
    %v1110 = vpop.permute.xlu0 %1109
    %v1111 = vsel %vm205, %v1108, 0
    %v1113 = vsel %vm205, %v1110, 0
    %1115 = vmatprep.subr.mxu0 0.0
    %1116 = vmatpush1.xpose.msra.mxu0 %v1113
    %1117 = vmatprep.subr.mxu0 0.0
    %1118 = vmatpush1.xpose.msra.mxu0 0.0
    %1119 = vmatprep.subr.mxu0 0.0
    %1120 = vmatpush1.xpose.msra.mxu0 0.0
    %1121 = vmatprep.subr.mxu0 0.0
    %1122 = vmatpush1.xpose.msra.mxu0 0.0
    %1123 = vmatprep.subr.mxu0 0.0
    %1124 = vmatpush1.xpose.msra.mxu0 0.0
    %1125 = vmatprep.subr.mxu0 0.0
    %1126 = vmatpush1.xpose.msra.mxu0 0.0
    %1127 = vmatprep.subr.mxu0 0.0
    %1128 = vmatpush1.xpose.msra.mxu0 0.0
    %1129 = vmatprep.subr.mxu0 0.0
    %1130 = vmatpush1.xpose.msra.mxu0 0.0
    %1131 = vmatprep.subr.mxu0 0.0
    %1132 = vmatpush1.xpose.msra.mxu0 0.0
    %1133 = vmatprep.subr.mxu0 0.0
    %1134 = vmatpush1.xpose.msra.mxu0 0.0
    %1135 = vmatprep.subr.mxu0 0.0
    %1136 = vmatpush1.xpose.msra.mxu0 0.0
    %1137 = vmatprep.subr.mxu0 0.0
    %1138 = vmatpush1.xpose.msra.mxu0 0.0
    %1139 = vmatprep.subr.mxu0 0.0
    %1140 = vmatpush1.xpose.msra.mxu0 0.0
    %1141 = vmatprep.subr.mxu0 0.0
    %1142 = vmatpush1.xpose.msra.mxu0 0.0
    %1143 = vmatprep.subr.mxu0 0.0
    %1144 = vmatpush1.xpose.msra.mxu0 0.0
    %1145 = vmatprep.subr.mxu0 0.0
    %1146 = vmatpush1.xpose.msra.mxu0 0.0
    %1147 = vmatprep.subr.mxu0 0.0
    %1148 = vmatpush1.xpose.msra.mxu0 0.0
    %1149 = vmatprep.subr.mxu0 0.0
    %1150 = vmatpush1.xpose.msra.mxu0 0.0
    %1151 = vmatprep.subr.mxu0 0.0
    %1152 = vmatpush1.xpose.msra.mxu0 0.0
    %1153 = vmatprep.subr.mxu0 0.0
    %1154 = vmatpush1.xpose.msra.mxu0 0.0
    %1155 = vmatprep.subr.mxu0 0.0
    %1156 = vmatpush1.xpose.msra.mxu0 0.0
    %1157 = vmatprep.subr.mxu0 0.0
    %1158 = vmatpush1.xpose.msra.mxu0 0.0
    %1159 = vmatprep.subr.mxu0 0.0
    %1160 = vmatpush1.xpose.msra.mxu0 0.0
    %1161 = vmatprep.subr.mxu0 0.0
    %1162 = vmatpush1.xpose.msra.mxu0 0.0
    %1163 = vmatprep.subr.mxu0 0.0
    %1164 = vmatpush1.xpose.msra.mxu0 0.0
    %1165 = vmatprep.subr.mxu0 0.0
    %1166 = vmatpush1.xpose.msra.mxu0 0.0
    %1167 = vmatprep.subr.mxu0 0.0
    %1168 = vmatpush1.xpose.msra.mxu0 0.0
    %1169 = vmatprep.subr.mxu0 0.0
    %1170 = vmatpush1.xpose.msra.mxu0 0.0
    %1171 = vmatprep.subr.mxu0 0.0
    %1172 = vmatpush1.xpose.msra.mxu0 0.0
    %1173 = vmatprep.subr.mxu0 0.0
    %1174 = vmatpush1.xpose.msra.mxu0 0.0
    %1175 = vmatprep.subr.mxu0 0.0
    %1176 = vmatpush1.xpose.msra.mxu0 0.0
    %1177 = vmatprep.subr.mxu0 0.0
    %1178 = vmatpush1.xpose.msra.mxu0 0.0
    %1179 = vmatprep.mubr.f32.mxu0 0.0
    %1180 = vmatmul.mubr.f32.gmra.mrb[0].mxu0 %v1111
    %v1181 = vpop.f32.mrb[0].mxu0
    %v1182 = vadd.f32 0.0, %v1181
    %v1183 = vpop.f32.mrb[0].mxu0
    %1184 = vdwg.mxu0
    %v1185 = vsel %vm205, %v1104, -inf
    %1186 = vmax.xlane.f32.xlu0 %v1185
    %v1187 = vpop.xlane.xlu0 %1186
    %v1188 = vsel %vm205, %v1182, -inf
    %1189 = vmax.xlane.f32.xlu0 %v1188
    %v1190 = vpop.xlane.xlu0 %1189
    %v1191 = vsub.f32 %v1104, %v1187
    %v1192 = vsub.f32 %v1182, %v1190
    %v1193 = vmul.f32 %v1191, 1.442695
    %v1194 = vpow.pop %v1193
    %v1195 = vmul.f32 %v1192, 1.442695
    %v1196 = vpow.pop %v1195
    %v1197 = vsel %vm205, %v1194, 0.0
    %1198 = vadd.xlane.f32.xlu0 %v1197
    %v1199 = vpop.xlane.xlu0 %1198
    %v1200 = vsel %vm205, %v1196, 0.0
    %1201 = vadd.xlane.f32.xlu0 %v1200
    %v1202 = vpop.xlane.xlu0 %1201
    %v1203 = vrcp.pop %v1199
    %v1204 = vrcp.pop %v1202
    %v1205 = vmul.f32 %v1194, %v1203
    %v1206 = vmul.f32 %v1196, %v1204
    %v1207 = vadd.f32 %v712, %v1205
    %v1208 = vadd.f32 %v713, %v1206
    %1209 = vrot.lane.b32.xlu0 %v194, 48
    %v1210 = vpop.permute.xlu0 %1209
    %v1213 = vsel %vm205, %v1205, 0
    %1215 = vmatprep.subr.mxu0 0.0
    %1216 = vmatpush1.msra.mxu0 %v1210
    %1217 = vmatprep.subr.mxu0 0.0
    %1218 = vmatpush1.msra.mxu0 0.0
    %1219 = vmatprep.subr.mxu0 0.0
    %1220 = vmatpush1.msra.mxu0 0.0
    %1221 = vmatprep.subr.mxu0 0.0
    %1222 = vmatpush1.msra.mxu0 0.0
    %1223 = vmatprep.subr.mxu0 0.0
    %1224 = vmatpush1.msra.mxu0 0.0
    %1225 = vmatprep.subr.mxu0 0.0
    %1226 = vmatpush1.msra.mxu0 0.0
    %1227 = vmatprep.subr.mxu0 0.0
    %1228 = vmatpush1.msra.mxu0 0.0
    %1229 = vmatprep.subr.mxu0 0.0
    %1230 = vmatpush1.msra.mxu0 0.0
    %1231 = vmatprep.subr.mxu0 0.0
    %1232 = vmatpush1.msra.mxu0 0.0
    %1233 = vmatprep.subr.mxu0 0.0
    %1234 = vmatpush1.msra.mxu0 0.0
    %1235 = vmatprep.subr.mxu0 0.0
    %1236 = vmatpush1.msra.mxu0 0.0
    %1237 = vmatprep.subr.mxu0 0.0
    %1238 = vmatpush1.msra.mxu0 0.0
    %1239 = vmatprep.subr.mxu0 0.0
    %1240 = vmatpush1.msra.mxu0 0.0
    %1241 = vmatprep.subr.mxu0 0.0
    %1242 = vmatpush1.msra.mxu0 0.0
    %1243 = vmatprep.subr.mxu0 0.0
    %1244 = vmatpush1.msra.mxu0 0.0
    %1245 = vmatprep.subr.mxu0 0.0
    %1246 = vmatpush1.msra.mxu0 0.0
    %1247 = vmatprep.subr.mxu0 0.0
    %1248 = vmatpush1.msra.mxu0 0.0
    %1249 = vmatprep.subr.mxu0 0.0
    %1250 = vmatpush1.msra.mxu0 0.0
    %1251 = vmatprep.subr.mxu0 0.0
    %1252 = vmatpush1.msra.mxu0 0.0
    %1253 = vmatprep.subr.mxu0 0.0
    %1254 = vmatpush1.msra.mxu0 0.0
    %1255 = vmatprep.subr.mxu0 0.0
    %1256 = vmatpush1.msra.mxu0 0.0
    %1257 = vmatprep.subr.mxu0 0.0
    %1258 = vmatpush1.msra.mxu0 0.0
    %1259 = vmatprep.subr.mxu0 0.0
    %1260 = vmatpush1.msra.mxu0 0.0
    %1261 = vmatprep.subr.mxu0 0.0
    %1262 = vmatpush1.msra.mxu0 0.0
    %1263 = vmatprep.subr.mxu0 0.0
    %1264 = vmatpush1.msra.mxu0 0.0
    %1265 = vmatprep.subr.mxu0 0.0
    %1266 = vmatpush1.msra.mxu0 0.0
    %1267 = vmatprep.subr.mxu0 0.0
    %1268 = vmatpush1.msra.mxu0 0.0
    %1269 = vmatprep.subr.mxu0 0.0
    %1270 = vmatpush1.msra.mxu0 0.0
    %1271 = vmatprep.subr.mxu0 0.0
    %1272 = vmatpush1.msra.mxu0 0.0
    %1273 = vmatprep.subr.mxu0 0.0
    %1274 = vmatpush1.msra.mxu0 0.0
    %1275 = vmatprep.subr.mxu0 0.0
    %1276 = vmatpush1.msra.mxu0 0.0
    %1277 = vmatprep.subr.mxu0 0.0
    %1278 = vmatpush1.msra.mxu0 0.0
    %1279 = vmatprep.mubr.f32.mxu0 0.0
    %1280 = vmatmul.mubr.f32.gmra.mrb[0].mxu0 %v1213
    %v1281 = vpop.f32.mrb[0].mxu0
    %v1282 = vadd.f32 0.0, %v1281
    %v1283 = vpop.f32.mrb[0].mxu0
    %1284 = vdwg.mxu0
    %1285 = vrot.lane.b32.xlu0 %v199, 48
    %v1286 = vpop.permute.xlu0 %1285
    %v1289 = vsel %vm205, %v1206, 0
    %1291 = vmatprep.subr.mxu0 0.0
    %1292 = vmatpush1.msra.mxu0 %v1286
    %1293 = vmatprep.subr.mxu0 0.0
    %1294 = vmatpush1.msra.mxu0 0.0
    %1295 = vmatprep.subr.mxu0 0.0
    %1296 = vmatpush1.msra.mxu0 0.0
    %1297 = vmatprep.subr.mxu0 0.0
    %1298 = vmatpush1.msra.mxu0 0.0
    %1299 = vmatprep.subr.mxu0 0.0
    %1300 = vmatpush1.msra.mxu0 0.0
    %1301 = vmatprep.subr.mxu0 0.0
    %1302 = vmatpush1.msra.mxu0 0.0
    %1303 = vmatprep.subr.mxu0 0.0
    %1304 = vmatpush1.msra.mxu0 0.0
    %1305 = vmatprep.subr.mxu0 0.0
    %1306 = vmatpush1.msra.mxu0 0.0
    %1307 = vmatprep.subr.mxu0 0.0
    %1308 = vmatpush1.msra.mxu0 0.0
    %1309 = vmatprep.subr.mxu0 0.0
    %1310 = vmatpush1.msra.mxu0 0.0
    %1311 = vmatprep.subr.mxu0 0.0
    %1312 = vmatpush1.msra.mxu0 0.0
    %1313 = vmatprep.subr.mxu0 0.0
    %1314 = vmatpush1.msra.mxu0 0.0
    %1315 = vmatprep.subr.mxu0 0.0
    %1316 = vmatpush1.msra.mxu0 0.0
    %1317 = vmatprep.subr.mxu0 0.0
    %1318 = vmatpush1.msra.mxu0 0.0
    %1319 = vmatprep.subr.mxu0 0.0
    %1320 = vmatpush1.msra.mxu0 0.0
    %1321 = vmatprep.subr.mxu0 0.0
    %1322 = vmatpush1.msra.mxu0 0.0
    %1323 = vmatprep.subr.mxu0 0.0
    %1324 = vmatpush1.msra.mxu0 0.0
    %1325 = vmatprep.subr.mxu0 0.0
    %1326 = vmatpush1.msra.mxu0 0.0
    %1327 = vmatprep.subr.mxu0 0.0
    %1328 = vmatpush1.msra.mxu0 0.0
    %1329 = vmatprep.subr.mxu0 0.0
    %1330 = vmatpush1.msra.mxu0 0.0
    %1331 = vmatprep.subr.mxu0 0.0
    %1332 = vmatpush1.msra.mxu0 0.0
    %1333 = vmatprep.subr.mxu0 0.0
    %1334 = vmatpush1.msra.mxu0 0.0
    %1335 = vmatprep.subr.mxu0 0.0
    %1336 = vmatpush1.msra.mxu0 0.0
    %1337 = vmatprep.subr.mxu0 0.0
    %1338 = vmatpush1.msra.mxu0 0.0
    %1339 = vmatprep.subr.mxu0 0.0
    %1340 = vmatpush1.msra.mxu0 0.0
    %1341 = vmatprep.subr.mxu0 0.0
    %1342 = vmatpush1.msra.mxu0 0.0
    %1343 = vmatprep.subr.mxu0 0.0
    %1344 = vmatpush1.msra.mxu0 0.0
    %1345 = vmatprep.subr.mxu0 0.0
    %1346 = vmatpush1.msra.mxu0 0.0
    %1347 = vmatprep.subr.mxu0 0.0
    %1348 = vmatpush1.msra.mxu0 0.0
    %1349 = vmatprep.subr.mxu0 0.0
    %1350 = vmatpush1.msra.mxu0 0.0
    %1351 = vmatprep.subr.mxu0 0.0
    %1352 = vmatpush1.msra.mxu0 0.0
    %1353 = vmatprep.subr.mxu0 0.0
    %1354 = vmatpush1.msra.mxu0 0.0
    %1355 = vmatprep.mubr.f32.mxu0 0.0
    %1356 = vmatmul.mubr.f32.gmra.mrb[0].mxu0 %v1289
    %v1357 = vpop.f32.mrb[0].mxu0
    %v1358 = vadd.f32 0.0, %v1357
    %v1359 = vpop.f32.mrb[0].mxu0
    %1360 = vdwg.mxu0
    %v1361 = vld [vmem:[%s5 + $0x10] sm:$0xff]
    %v1363 = vsel %vm205, %v1282, 0
    %v1366 = vsel %vm205, %v1358, 0
    %1368 = vmatprep.subr.mxu0 0.0
    %1369 = vmatpush1.msra.mxu0 %v1361
    %1370 = vmatprep.subr.mxu0 0.0
    %1371 = vmatpush1.msra.mxu0 0.0
    %1372 = vmatprep.subr.mxu0 0.0
    %1373 = vmatpush1.msra.mxu0 0.0
    %1374 = vmatprep.subr.mxu0 0.0
    %1375 = vmatpush1.msra.mxu0 0.0
    %1376 = vmatprep.subr.mxu0 0.0
    %1377 = vmatpush1.msra.mxu0 0.0
    %1378 = vmatprep.subr.mxu0 0.0
    %1379 = vmatpush1.msra.mxu0 0.0
    %1380 = vmatprep.subr.mxu0 0.0
    %1381 = vmatpush1.msra.mxu0 0.0
    %1382 = vmatprep.subr.mxu0 0.0
    %1383 = vmatpush1.msra.mxu0 0.0
    %1384 = vmatprep.subr.mxu0 0.0
    %1385 = vmatpush1.msra.mxu0 0.0
    %1386 = vmatprep.subr.mxu0 0.0
    %1387 = vmatpush1.msra.mxu0 0.0
    %1388 = vmatprep.subr.mxu0 0.0
    %1389 = vmatpush1.msra.mxu0 0.0
    %1390 = vmatprep.subr.mxu0 0.0
    %1391 = vmatpush1.msra.mxu0 0.0
    %1392 = vmatprep.subr.mxu0 0.0
    %1393 = vmatpush1.msra.mxu0 0.0
    %1394 = vmatprep.subr.mxu0 0.0
    %1395 = vmatpush1.msra.mxu0 0.0
    %1396 = vmatprep.subr.mxu0 0.0
    %1397 = vmatpush1.msra.mxu0 0.0
    %1398 = vmatprep.subr.mxu0 0.0
    %1399 = vmatpush1.msra.mxu0 0.0
    %1400 = vmatprep.subr.mxu0 0.0
    %1401 = vmatpush1.msra.mxu0 0.0
    %1402 = vmatprep.subr.mxu0 0.0
    %1403 = vmatpush1.msra.mxu0 0.0
    %1404 = vmatprep.subr.mxu0 0.0
    %1405 = vmatpush1.msra.mxu0 0.0
    %1406 = vmatprep.subr.mxu0 0.0
    %1407 = vmatpush1.msra.mxu0 0.0
    %1408 = vmatprep.subr.mxu0 0.0
    %1409 = vmatpush1.msra.mxu0 0.0
    %1410 = vmatprep.subr.mxu0 0.0
    %1411 = vmatpush1.msra.mxu0 0.0
    %1412 = vmatprep.subr.mxu0 0.0
    %1413 = vmatpush1.msra.mxu0 0.0
    %1414 = vmatprep.subr.mxu0 0.0
    %1415 = vmatpush1.msra.mxu0 0.0
    %1416 = vmatprep.subr.mxu0 0.0
    %1417 = vmatpush1.msra.mxu0 0.0
    %1418 = vmatprep.subr.mxu0 0.0
    %1419 = vmatpush1.msra.mxu0 0.0
    %1420 = vmatprep.subr.mxu0 0.0
    %1421 = vmatpush1.msra.mxu0 0.0
    %1422 = vmatprep.subr.mxu0 0.0
    %1423 = vmatpush1.msra.mxu0 0.0
    %1424 = vmatprep.subr.mxu0 0.0
    %1425 = vmatpush1.msra.mxu0 0.0
    %1426 = vmatprep.subr.mxu0 0.0
    %1427 = vmatpush1.msra.mxu0 0.0
    %1428 = vmatprep.subr.mxu0 0.0
    %1429 = vmatpush1.msra.mxu0 0.0
    %1430 = vmatprep.subr.mxu0 0.0
    %1431 = vmatpush1.msra.mxu0 0.0
    %1432 = vmatprep.mubr.f32.mxu0 0.0
    %1433 = vmatmul.mubr.f32.gmra.mrb[0].mxu0 %v1363
    %v1434 = vpop.f32.mrb[0].mxu0
    %v1435 = vadd.f32 0.0, %v1434
    %v1436 = vpop.f32.mrb[0].mxu0
    %1437 = vmatprep.mubr.f32.mxu0 0.0
    %1438 = vmatmul.mubr.f32.gmra.mrb[0].mxu0 %v1366
    %v1439 = vpop.f32.mrb[0].mxu0
    %v1440 = vadd.f32 0.0, %v1439
    %v1441 = vpop.f32.mrb[0].mxu0
    %1442 = vdwg.mxu0
    %v1443 = vadd.f32 %v1021, %v1435
    %v1444 = vadd.f32 %v1026, %v1440
    %1445 = vrot.lane.b32.xlu0 %v194, 104
    %v1446 = vpop.permute.xlu0 %1445
    %1447 = vrot.lane.b32.xlu0 %v194, 72
    %v1448 = vpop.permute.xlu0 %1447
    %v1449 = vsel %vm205, %v1446, 0
    %v1451 = vsel %vm205, %v1448, 0
    %1453 = vmatprep.subr.mxu0 0.0
    %1454 = vmatpush1.xpose.msra.mxu0 %v1451
    %1455 = vmatprep.subr.mxu0 0.0
    %1456 = vmatpush1.xpose.msra.mxu0 0.0
    %1457 = vmatprep.subr.mxu0 0.0
    %1458 = vmatpush1.xpose.msra.mxu0 0.0
    %1459 = vmatprep.subr.mxu0 0.0
    %1460 = vmatpush1.xpose.msra.mxu0 0.0
    %1461 = vmatprep.subr.mxu0 0.0
    %1462 = vmatpush1.xpose.msra.mxu0 0.0
    %1463 = vmatprep.subr.mxu0 0.0
    %1464 = vmatpush1.xpose.msra.mxu0 0.0
    %1465 = vmatprep.subr.mxu0 0.0
    %1466 = vmatpush1.xpose.msra.mxu0 0.0
    %1467 = vmatprep.subr.mxu0 0.0
    %1468 = vmatpush1.xpose.msra.mxu0 0.0
    %1469 = vmatprep.subr.mxu0 0.0
    %1470 = vmatpush1.xpose.msra.mxu0 0.0
    %1471 = vmatprep.subr.mxu0 0.0
    %1472 = vmatpush1.xpose.msra.mxu0 0.0
    %1473 = vmatprep.subr.mxu0 0.0
    %1474 = vmatpush1.xpose.msra.mxu0 0.0
    %1475 = vmatprep.subr.mxu0 0.0
    %1476 = vmatpush1.xpose.msra.mxu0 0.0
    %1477 = vmatprep.subr.mxu0 0.0
    %1478 = vmatpush1.xpose.msra.mxu0 0.0
    %1479 = vmatprep.subr.mxu0 0.0
    %1480 = vmatpush1.xpose.msra.mxu0 0.0
    %1481 = vmatprep.subr.mxu0 0.0
    %1482 = vmatpush1.xpose.msra.mxu0 0.0
    %1483 = vmatprep.subr.mxu0 0.0
    %1484 = vmatpush1.xpose.msra.mxu0 0.0
    %1485 = vmatprep.subr.mxu0 0.0
    %1486 = vmatpush1.xpose.msra.mxu0 0.0
    %1487 = vmatprep.subr.mxu0 0.0
    %1488 = vmatpush1.xpose.msra.mxu0 0.0
    %1489 = vmatprep.subr.mxu0 0.0
    %1490 = vmatpush1.xpose.msra.mxu0 0.0
    %1491 = vmatprep.subr.mxu0 0.0
    %1492 = vmatpush1.xpose.msra.mxu0 0.0
    %1493 = vmatprep.subr.mxu0 0.0
    %1494 = vmatpush1.xpose.msra.mxu0 0.0
    %1495 = vmatprep.subr.mxu0 0.0
    %1496 = vmatpush1.xpose.msra.mxu0 0.0
    %1497 = vmatprep.subr.mxu0 0.0
    %1498 = vmatpush1.xpose.msra.mxu0 0.0
    %1499 = vmatprep.subr.mxu0 0.0
    %1500 = vmatpush1.xpose.msra.mxu0 0.0
    %1501 = vmatprep.subr.mxu0 0.0
    %1502 = vmatpush1.xpose.msra.mxu0 0.0
    %1503 = vmatprep.subr.mxu0 0.0
    %1504 = vmatpush1.xpose.msra.mxu0 0.0
    %1505 = vmatprep.subr.mxu0 0.0
    %1506 = vmatpush1.xpose.msra.mxu0 0.0
    %1507 = vmatprep.subr.mxu0 0.0
    %1508 = vmatpush1.xpose.msra.mxu0 0.0
    %1509 = vmatprep.subr.mxu0 0.0
    %1510 = vmatpush1.xpose.msra.mxu0 0.0
    %1511 = vmatprep.subr.mxu0 0.0
    %1512 = vmatpush1.xpose.msra.mxu0 0.0
    %1513 = vmatprep.subr.mxu0 0.0
    %1514 = vmatpush1.xpose.msra.mxu0 0.0
    %1515 = vmatprep.subr.mxu0 0.0
    %1516 = vmatpush1.xpose.msra.mxu0 0.0
    %1517 = vmatprep.mubr.f32.mxu0 0.0
    %1518 = vmatmul.mubr.f32.gmra.mrb[0].mxu0 %v1449
    %v1519 = vpop.f32.mrb[0].mxu0
    %v1520 = vadd.f32 0.0, %v1519
    %v1521 = vpop.f32.mrb[0].mxu0
    %1522 = vdwg.mxu0
    %1523 = vrot.lane.b32.xlu0 %v199, 104
    %v1524 = vpop.permute.xlu0 %1523
    %1525 = vrot.lane.b32.xlu0 %v199, 72
    %v1526 = vpop.permute.xlu0 %1525
    %v1527 = vsel %vm205, %v1524, 0
    %v1529 = vsel %vm205, %v1526, 0
    %1531 = vmatprep.subr.mxu0 0.0
    %1532 = vmatpush1.xpose.msra.mxu0 %v1529
    %1533 = vmatprep.subr.mxu0 0.0
    %1534 = vmatpush1.xpose.msra.mxu0 0.0
    %1535 = vmatprep.subr.mxu0 0.0
    %1536 = vmatpush1.xpose.msra.mxu0 0.0
    %1537 = vmatprep.subr.mxu0 0.0
    %1538 = vmatpush1.xpose.msra.mxu0 0.0
    %1539 = vmatprep.subr.mxu0 0.0
    %1540 = vmatpush1.xpose.msra.mxu0 0.0
    %1541 = vmatprep.subr.mxu0 0.0
    %1542 = vmatpush1.xpose.msra.mxu0 0.0
    %1543 = vmatprep.subr.mxu0 0.0
    %1544 = vmatpush1.xpose.msra.mxu0 0.0
    %1545 = vmatprep.subr.mxu0 0.0
    %1546 = vmatpush1.xpose.msra.mxu0 0.0
    %1547 = vmatprep.subr.mxu0 0.0
    %1548 = vmatpush1.xpose.msra.mxu0 0.0
    %1549 = vmatprep.subr.mxu0 0.0
    %1550 = vmatpush1.xpose.msra.mxu0 0.0
    %1551 = vmatprep.subr.mxu0 0.0
    %1552 = vmatpush1.xpose.msra.mxu0 0.0
    %1553 = vmatprep.subr.mxu0 0.0
    %1554 = vmatpush1.xpose.msra.mxu0 0.0
    %1555 = vmatprep.subr.mxu0 0.0
    %1556 = vmatpush1.xpose.msra.mxu0 0.0
    %1557 = vmatprep.subr.mxu0 0.0
    %1558 = vmatpush1.xpose.msra.mxu0 0.0
    %1559 = vmatprep.subr.mxu0 0.0
    %1560 = vmatpush1.xpose.msra.mxu0 0.0
    %1561 = vmatprep.subr.mxu0 0.0
    %1562 = vmatpush1.xpose.msra.mxu0 0.0
    %1563 = vmatprep.subr.mxu0 0.0
    %1564 = vmatpush1.xpose.msra.mxu0 0.0
    %1565 = vmatprep.subr.mxu0 0.0
    %1566 = vmatpush1.xpose.msra.mxu0 0.0
    %1567 = vmatprep.subr.mxu0 0.0
    %1568 = vmatpush1.xpose.msra.mxu0 0.0
    %1569 = vmatprep.subr.mxu0 0.0
    %1570 = vmatpush1.xpose.msra.mxu0 0.0
    %1571 = vmatprep.subr.mxu0 0.0
    %1572 = vmatpush1.xpose.msra.mxu0 0.0
    %1573 = vmatprep.subr.mxu0 0.0
    %1574 = vmatpush1.xpose.msra.mxu0 0.0
    %1575 = vmatprep.subr.mxu0 0.0
    %1576 = vmatpush1.xpose.msra.mxu0 0.0
    %1577 = vmatprep.subr.mxu0 0.0
    %1578 = vmatpush1.xpose.msra.mxu0 0.0
    %1579 = vmatprep.subr.mxu0 0.0
    %1580 = vmatpush1.xpose.msra.mxu0 0.0
    %1581 = vmatprep.subr.mxu0 0.0
    %1582 = vmatpush1.xpose.msra.mxu0 0.0
    %1583 = vmatprep.subr.mxu0 0.0
    %1584 = vmatpush1.xpose.msra.mxu0 0.0
    %1585 = vmatprep.subr.mxu0 0.0
    %1586 = vmatpush1.xpose.msra.mxu0 0.0
    %1587 = vmatprep.subr.mxu0 0.0
    %1588 = vmatpush1.xpose.msra.mxu0 0.0
    %1589 = vmatprep.subr.mxu0 0.0
    %1590 = vmatpush1.xpose.msra.mxu0 0.0
    %1591 = vmatprep.subr.mxu0 0.0
    %1592 = vmatpush1.xpose.msra.mxu0 0.0
    %1593 = vmatprep.subr.mxu0 0.0
    %1594 = vmatpush1.xpose.msra.mxu0 0.0
    %1595 = vmatprep.mubr.f32.mxu0 0.0
    %1596 = vmatmul.mubr.f32.gmra.mrb[0].mxu0 %v1527
    %v1597 = vpop.f32.mrb[0].mxu0
    %v1598 = vadd.f32 0.0, %v1597
    %v1599 = vpop.f32.mrb[0].mxu0
    %1600 = vdwg.mxu0
    %v1601 = vsel %vm205, %v1520, -inf
    %1602 = vmax.xlane.f32.xlu0 %v1601
    %v1603 = vpop.xlane.xlu0 %1602
    %v1604 = vsel %vm205, %v1598, -inf
    %1605 = vmax.xlane.f32.xlu0 %v1604
    %v1606 = vpop.xlane.xlu0 %1605
    %v1607 = vsub.f32 %v1520, %v1603
    %v1608 = vsub.f32 %v1598, %v1606
    %v1609 = vmul.f32 %v1607, 1.442695
    %v1610 = vpow.pop %v1609
    %v1611 = vmul.f32 %v1608, 1.442695
    %v1612 = vpow.pop %v1611
    %v1613 = vsel %vm205, %v1610, 0.0
    %1614 = vadd.xlane.f32.xlu0 %v1613
    %v1615 = vpop.xlane.xlu0 %1614
    %v1616 = vsel %vm205, %v1612, 0.0
    %1617 = vadd.xlane.f32.xlu0 %v1616
    %v1618 = vpop.xlane.xlu0 %1617
    %v1619 = vrcp.pop %v1615
    %v1620 = vrcp.pop %v1618
    %v1621 = vmul.f32 %v1610, %v1619
    %v1622 = vmul.f32 %v1612, %v1620
    %v1623 = vadd.f32 %v1207, %v1621
    %v1624 = vadd.f32 %v1208, %v1622
    %1625 = vrot.lane.b32.xlu0 %v194, 40
    %v1626 = vpop.permute.xlu0 %1625
    %v1629 = vsel %vm205, %v1621, 0
    %1631 = vmatprep.subr.mxu0 0.0
    %1632 = vmatpush1.msra.mxu0 %v1626
    %1633 = vmatprep.subr.mxu0 0.0
    %1634 = vmatpush1.msra.mxu0 0.0
    %1635 = vmatprep.subr.mxu0 0.0
    %1636 = vmatpush1.msra.mxu0 0.0
    %1637 = vmatprep.subr.mxu0 0.0
    %1638 = vmatpush1.msra.mxu0 0.0
    %1639 = vmatprep.subr.mxu0 0.0
    %1640 = vmatpush1.msra.mxu0 0.0
    %1641 = vmatprep.subr.mxu0 0.0
    %1642 = vmatpush1.msra.mxu0 0.0
    %1643 = vmatprep.subr.mxu0 0.0
    %1644 = vmatpush1.msra.mxu0 0.0
    %1645 = vmatprep.subr.mxu0 0.0
    %1646 = vmatpush1.msra.mxu0 0.0
    %1647 = vmatprep.subr.mxu0 0.0
    %1648 = vmatpush1.msra.mxu0 0.0
    %1649 = vmatprep.subr.mxu0 0.0
    %1650 = vmatpush1.msra.mxu0 0.0
    %1651 = vmatprep.subr.mxu0 0.0
    %1652 = vmatpush1.msra.mxu0 0.0
    %1653 = vmatprep.subr.mxu0 0.0
    %1654 = vmatpush1.msra.mxu0 0.0
    %1655 = vmatprep.subr.mxu0 0.0
    %1656 = vmatpush1.msra.mxu0 0.0
    %1657 = vmatprep.subr.mxu0 0.0
    %1658 = vmatpush1.msra.mxu0 0.0
    %1659 = vmatprep.subr.mxu0 0.0
    %1660 = vmatpush1.msra.mxu0 0.0
    %1661 = vmatprep.subr.mxu0 0.0
    %1662 = vmatpush1.msra.mxu0 0.0
    %1663 = vmatprep.subr.mxu0 0.0
    %1664 = vmatpush1.msra.mxu0 0.0
    %1665 = vmatprep.subr.mxu0 0.0
    %1666 = vmatpush1.msra.mxu0 0.0
    %1667 = vmatprep.subr.mxu0 0.0
    %1668 = vmatpush1.msra.mxu0 0.0
    %1669 = vmatprep.subr.mxu0 0.0
    %1670 = vmatpush1.msra.mxu0 0.0
    %1671 = vmatprep.subr.mxu0 0.0
    %1672 = vmatpush1.msra.mxu0 0.0
    %1673 = vmatprep.subr.mxu0 0.0
    %1674 = vmatpush1.msra.mxu0 0.0
    %1675 = vmatprep.subr.mxu0 0.0
    %1676 = vmatpush1.msra.mxu0 0.0
    %1677 = vmatprep.subr.mxu0 0.0
    %1678 = vmatpush1.msra.mxu0 0.0
    %1679 = vmatprep.subr.mxu0 0.0
    %1680 = vmatpush1.msra.mxu0 0.0
    %1681 = vmatprep.subr.mxu0 0.0
    %1682 = vmatpush1.msra.mxu0 0.0
    %1683 = vmatprep.subr.mxu0 0.0
    %1684 = vmatpush1.msra.mxu0 0.0
    %1685 = vmatprep.subr.mxu0 0.0
    %1686 = vmatpush1.msra.mxu0 0.0
    %1687 = vmatprep.subr.mxu0 0.0
    %1688 = vmatpush1.msra.mxu0 0.0
    %1689 = vmatprep.subr.mxu0 0.0
    %1690 = vmatpush1.msra.mxu0 0.0
    %1691 = vmatprep.subr.mxu0 0.0
    %1692 = vmatpush1.msra.mxu0 0.0
    %1693 = vmatprep.subr.mxu0 0.0
    %1694 = vmatpush1.msra.mxu0 0.0
    %1695 = vmatprep.mubr.f32.mxu0 0.0
    %1696 = vmatmul.mubr.f32.gmra.mrb[0].mxu0 %v1629
    %v1697 = vpop.f32.mrb[0].mxu0
    %v1698 = vadd.f32 0.0, %v1697
    %v1699 = vpop.f32.mrb[0].mxu0
    %1700 = vdwg.mxu0
    %1701 = vrot.lane.b32.xlu0 %v199, 40
    %v1702 = vpop.permute.xlu0 %1701
    %v1705 = vsel %vm205, %v1622, 0
    %1707 = vmatprep.subr.mxu0 0.0
    %1708 = vmatpush1.msra.mxu0 %v1702
    %1709 = vmatprep.subr.mxu0 0.0
    %1710 = vmatpush1.msra.mxu0 0.0
    %1711 = vmatprep.subr.mxu0 0.0
    %1712 = vmatpush1.msra.mxu0 0.0
    %1713 = vmatprep.subr.mxu0 0.0
    %1714 = vmatpush1.msra.mxu0 0.0
    %1715 = vmatprep.subr.mxu0 0.0
    %1716 = vmatpush1.msra.mxu0 0.0
    %1717 = vmatprep.subr.mxu0 0.0
    %1718 = vmatpush1.msra.mxu0 0.0
    %1719 = vmatprep.subr.mxu0 0.0
    %1720 = vmatpush1.msra.mxu0 0.0
    %1721 = vmatprep.subr.mxu0 0.0
    %1722 = vmatpush1.msra.mxu0 0.0
    %1723 = vmatprep.subr.mxu0 0.0
    %1724 = vmatpush1.msra.mxu0 0.0
    %1725 = vmatprep.subr.mxu0 0.0
    %1726 = vmatpush1.msra.mxu0 0.0
    %1727 = vmatprep.subr.mxu0 0.0
    %1728 = vmatpush1.msra.mxu0 0.0
    %1729 = vmatprep.subr.mxu0 0.0
    %1730 = vmatpush1.msra.mxu0 0.0
    %1731 = vmatprep.subr.mxu0 0.0
    %1732 = vmatpush1.msra.mxu0 0.0
    %1733 = vmatprep.subr.mxu0 0.0
    %1734 = vmatpush1.msra.mxu0 0.0
    %1735 = vmatprep.subr.mxu0 0.0
    %1736 = vmatpush1.msra.mxu0 0.0
    %1737 = vmatprep.subr.mxu0 0.0
    %1738 = vmatpush1.msra.mxu0 0.0
    %1739 = vmatprep.subr.mxu0 0.0
    %1740 = vmatpush1.msra.mxu0 0.0
    %1741 = vmatprep.subr.mxu0 0.0
    %1742 = vmatpush1.msra.mxu0 0.0
    %1743 = vmatprep.subr.mxu0 0.0
    %1744 = vmatpush1.msra.mxu0 0.0
    %1745 = vmatprep.subr.mxu0 0.0
    %1746 = vmatpush1.msra.mxu0 0.0
    %1747 = vmatprep.subr.mxu0 0.0
    %1748 = vmatpush1.msra.mxu0 0.0
    %1749 = vmatprep.subr.mxu0 0.0
    %1750 = vmatpush1.msra.mxu0 0.0
    %1751 = vmatprep.subr.mxu0 0.0
    %1752 = vmatpush1.msra.mxu0 0.0
    %1753 = vmatprep.subr.mxu0 0.0
    %1754 = vmatpush1.msra.mxu0 0.0
    %1755 = vmatprep.subr.mxu0 0.0
    %1756 = vmatpush1.msra.mxu0 0.0
    %1757 = vmatprep.subr.mxu0 0.0
    %1758 = vmatpush1.msra.mxu0 0.0
    %1759 = vmatprep.subr.mxu0 0.0
    %1760 = vmatpush1.msra.mxu0 0.0
    %1761 = vmatprep.subr.mxu0 0.0
    %1762 = vmatpush1.msra.mxu0 0.0
    %1763 = vmatprep.subr.mxu0 0.0
    %1764 = vmatpush1.msra.mxu0 0.0
    %1765 = vmatprep.subr.mxu0 0.0
    %1766 = vmatpush1.msra.mxu0 0.0
    %1767 = vmatprep.subr.mxu0 0.0
    %1768 = vmatpush1.msra.mxu0 0.0
    %1769 = vmatprep.subr.mxu0 0.0
    %1770 = vmatpush1.msra.mxu0 0.0
    %1771 = vmatprep.mubr.f32.mxu0 0.0
    %1772 = vmatmul.mubr.f32.gmra.mrb[0].mxu0 %v1705
    %v1773 = vpop.f32.mrb[0].mxu0
    %v1774 = vadd.f32 0.0, %v1773
    %v1775 = vpop.f32.mrb[0].mxu0
    %1776 = vdwg.mxu0
    %v1777 = vld [vmem:[%s5 + $0x18] sm:$0xff]
    %v1779 = vsel %vm205, %v1698, 0
    %v1782 = vsel %vm205, %v1774, 0
    %1784 = vmatprep.subr.mxu0 0.0
    %1785 = vmatpush1.msra.mxu0 %v1777
    %1786 = vmatprep.subr.mxu0 0.0
    %1787 = vmatpush1.msra.mxu0 0.0
    %1788 = vmatprep.subr.mxu0 0.0
    %1789 = vmatpush1.msra.mxu0 0.0
    %1790 = vmatprep.subr.mxu0 0.0
    %1791 = vmatpush1.msra.mxu0 0.0
    %1792 = vmatprep.subr.mxu0 0.0
    %1793 = vmatpush1.msra.mxu0 0.0
    %1794 = vmatprep.subr.mxu0 0.0
    %1795 = vmatpush1.msra.mxu0 0.0
    %1796 = vmatprep.subr.mxu0 0.0
    %1797 = vmatpush1.msra.mxu0 0.0
    %1798 = vmatprep.subr.mxu0 0.0
    %1799 = vmatpush1.msra.mxu0 0.0
    %1800 = vmatprep.subr.mxu0 0.0
    %1801 = vmatpush1.msra.mxu0 0.0
    %1802 = vmatprep.subr.mxu0 0.0
    %1803 = vmatpush1.msra.mxu0 0.0
    %1804 = vmatprep.subr.mxu0 0.0
    %1805 = vmatpush1.msra.mxu0 0.0
    %1806 = vmatprep.subr.mxu0 0.0
    %1807 = vmatpush1.msra.mxu0 0.0
    %1808 = vmatprep.subr.mxu0 0.0
    %1809 = vmatpush1.msra.mxu0 0.0
    %1810 = vmatprep.subr.mxu0 0.0
    %1811 = vmatpush1.msra.mxu0 0.0
    %1812 = vmatprep.subr.mxu0 0.0
    %1813 = vmatpush1.msra.mxu0 0.0
    %1814 = vmatprep.subr.mxu0 0.0
    %1815 = vmatpush1.msra.mxu0 0.0
    %1816 = vmatprep.subr.mxu0 0.0
    %1817 = vmatpush1.msra.mxu0 0.0
    %1818 = vmatprep.subr.mxu0 0.0
    %1819 = vmatpush1.msra.mxu0 0.0
    %1820 = vmatprep.subr.mxu0 0.0
    %1821 = vmatpush1.msra.mxu0 0.0
    %1822 = vmatprep.subr.mxu0 0.0
    %1823 = vmatpush1.msra.mxu0 0.0
    %1824 = vmatprep.subr.mxu0 0.0
    %1825 = vmatpush1.msra.mxu0 0.0
    %1826 = vmatprep.subr.mxu0 0.0
    %1827 = vmatpush1.msra.mxu0 0.0
    %1828 = vmatprep.subr.mxu0 0.0
    %1829 = vmatpush1.msra.mxu0 0.0
    %1830 = vmatprep.subr.mxu0 0.0
    %1831 = vmatpush1.msra.mxu0 0.0
    %1832 = vmatprep.subr.mxu0 0.0
    %1833 = vmatpush1.msra.mxu0 0.0
    %1834 = vmatprep.subr.mxu0 0.0
    %1835 = vmatpush1.msra.mxu0 0.0
    %1836 = vmatprep.subr.mxu0 0.0
    %1837 = vmatpush1.msra.mxu0 0.0
    %1838 = vmatprep.subr.mxu0 0.0
    %1839 = vmatpush1.msra.mxu0 0.0
    %1840 = vmatprep.subr.mxu0 0.0
    %1841 = vmatpush1.msra.mxu0 0.0
    %1842 = vmatprep.subr.mxu0 0.0
    %1843 = vmatpush1.msra.mxu0 0.0
    %1844 = vmatprep.subr.mxu0 0.0
    %1845 = vmatpush1.msra.mxu0 0.0
    %1846 = vmatprep.subr.mxu0 0.0
    %1847 = vmatpush1.msra.mxu0 0.0
    %1848 = vmatprep.mubr.f32.mxu0 0.0
    %1849 = vmatmul.mubr.f32.gmra.mrb[0].mxu0 %v1779
    %v1850 = vpop.f32.mrb[0].mxu0
    %v1851 = vadd.f32 0.0, %v1850
    %v1852 = vpop.f32.mrb[0].mxu0
    %1853 = vmatprep.mubr.f32.mxu0 0.0
    %1854 = vmatmul.mubr.f32.gmra.mrb[0].mxu0 %v1782
    %v1855 = vpop.f32.mrb[0].mxu0
    %v1856 = vadd.f32 0.0, %v1855
    %v1857 = vpop.f32.mrb[0].mxu0
    %1858 = vdwg.mxu0
    %v1859 = vadd.f32 %v1443, %v1851
    %v1860 = vadd.f32 %v1444, %v1856
    %v1861 = vmul.f32 %v1623, 0.25
    %v1862 = vmul.f32 %v1624, 0.25
    %1863 = vst.msk [vmem:[#allocation6] sm:$0xff] %vm205, %v1861
    %1864 = vst.msk [vmem:[#allocation6 + $0x8] sm:$0xff] %vm205, %v1862
    %v1865 = vadd.f32 %v108, %v1859
    %v1866 = vadd.f32 %v109, %v1860
    %v1867 = vld [vmem:[%s6] sm:$0x1]
    %v1869 = vlaneseq
    %v1870 = vshrl.u32 %v1869, 7
    %v1871 = vsub.s32 0, %v1870
    %v1872 = vrot.slane %v1867, %v1871
    %v1874 = vadd.f32 %v1865, %v1872
    %v1875 = vadd.f32 %v1866, %v1872
    %v1876 = vld [vmem:[%s7] sm:$0x1]
    %v1877 = vld [vmem:[%s8] sm:$0x1]
    %v1878 = vsel %vm66, %v1874, 0.0
    %1879 = vadd.xlane.f32.xlu0 %v1878
    %v1880 = vpop.xlane.xlu0 %1879
    %v1881 = vsel %vm66, %v1875, 0.0
    %1882 = vadd.xlane.f32.xlu0 %v1881
    %v1883 = vpop.xlane.xlu0 %1882
    %v1884 = vmul.f32 %v1880, %v73
    %v1885 = vmul.f32 %v1883, %v73
    %v1886 = vsub.f32 %v1874, %v1884
    %v1887 = vsub.f32 %v1875, %v1885
    %v1888 = vmul.f32 %v1886, %v1886
    %v1889 = vmul.f32 %v1887, %v1887
    %v1890 = vsel %vm66, %v1888, 0.0
    %1891 = vadd.xlane.f32.xlu0 %v1890
    %v1892 = vpop.xlane.xlu0 %1891
    %v1893 = vsel %vm66, %v1889, 0.0
    %1894 = vadd.xlane.f32.xlu0 %v1893
    %v1895 = vpop.xlane.xlu0 %1894
    %v1896 = vmul.f32 %v1892, %v73
    %v1897 = vmul.f32 %v1895, %v73
    %v1898 = vadd.f32 %v1896, 1e-05
    %v1899 = vadd.f32 %v1897, 1e-05
    %v1900 = vrsqrt.pop %v1898
    %v1901 = vrsqrt.pop %v1899
    %v1902 = vmul.f32 %v1886, %v1900
    %v1903 = vmul.f32 %v1887, %v1901
    %v1905 = vlaneseq
    %v1906 = vshrl.u32 %v1905, 7
    %v1907 = vsub.s32 0, %v1906
    %v1908 = vrot.slane %v1876, %v1907
    %v1910 = vmul.f32 %v1902, %v1908
    %v1911 = vmul.f32 %v1903, %v1908
    %v1913 = vlaneseq
    %v1914 = vshrl.u32 %v1913, 7
    %v1915 = vsub.s32 0, %v1914
    %v1916 = vrot.slane %v1877, %v1915
    %v1918 = vadd.f32 %v1910, %v1916
    %v1919 = vadd.f32 %v1911, %v1916
    %v1920 = vld [vmem:[%s9] sm:$0xff]
    %v1921 = vld [vmem:[%s9 + $0x8] sm:$0xff]
    %v1922 = vld [vmem:[%s9 + $0x10] sm:$0xff]
    %v1923 = vld [vmem:[%s9 + $0x18] sm:$0xff]
    %v1924 = vld [vmem:[%s10] sm:$0x1]
    %v1926 = vlaneseq
    %v1927 = vshrl.u32 %v1926, 7
    %v1928 = vsub.s32 0, %v1927
    %v1929 = vrot.slane %v1924, %v1928
    %v1932 = vsel %vm66, %v1918, 0
    %v1935 = vsel %vm66, %v1919, 0
    %1937 = vmatprep.subr.mxu0 0.0
    %1938 = vmatpush1.msra.mxu0 %v1920
    %1939 = vmatprep.subr.mxu0 0.0
    %1940 = vmatpush1.msra.mxu0 %v1921
    %1941 = vmatprep.subr.mxu0 0.0
    %1942 = vmatpush1.msra.mxu0 %v1922
    %1943 = vmatprep.subr.mxu0 0.0
    %1944 = vmatpush1.msra.mxu0 %v1923
    %1945 = vmatprep.subr.mxu0 0.0
    %1946 = vmatpush1.msra.mxu0 0.0
    %1947 = vmatprep.subr.mxu0 0.0
    %1948 = vmatpush1.msra.mxu0 0.0
    %1949 = vmatprep.subr.mxu0 0.0
    %1950 = vmatpush1.msra.mxu0 0.0
    %1951 = vmatprep.subr.mxu0 0.0
    %1952 = vmatpush1.msra.mxu0 0.0
    %1953 = vmatprep.subr.mxu0 0.0
    %1954 = vmatpush1.msra.mxu0 0.0
    %1955 = vmatprep.subr.mxu0 0.0
    %1956 = vmatpush1.msra.mxu0 0.0
    %1957 = vmatprep.subr.mxu0 0.0
    %1958 = vmatpush1.msra.mxu0 0.0
    %1959 = vmatprep.subr.mxu0 0.0
    %1960 = vmatpush1.msra.mxu0 0.0
    %1961 = vmatprep.subr.mxu0 0.0
    %1962 = vmatpush1.msra.mxu0 0.0
    %1963 = vmatprep.subr.mxu0 0.0
    %1964 = vmatpush1.msra.mxu0 0.0
    %1965 = vmatprep.subr.mxu0 0.0
    %1966 = vmatpush1.msra.mxu0 0.0
    %1967 = vmatprep.subr.mxu0 0.0
    %1968 = vmatpush1.msra.mxu0 0.0
    %1969 = vmatprep.subr.mxu0 0.0
    %1970 = vmatpush1.msra.mxu0 0.0
    %1971 = vmatprep.subr.mxu0 0.0
    %1972 = vmatpush1.msra.mxu0 0.0
    %1973 = vmatprep.subr.mxu0 0.0
    %1974 = vmatpush1.msra.mxu0 0.0
    %1975 = vmatprep.subr.mxu0 0.0
    %1976 = vmatpush1.msra.mxu0 0.0
    %1977 = vmatprep.subr.mxu0 0.0
    %1978 = vmatpush1.msra.mxu0 0.0
    %1979 = vmatprep.subr.mxu0 0.0
    %1980 = vmatpush1.msra.mxu0 0.0
    %1981 = vmatprep.subr.mxu0 0.0
    %1982 = vmatpush1.msra.mxu0 0.0
    %1983 = vmatprep.subr.mxu0 0.0
    %1984 = vmatpush1.msra.mxu0 0.0
    %1985 = vmatprep.subr.mxu0 0.0
    %1986 = vmatpush1.msra.mxu0 0.0
    %1987 = vmatprep.subr.mxu0 0.0
    %1988 = vmatpush1.msra.mxu0 0.0
    %1989 = vmatprep.subr.mxu0 0.0
    %1990 = vmatpush1.msra.mxu0 0.0
    %1991 = vmatprep.subr.mxu0 0.0
    %1992 = vmatpush1.msra.mxu0 0.0
    %1993 = vmatprep.subr.mxu0 0.0
    %1994 = vmatpush1.msra.mxu0 0.0
    %1995 = vmatprep.subr.mxu0 0.0
    %1996 = vmatpush1.msra.mxu0 0.0
    %1997 = vmatprep.subr.mxu0 0.0
    %1998 = vmatpush1.msra.mxu0 0.0
    %1999 = vmatprep.subr.mxu0 0.0
    %2000 = vmatpush1.msra.mxu0 0.0
    %2001 = vmatprep.mubr.f32.mxu0 0.0
    %2002 = vmatmul.mubr.f32.gmra.mrb[0].mxu0 %v1932
    %v2003 = vpop.f32.mrb[0].mxu0
    %v2004 = vadd.f32 %v1929, %v2003
    %v2005 = vpop.f32.mrb[0].mxu0
    %2006 = vmatprep.mubr.f32.mxu0 0.0
    %2007 = vmatmul.mubr.f32.gmra.mrb[0].mxu0 %v1935
    %v2008 = vpop.f32.mrb[0].mxu0
    %v2009 = vadd.f32 %v1929, %v2008
    %v2010 = vpop.f32.mrb[0].mxu0
    %2011 = vdwg.mxu0
    %v2012 = vmul.f32 %v2004, 0.5
    %v2013 = vmul.f32 %v2009, 0.5
    %v2014 = vmul.f32 %v2004, 0.044715
    %v2015 = vmul.f32 %v2009, 0.044715
    %v2016 = vmul.f32 %v2014, %v2004
    %v2017 = vmul.f32 %v2015, %v2009
    %v2018 = vmul.f32 %v2016, %v2004
    %v2019 = vmul.f32 %v2017, %v2009
    %v2020 = vadd.f32 %v2004, %v2018
    %v2021 = vadd.f32 %v2009, %v2019
    %v2022 = vmul.f32 %v2020, 0.7978846
    %v2023 = vmul.f32 %v2021, 0.7978846
    %v2024 = vtanh.pop %v2022
    %v2025 = vtanh.pop %v2023
    %v2026 = vadd.f32 %v2024, 1.0
    %v2027 = vadd.f32 %v2025, 1.0
    %v2028 = vmul.f32 %v2012, %v2026
    %v2029 = vmul.f32 %v2013, %v2027
    %v2030 = vld [vmem:[%s11] sm:$0xff]
    %v2031 = vld [vmem:[%s11 + $0x8] sm:$0xff]
    %v2032 = vld [vmem:[%s11 + $0x10] sm:$0xff]
    %v2033 = vld [vmem:[%s11 + $0x18] sm:$0xff]
    %v2034 = vld [vmem:[%s11 + $0x20] sm:$0xff]
    %v2035 = vld [vmem:[%s11 + $0x28] sm:$0xff]
    %v2036 = vld [vmem:[%s11 + $0x30] sm:$0xff]
    %v2037 = vld [vmem:[%s11 + $0x38] sm:$0xff]
    %v2038 = vld [vmem:[%s12] sm:$0x1]
    %v2040 = vlaneseq
    %v2041 = vshrl.u32 %v2040, 7
    %v2042 = vsub.s32 0, %v2041
    %v2043 = vrot.slane %v2038, %v2042
    %vm2045 = vcmask 523264
    %v2047 = vsel %vm2045, %v2028, 0
    %v2050 = vsel %vm2045, %v2029, 0
    %2052 = vmatprep.subr.mxu0 0.0
    %2053 = vmatpush1.msra.mxu0 %v2030
    %2054 = vmatprep.subr.mxu0 0.0
    %2055 = vmatpush1.msra.mxu0 %v2031
    %2056 = vmatprep.subr.mxu0 0.0
    %2057 = vmatpush1.msra.mxu0 %v2032
    %2058 = vmatprep.subr.mxu0 0.0
    %2059 = vmatpush1.msra.mxu0 %v2033
    %2060 = vmatprep.subr.mxu0 0.0
    %2061 = vmatpush1.msra.mxu0 %v2034
    %2062 = vmatprep.subr.mxu0 0.0
    %2063 = vmatpush1.msra.mxu0 %v2035
    %2064 = vmatprep.subr.mxu0 0.0
    %2065 = vmatpush1.msra.mxu0 %v2036
    %2066 = vmatprep.subr.mxu0 0.0
    %2067 = vmatpush1.msra.mxu0 %v2037
    %2068 = vmatprep.subr.mxu0 0.0
    %2069 = vmatpush1.msra.mxu0 0.0
    %2070 = vmatprep.subr.mxu0 0.0
    %2071 = vmatpush1.msra.mxu0 0.0
    %2072 = vmatprep.subr.mxu0 0.0
    %2073 = vmatpush1.msra.mxu0 0.0
    %2074 = vmatprep.subr.mxu0 0.0
    %2075 = vmatpush1.msra.mxu0 0.0
    %2076 = vmatprep.subr.mxu0 0.0
    %2077 = vmatpush1.msra.mxu0 0.0
    %2078 = vmatprep.subr.mxu0 0.0
    %2079 = vmatpush1.msra.mxu0 0.0
    %2080 = vmatprep.subr.mxu0 0.0
    %2081 = vmatpush1.msra.mxu0 0.0
    %2082 = vmatprep.subr.mxu0 0.0
    %2083 = vmatpush1.msra.mxu0 0.0
    %2084 = vmatprep.subr.mxu0 0.0
    %2085 = vmatpush1.msra.mxu0 0.0
    %2086 = vmatprep.subr.mxu0 0.0
    %2087 = vmatpush1.msra.mxu0 0.0
    %2088 = vmatprep.subr.mxu0 0.0
    %2089 = vmatpush1.msra.mxu0 0.0
    %2090 = vmatprep.subr.mxu0 0.0
    %2091 = vmatpush1.msra.mxu0 0.0
    %2092 = vmatprep.subr.mxu0 0.0
    %2093 = vmatpush1.msra.mxu0 0.0
    %2094 = vmatprep.subr.mxu0 0.0
    %2095 = vmatpush1.msra.mxu0 0.0
    %2096 = vmatprep.subr.mxu0 0.0
    %2097 = vmatpush1.msra.mxu0 0.0
    %2098 = vmatprep.subr.mxu0 0.0
    %2099 = vmatpush1.msra.mxu0 0.0
    %2100 = vmatprep.subr.mxu0 0.0
    %2101 = vmatpush1.msra.mxu0 0.0
    %2102 = vmatprep.subr.mxu0 0.0
    %2103 = vmatpush1.msra.mxu0 0.0
    %2104 = vmatprep.subr.mxu0 0.0
    %2105 = vmatpush1.msra.mxu0 0.0
    %2106 = vmatprep.subr.mxu0 0.0
    %2107 = vmatpush1.msra.mxu0 0.0
    %2108 = vmatprep.subr.mxu0 0.0
    %2109 = vmatpush1.msra.mxu0 0.0
    %2110 = vmatprep.subr.mxu0 0.0
    %2111 = vmatpush1.msra.mxu0 0.0
    %2112 = vmatprep.subr.mxu0 0.0
    %2113 = vmatpush1.msra.mxu0 0.0
    %2114 = vmatprep.subr.mxu0 0.0
    %2115 = vmatpush1.msra.mxu0 0.0
    %2116 = vmatprep.mubr.f32.mxu0 0.0
    %2117 = vmatmul.mubr.f32.gmra.mrb[0].mxu0 %v2047
    %v2118 = vpop.f32.mrb[0].mxu0
    %v2119 = vadd.f32 %v2043, %v2118
    %v2120 = vpop.f32.mrb[0].mxu0
    %2121 = vmatprep.mubr.f32.mxu0 0.0
    %2122 = vmatmul.mubr.f32.gmra.mrb[0].mxu0 %v2050
    %v2123 = vpop.f32.mrb[0].mxu0
    %v2124 = vadd.f32 %v2043, %v2123
    %v2125 = vpop.f32.mrb[0].mxu0
    %2126 = vdwg.mxu0
    %v2127 = vadd.f32 %v1874, %v2119
    %v2128 = vadd.f32 %v1875, %v2124
    %2129 = vst.msk [vmem:[#allocation5] sm:$0xff] %vm66, %v2127
    %2130 = vst.msk [vmem:[#allocation5 + $0x8] sm:$0xff] %vm66, %v2128
    // Predicated region
    $region58: #{tpu_custom_call.1} parent=1 // pred_check
      _
    $region59: #{tpu_custom_call.1} parent=1 // pred_check_branch
      %2132 = sbr.rel (0) target = $region61
    $region60: #{tpu_custom_call.1} parent=1 // pred_region
      %s2134 = ssub.s32 256, 256
      %2135 = vsyncadd [#allocation4], %s2134
      %s2136 = sshll.u32 [#allocation5], 4
      %s2137 = int_to_ptr.vmem [resolvable:$true] %s2136
      %2142 = dma.vmem_to_hbm [thread:$0]  %s2137, 256, %s13, [#allocation4], 128, 128, 8
    $region61: #{tpu_custom_call.1} parent=1 // pred_fallthru
      _
    // Predicated region
    $region62: #{tpu_custom_call.1} parent=1 // pred_check
      _
    $region63: #{tpu_custom_call.1} parent=1 // pred_check_branch
      %2144 = sbr.rel (0) target = $region65
    $region64: #{tpu_custom_call.1} parent=1 // pred_region
      %s2146 = ssub.s32 256, 256
      %2147 = vsyncadd [#allocation7], %s2146
      %s2148 = sshll.u32 [#allocation6], 4
      %s2149 = int_to_ptr.vmem [resolvable:$true] %s2148
      %2154 = dma.vmem_to_hbm [thread:$0]  %s2149, 256, %s14, [#allocation7], 128, 128, 8
    $region65: #{tpu_custom_call.1} parent=1 // pred_fallthru
      _
    // Predicated region
    $region66: #{tpu_custom_call.1} parent=1 // pred_check
      _
    $region67: #{tpu_custom_call.1} parent=1 // pred_check_branch
      %2156 = sbr.rel (0) target = $region69
    $region68: #{tpu_custom_call.1} parent=1 // pred_region
      %2157 = dma.done [#allocation4], 256
    $region69: #{tpu_custom_call.1} parent=1 // pred_fallthru
      _
    // Predicated region
    $region70: #{tpu_custom_call.1} parent=1 // pred_check
      _
    $region71: #{tpu_custom_call.1} parent=1 // pred_check_branch
      %2159 = sbr.rel (0) target = $region73
    $region72: #{tpu_custom_call.1} parent=1 // pred_region
      %2160 = dma.done [#allocation7], 256
    $region73: #{tpu_custom_call.1} parent=1 // pred_fallthru
      _
    %2161 = vsyncpa [#allocation3], 1
    %2162 = vsyncpa [#allocation4], 1
    %2163 = vsyncpa [#allocation7], 1

</llo_original>
